<compile_context>
chip_gen: v6e
topology: v6e:2x2x1
jax: 0.10.0
libtpu: 0.0.40
codegen_flags: <defaults>
</compile_context>

<pallas_src>
import jax
import jax.numpy as jnp
from jax.experimental import pallas as pl
from jax.experimental.pallas import tpu as pltpu


def _round_up(v, m):
    return ((v + m - 1) // m) * m


# ----------------------------- Pallas kernel ------------------------------ #

def _make_convgru_kernel(layer_dims, height, width, ksz, pad_w):
    """Fused multi-layer ConvGRU forward for one batch element.

    layer_dims: list of (cin, ch, cstk, chp) per layer; cstk / chp are the
    per-tap patch-row counts (cin+ch and ch rounded up to 16 so every bf16
    patch-matrix store is tile aligned).

    Ref order:
      x, h_0..h_{L-1}, mask, (w1, b1, w2) per layer,   # inputs
      out_0..out_{L-1},                                # outputs
      sbuf, hbuf, p1, p2                               # scratch
    """
    L = len(layer_dims)
    kk = ksz * ksz
    ph = ksz // 2
    m = height * width
    # flat lane offset of each tap relative to the output pixel (di-major)
    offsets = [(di - ph) * width + (dj - ph)
               for di in range(ksz) for dj in range(ksz)]
    col_shift = [dj - ph for di in range(ksz) for dj in range(ksz)]

    def kernel(*refs):
        x_ref = refs[0]
        h_refs = refs[1:1 + L]
        mask_ref = refs[1 + L]
        w_refs = refs[2 + L:2 + L + 3 * L]
        out_refs = refs[2 + 4 * L:2 + 5 * L]
        sbuf, hbuf, p1_ref, p2_ref = refs[2 + 5 * L:]

        def fill_patches(p_ref, src_buf, rows):
            # (kk*rows, m) im2col matrix in the transposed (K, M) orientation.
            # Each tap slab is a full-lane, 16-row aligned bf16 store; the
            # spatial shift comes from an unaligned *load* of the zero-padded
            # source buffer; row/column wrap is killed by the per-tap mask
            # (taps with no column shift only ever wrap into the zero halo).
            for t, off in enumerate(offsets):
                tap = src_buf[0:rows, pad_w + off:pad_w + off + m]
                if col_shift[t] != 0:
                    tap = tap * mask_ref[t:t + 1, :]
                p_ref[t * rows:(t + 1) * rows, :] = tap.astype(jnp.bfloat16)

        cur = x_ref[0].astype(jnp.float32)                       # (Cin0, M)

        for j, (cin, ch, cstk, chp) in enumerate(layer_dims):
            w1_ref, b1_ref, w2_ref = w_refs[3 * j:3 * j + 3]
            ctot = cin + ch
            h_f = h_refs[j][0].astype(jnp.float32)               # (Ch, M)

            # --- padded stacked [x ; h] buffer (channels=sublanes, flat
            #     spatial=lanes, 128-lane zero halo on both sides).  Zeroing
            #     every step keeps it correct under the parallel core split.
            sbuf[0:cstk, 0:pad_w] = jnp.zeros((cstk, pad_w), jnp.float32)
            sbuf[0:cstk, pad_w + m:2 * pad_w + m] = jnp.zeros(
                (cstk, pad_w), jnp.float32)
            if cstk > ctot:
                sbuf[ctot:cstk, pad_w:pad_w + m] = jnp.zeros(
                    (cstk - ctot, m), jnp.float32)
            sbuf[0:cin, pad_w:pad_w + m] = cur
            sbuf[cin:ctot, pad_w:pad_w + m] = h_f

            # --- matmul 1: fused [update | reset | out_x] gates -> (3Ch, M)
            fill_patches(p1_ref, sbuf, cstk)
            zro = jnp.dot(w1_ref[...], p1_ref[0:kk * cstk, :],
                          preferred_element_type=jnp.float32) + b1_ref[...]
            z = jax.nn.sigmoid(zro[0:ch, :])                     # update gate
            r = jax.nn.sigmoid(zro[ch:2 * ch, :])                # reset gate

            # --- matmul 2: out-gate h-part over h * r only (K = kk*chp)
            hbuf[0:chp, 0:pad_w] = jnp.zeros((chp, pad_w), jnp.float32)
            hbuf[0:chp, pad_w + m:2 * pad_w + m] = jnp.zeros(
                (chp, pad_w), jnp.float32)
            if chp > ch:
                hbuf[ch:chp, pad_w:pad_w + m] = jnp.zeros(
                    (chp - ch, m), jnp.float32)
            hbuf[0:ch, pad_w:pad_w + m] = h_f * r

            fill_patches(p2_ref, hbuf, chp)
            o = jnp.tanh(zro[2 * ch:3 * ch, :]
                         + jnp.dot(w2_ref[...], p2_ref[0:kk * chp, :],
                                   preferred_element_type=jnp.float32))

            cur = h_f * (1.0 - z) + o * z                        # new hidden
            out_refs[j][0] = cur.astype(out_refs[j].dtype)       # lane-dense

    return kernel


# --------------------------------- wrapper --------------------------------- #

def convgru_forward(params, x_nchw, hidden_nchw_list, kernel_size):
    """ConvGRU.forward (all layers) in ONE pallas_call.

    x_nchw: (N, Cin0, H, W); hidden_nchw_list[j]: (N, Ch_j, H, W) (PyTorch NCHW,
    which is already the channel-major / lane-dense layout the kernel wants,
    so only free reshapes happen at the boundary).
    Returns the list of per-layer NEW hidden states (NCHW); the last entry is
    what ConvGRU.forward returns (self.H[-1]).
    """
    n, cin0, height, width = x_nchw.shape
    m = height * width
    ksz = kernel_size
    kk = ksz * ksz
    ph = ksz // 2
    # 128-lane-aligned zero halo, wide enough for the largest tap shift.
    pad_w = _round_up(max(ph * (width + 1), 1), 128)

    layer_dims = []
    for layer in params:
        cin, ch = layer["in_dim"], layer["hid_dim"]
        layer_dims.append((cin, ch, _round_up(cin + ch, 16), _round_up(ch, 16)))

    x = x_nchw.reshape(n, cin0, m)
    hiddens = [h.reshape(n, h.shape[1], m) for h in hidden_nchw_list]

    # Per-tap validity masks (zero the row/column wrap of the flat lane shift).
    ii = jnp.arange(height)[:, None]
    jj = jnp.arange(width)[None, :]
    rows = []
    for di in range(ksz):
        for dj in range(ksz):
            oy, ox = di - ph, dj - ph
            valid = ((ii + oy >= 0) & (ii + oy < height) &
                     (jj + ox >= 0) & (jj + ox < width))
            rows.append(valid.reshape(-1))
    mask = jnp.stack(rows).astype(jnp.float32)                   # (kk, M)

    # Weight packing: columns ordered (tap, in-channel) to match the patch rows.
    def to_rows(w_hwio, ch_out, c_pad):
        w = jnp.transpose(w_hwio, (3, 0, 1, 2))                  # (co,k,k,ci)
        ci = w.shape[-1]
        if c_pad > ci:
            w = jnp.pad(w, ((0, 0), (0, 0), (0, 0), (0, c_pad - ci)))
        return w.reshape(ch_out, kk * c_pad)

    weight_args, weight_specs = [], []
    for layer, (cin, ch, cstk, chp) in zip(params, layer_dims):
        wz, bz = layer["update"]
        wr, br = layer["reset"]
        wo, bo = layer["out"]
        w1 = jnp.concatenate(
            [to_rows(wz, ch, cstk),
             to_rows(wr, ch, cstk),
             to_rows(wo[:, :, :cin, :], ch, cstk)],   # out-gate x-part only
            axis=0).astype(jnp.bfloat16)              # (3Ch, kk*cstk)
        b1 = jnp.concatenate([bz, br, bo], axis=1).reshape(3 * ch, 1)
        w2 = to_rows(wo[:, :, cin:, :], ch, chp).astype(jnp.bfloat16)
        weight_args += [w1, b1.astype(jnp.float32), w2]
        # Constant index_map => no re-DMA across the grid.  (pl.Buffered(1)
        # would also halve the weight double-buffer; negligible at these sizes.)
        weight_specs += [
            pl.BlockSpec((3 * ch, kk * cstk), lambda b: (0, 0)),
            pl.BlockSpec((3 * ch, 1), lambda b: (0, 0)),
            pl.BlockSpec((ch, kk * chp), lambda b: (0, 0)),
        ]

    in_specs = [pl.BlockSpec((1, cin0, m), lambda b: (b, 0, 0))]
    in_specs += [pl.BlockSpec((1, ch, m), lambda b: (b, 0, 0))
                 for (_, ch, _, _) in layer_dims]
    in_specs += [pl.BlockSpec((kk, m), lambda b: (0, 0))]
    in_specs += weight_specs

    out_shape = [jax.ShapeDtypeStruct((n, ch, m), x_nchw.dtype)
                 for (_, ch, _, _) in layer_dims]
    out_specs = [pl.BlockSpec((1, ch, m), lambda b: (b, 0, 0))
                 for (_, ch, _, _) in layer_dims]

    max_cstk = max(c for (_, _, c, _) in layer_dims)
    max_chp = max(c for (_, _, _, c) in layer_dims)
    sbuf_w = 2 * pad_w + m
    scratch_shapes = [
        pltpu.VMEM((max_cstk, sbuf_w), jnp.float32),    # padded [x ; h]
        pltpu.VMEM((max_chp, sbuf_w), jnp.float32),     # padded h * r
        pltpu.VMEM((kk * max_cstk, m), jnp.bfloat16),   # patches of [x ; h]
        pltpu.VMEM((kk * max_chp, m), jnp.bfloat16),    # patches of h * r
    ]

    # Explicit VMEM budget (matters on v7x: 64 MiB physical / 32 MiB default).
    scratch_bytes = ((max_cstk + max_chp) * sbuf_w * 4
                     + kk * (max_cstk + max_chp) * m * 2)
    io_bytes = (cin0 * m + sum(2 * ch * m for (_, ch, _, _) in layer_dims)
                + kk * m) * 4
    w_bytes = sum(int(w.size) * jnp.dtype(w.dtype).itemsize for w in weight_args)
    vmem_limit = int(min(100 * 2 ** 20,
                         max(8 * 2 ** 20,
                             2 * (scratch_bytes + 2 * io_bytes + 2 * w_bytes))))

    kernel = _make_convgru_kernel(layer_dims, height, width, ksz, pad_w)

    outs = pl.pallas_call(
        kernel,
        out_shape=out_shape,
        grid_spec=pltpu.PrefetchScalarGridSpec(
            num_scalar_prefetch=0,
            grid=(n,),
            in_specs=in_specs,
            out_specs=out_specs,
            scratch_shapes=scratch_shapes),
        compiler_params=pltpu.CompilerParams(
            dimension_semantics=("parallel",),          # batch -> both TCs
            vmem_limit_bytes=vmem_limit),
    )(x, *hiddens, mask, *weight_args)

    return [o.reshape(n, o.shape[1], height, width) for o in outs]


# ------------------------- parameters (Conv2d-like) ------------------------ #

def init_convgru_params(key, input_dim, hidden_dims, kernel_size):
    """Deterministic init mirroring nn.Conv2d defaults (uniform(+-1/sqrt(fan_in)))."""
    layers = []
    cur_in = input_dim
    for ch in hidden_dims:
        gates = []
        for _ in range(3):  # update, reset, out
            key, wk, bk = jax.random.split(key, 3)
            fan_in = (cur_in + ch) * kernel_size * kernel_size
            bound = 1.0 / (fan_in ** 0.5)
            w = jax.random.uniform(
                wk, (kernel_size, kernel_size, cur_in + ch, ch),
                jnp.float32, -bound, bound)                    # HWIO
            b = jax.random.uniform(bk, (1, ch), jnp.float32, -bound, bound)
            gates.append((w, b))
        layers.append({"update": gates[0], "reset": gates[1], "out": gates[2],
                       "in_dim": cur_in, "hid_dim": ch})
        cur_in = ch
    return layers


# ------------------------------- reference --------------------------------- #

def _ref_cell(x, h, wz, bz, wr, br, wo, bo):
    def conv(inp, w, b):
        out = jax.lax.conv_general_dilated(
            inp, w, (1, 1), "SAME",
            dimension_numbers=("NHWC", "HWIO", "NHWC"),
            precision=jax.lax.Precision.HIGHEST)
        return out + b.reshape(1, 1, 1, -1)
    stacked = jnp.concatenate([x, h], axis=-1)
    z = jax.nn.sigmoid(conv(stacked, wz, bz))
    r = jax.nn.sigmoid(conv(stacked, wr, br))
    o = jnp.tanh(conv(jnp.concatenate([x, h * r], axis=-1), wo, bo))
    return h * (1.0 - z) + o * z


def convgru_forward_ref(params, x_nchw, hidden_nchw_list):
    cur = jnp.transpose(x_nchw, (0, 2, 3, 1))
    outs = []
    for layer, h0 in zip(params, hidden_nchw_list):
        h = jnp.transpose(h0, (0, 2, 3, 1))
        wz, bz = layer["update"]
        wr, br = layer["reset"]
        wo, bo = layer["out"]
        cur = _ref_cell(cur, h, wz, bz, wr, br, wo, bo)
        outs.append(jnp.transpose(cur, (0, 3, 1, 2)))
    return outs


# --------------------------------- main ------------------------------------ #

if __name__ == "__main__":
    batch, input_dim, height, width = 2, 4, 16, 16
    hidden_dims = [8, 8]
    kernel_size = 3

    key = jax.random.PRNGKey(0)
    keys = jax.random.split(key, 2 + len(hidden_dims))
    pkey, xkey, hkeys = keys[0], keys[1], keys[2:]

    params = init_convgru_params(pkey, input_dim, hidden_dims, kernel_size)
    x = jax.random.normal(xkey, (batch, input_dim, height, width), jnp.float32)
    hiddens = [jax.random.normal(k, (batch, ch, height, width), jnp.float32)
               for k, ch in zip(hkeys, hidden_dims)]

    new_states = convgru_forward(params, x, hiddens, kernel_size)
    new_states = jax.block_until_ready(new_states)
    out = new_states[-1]            # ConvGRU.forward return value (self.H[-1])

    refs = convgru_forward_ref(params, x, hiddens)
    assert out.shape == (batch, hidden_dims[-1], height, width), out.shape
    max_err = max(float(jnp.max(jnp.abs(a - b)))
                  for a, b in zip(new_states, refs))
    # bf16 MXU operands (patches + weights) with f32 accumulation vs. the
    # f32 HIGHEST-precision XLA reference.
    assert max_err < 5e-2, f"max abs error vs reference = {max_err}"
    print("KERNEL_OK")
</pallas_src>

<mosaic_0001>
module attributes {stable_mosaic.version = 11 : i64} {
  func.func @kernel(%arg0: i32, %arg1: memref<1x4x256xf32, #tpu.memory_space<vmem>>, %arg2: memref<1x8x256xf32, #tpu.memory_space<vmem>>, %arg3: memref<1x8x256xf32, #tpu.memory_space<vmem>>, %arg4: memref<9x256xf32, #tpu.memory_space<vmem>>, %arg5: memref<24x144xbf16, #tpu.memory_space<vmem>>, %arg6: memref<24x1xf32, #tpu.memory_space<vmem>>, %arg7: memref<8x144xbf16, #tpu.memory_space<vmem>>, %arg8: memref<24x144xbf16, #tpu.memory_space<vmem>>, %arg9: memref<24x1xf32, #tpu.memory_space<vmem>>, %arg10: memref<8x144xbf16, #tpu.memory_space<vmem>>, %arg11: memref<1x8x256xf32, #tpu.memory_space<vmem>>, %arg12: memref<1x8x256xf32, #tpu.memory_space<vmem>>, %arg13: memref<16x512xf32, #tpu.memory_space<vmem>>, %arg14: memref<16x512xf32, #tpu.memory_space<vmem>>, %arg15: memref<144x256xbf16, #tpu.memory_space<vmem>>, %arg16: memref<144x256xbf16, #tpu.memory_space<vmem>>) attributes {dimension_semantics = [#tpu.dimension_semantics<parallel>], iteration_bounds = array<i64: 2>, scalar_prefetch = 0 : i64, scratch_operands = 4 : i64, tpu.core_type = #tpu.core_type<tc>, window_params = [{transform_indices = @transform_0, window_bounds = array<i64: 1, 4, 256>}, {transform_indices = @transform_1, window_bounds = array<i64: 1, 8, 256>}, {transform_indices = @transform_2, window_bounds = array<i64: 1, 8, 256>}, {pipeline_mode = #tpu.pipeline_mode<synchronous>, transform_indices = @transform_3, window_bounds = array<i64: 9, 256>}, {pipeline_mode = #tpu.pipeline_mode<synchronous>, transform_indices = @transform_4, window_bounds = array<i64: 24, 144>}, {pipeline_mode = #tpu.pipeline_mode<synchronous>, transform_indices = @transform_5, window_bounds = array<i64: 24, 1>}, {pipeline_mode = #tpu.pipeline_mode<synchronous>, transform_indices = @transform_6, window_bounds = array<i64: 8, 144>}, {pipeline_mode = #tpu.pipeline_mode<synchronous>, transform_indices = @transform_7, window_bounds = array<i64: 24, 144>}, {pipeline_mode = #tpu.pipeline_mode<synchronous>, transform_indices = @transform_8, window_bounds = array<i64: 24, 1>}, {pipeline_mode = #tpu.pipeline_mode<synchronous>, transform_indices = @transform_9, window_bounds = array<i64: 8, 144>}, {transform_indices = @transform_10, window_bounds = array<i64: 1, 8, 256>}, {transform_indices = @transform_11, window_bounds = array<i64: 1, 8, 256>}]} {
    %c0 = arith.constant 0 : index
    %c0_0 = arith.constant 0 : index
    %c0_1 = arith.constant 0 : index
    %0 = vector.load %arg1[%c0, %c0_0, %c0_1] : memref<1x4x256xf32, #tpu.memory_space<vmem>>, vector<1x4x256xf32>
    %1 = vector.shape_cast %0 : vector<1x4x256xf32> to vector<4x256xf32>
    %c0_2 = arith.constant 0 : index
    %c0_3 = arith.constant 0 : index
    %c0_4 = arith.constant 0 : index
    %2 = vector.load %arg2[%c0_2, %c0_3, %c0_4] : memref<1x8x256xf32, #tpu.memory_space<vmem>>, vector<1x8x256xf32>
    %3 = vector.shape_cast %2 : vector<1x8x256xf32> to vector<8x256xf32>
    %cst = arith.constant 0.000000e+00 : f32
    %4 = vector.broadcast %cst : f32 to vector<16x128xf32>
    %c0_5 = arith.constant 0 : index
    %c0_6 = arith.constant 0 : index
    %5 = vector.load %arg13[%c0_5, %c0_6] : memref<16x512xf32, #tpu.memory_space<vmem>>, vector<16x128xf32>
    tpu.vector_store %arg13[%c0_5, %c0_6], %4 {strides = array<i32>} : memref<16x512xf32, #tpu.memory_space<vmem>>, vector<16x128xf32>,
    %cst_7 = arith.constant 0.000000e+00 : f32
    %6 = vector.broadcast %cst_7 : f32 to vector<16x128xf32>
    %c0_8 = arith.constant 0 : index
    %c384 = arith.constant 384 : index
    %7 = vector.load %arg13[%c0_8, %c384] : memref<16x512xf32, #tpu.memory_space<vmem>>, vector<16x128xf32>
    tpu.vector_store %arg13[%c0_8, %c384], %6 {strides = array<i32>} : memref<16x512xf32, #tpu.memory_space<vmem>>, vector<16x128xf32>,
    %cst_9 = arith.constant 0.000000e+00 : f32
    %8 = vector.broadcast %cst_9 : f32 to vector<4x256xf32>
    %c12 = arith.constant 12 : index
    %c128 = arith.constant 128 : index
    %9 = vector.load %arg13[%c12, %c128] : memref<16x512xf32, #tpu.memory_space<vmem>>, vector<4x256xf32>
    tpu.vector_store %arg13[%c12, %c128], %8 {strides = array<i32>} : memref<16x512xf32, #tpu.memory_space<vmem>>, vector<4x256xf32>,
    %c0_10 = arith.constant 0 : index
    %c128_11 = arith.constant 128 : index
    %10 = vector.load %arg13[%c0_10, %c128_11] : memref<16x512xf32, #tpu.memory_space<vmem>>, vector<4x256xf32>
    tpu.vector_store %arg13[%c0_10, %c128_11], %1 {strides = array<i32>} : memref<16x512xf32, #tpu.memory_space<vmem>>, vector<4x256xf32>,
    %c4 = arith.constant 4 : index
    %c128_12 = arith.constant 128 : index
    %11 = vector.load %arg13[%c4, %c128_12] : memref<16x512xf32, #tpu.memory_space<vmem>>, vector<8x256xf32>
    tpu.vector_store %arg13[%c4, %c128_12], %3 {strides = array<i32>} : memref<16x512xf32, #tpu.memory_space<vmem>>, vector<8x256xf32>,
    %c0_13 = arith.constant 0 : index
    %c111 = arith.constant 111 : index
    %12 = vector.load %arg13[%c0_13, %c111] : memref<16x512xf32, #tpu.memory_space<vmem>>, vector<16x256xf32>
    %c0_14 = arith.constant 0 : index
    %c0_15 = arith.constant 0 : index
    %13 = vector.load %arg4[%c0_14, %c0_15] : memref<9x256xf32, #tpu.memory_space<vmem>>, vector<1x256xf32>
    %14 = vector.broadcast %13 : vector<1x256xf32> to vector<16x256xf32>
    %15 = arith.mulf %12, %14 : vector<16x256xf32>
    %16 = arith.truncf %15 : vector<16x256xf32> to vector<16x256xbf16>
    %c0_16 = arith.constant 0 : index
    %c0_17 = arith.constant 0 : index
    %17 = vector.load %arg15[%c0_16, %c0_17] : memref<144x256xbf16, #tpu.memory_space<vmem>>, vector<16x256xbf16>
    tpu.vector_store %arg15[%c0_16, %c0_17], %16 {strides = array<i32>} : memref<144x256xbf16, #tpu.memory_space<vmem>>, vector<16x256xbf16>,
    %c0_18 = arith.constant 0 : index
    %c112 = arith.constant 112 : index
    %18 = vector.load %arg13[%c0_18, %c112] : memref<16x512xf32, #tpu.memory_space<vmem>>, vector<16x256xf32>
    %19 = arith.truncf %18 : vector<16x256xf32> to vector<16x256xbf16>
    %c16 = arith.constant 16 : index
    %c0_19 = arith.constant 0 : index
    %20 = vector.load %arg15[%c16, %c0_19] : memref<144x256xbf16, #tpu.memory_space<vmem>>, vector<16x256xbf16>
    tpu.vector_store %arg15[%c16, %c0_19], %19 {strides = array<i32>} : memref<144x256xbf16, #tpu.memory_space<vmem>>, vector<16x256xbf16>,
    %c0_20 = arith.constant 0 : index
    %c113 = arith.constant 113 : index
    %21 = vector.load %arg13[%c0_20, %c113] : memref<16x512xf32, #tpu.memory_space<vmem>>, vector<16x256xf32>
    %c2 = arith.constant 2 : index
    %c0_21 = arith.constant 0 : index
    %22 = vector.load %arg4[%c2, %c0_21] : memref<9x256xf32, #tpu.memory_space<vmem>>, vector<1x256xf32>
    %23 = vector.broadcast %22 : vector<1x256xf32> to vector<16x256xf32>
    %24 = arith.mulf %21, %23 : vector<16x256xf32>
    %25 = arith.truncf %24 : vector<16x256xf32> to vector<16x256xbf16>
    %c32 = arith.constant 32 : index
    %c0_22 = arith.constant 0 : index
    %26 = vector.load %arg15[%c32, %c0_22] : memref<144x256xbf16, #tpu.memory_space<vmem>>, vector<16x256xbf16>
    tpu.vector_store %arg15[%c32, %c0_22], %25 {strides = array<i32>} : memref<144x256xbf16, #tpu.memory_space<vmem>>, vector<16x256xbf16>,
    %c0_23 = arith.constant 0 : index
    %c127 = arith.constant 127 : index
    %27 = vector.load %arg13[%c0_23, %c127] : memref<16x512xf32, #tpu.memory_space<vmem>>, vector<16x256xf32>
    %c3 = arith.constant 3 : index
    %c0_24 = arith.constant 0 : index
    %28 = vector.load %arg4[%c3, %c0_24] : memref<9x256xf32, #tpu.memory_space<vmem>>, vector<1x256xf32>
    %29 = vector.broadcast %28 : vector<1x256xf32> to vector<16x256xf32>
    %30 = arith.mulf %27, %29 : vector<16x256xf32>
    %31 = arith.truncf %30 : vector<16x256xf32> to vector<16x256xbf16>
    %c48 = arith.constant 48 : index
    %c0_25 = arith.constant 0 : index
    %32 = vector.load %arg15[%c48, %c0_25] : memref<144x256xbf16, #tpu.memory_space<vmem>>, vector<16x256xbf16>
    tpu.vector_store %arg15[%c48, %c0_25], %31 {strides = array<i32>} : memref<144x256xbf16, #tpu.memory_space<vmem>>, vector<16x256xbf16>,
    %c0_26 = arith.constant 0 : index
    %c128_27 = arith.constant 128 : index
    %33 = vector.load %arg13[%c0_26, %c128_27] : memref<16x512xf32, #tpu.memory_space<vmem>>, vector<16x256xf32>
    %34 = arith.truncf %33 : vector<16x256xf32> to vector<16x256xbf16>
    %c64 = arith.constant 64 : index
    %c0_28 = arith.constant 0 : index
    %35 = vector.load %arg15[%c64, %c0_28] : memref<144x256xbf16, #tpu.memory_space<vmem>>, vector<16x256xbf16>
    tpu.vector_store %arg15[%c64, %c0_28], %34 {strides = array<i32>} : memref<144x256xbf16, #tpu.memory_space<vmem>>, vector<16x256xbf16>,
    %c0_29 = arith.constant 0 : index
    %c129 = arith.constant 129 : index
    %36 = vector.load %arg13[%c0_29, %c129] : memref<16x512xf32, #tpu.memory_space<vmem>>, vector<16x256xf32>
    %c5 = arith.constant 5 : index
    %c0_30 = arith.constant 0 : index
    %37 = vector.load %arg4[%c5, %c0_30] : memref<9x256xf32, #tpu.memory_space<vmem>>, vector<1x256xf32>
    %38 = vector.broadcast %37 : vector<1x256xf32> to vector<16x256xf32>
    %39 = arith.mulf %36, %38 : vector<16x256xf32>
    %40 = arith.truncf %39 : vector<16x256xf32> to vector<16x256xbf16>
    %c80 = arith.constant 80 : index
    %c0_31 = arith.constant 0 : index
    %41 = vector.load %arg15[%c80, %c0_31] : memref<144x256xbf16, #tpu.memory_space<vmem>>, vector<16x256xbf16>
    tpu.vector_store %arg15[%c80, %c0_31], %40 {strides = array<i32>} : memref<144x256xbf16, #tpu.memory_space<vmem>>, vector<16x256xbf16>,
    %c0_32 = arith.constant 0 : index
    %c143 = arith.constant 143 : index
    %42 = vector.load %arg13[%c0_32, %c143] : memref<16x512xf32, #tpu.memory_space<vmem>>, vector<16x256xf32>
    %c6 = arith.constant 6 : index
    %c0_33 = arith.constant 0 : index
    %43 = vector.load %arg4[%c6, %c0_33] : memref<9x256xf32, #tpu.memory_space<vmem>>, vector<1x256xf32>
    %44 = vector.broadcast %43 : vector<1x256xf32> to vector<16x256xf32>
    %45 = arith.mulf %42, %44 : vector<16x256xf32>
    %46 = arith.truncf %45 : vector<16x256xf32> to vector<16x256xbf16>
    %c96 = arith.constant 96 : index
    %c0_34 = arith.constant 0 : index
    %47 = vector.load %arg15[%c96, %c0_34] : memref<144x256xbf16, #tpu.memory_space<vmem>>, vector<16x256xbf16>
    tpu.vector_store %arg15[%c96, %c0_34], %46 {strides = array<i32>} : memref<144x256xbf16, #tpu.memory_space<vmem>>, vector<16x256xbf16>,
    %c0_35 = arith.constant 0 : index
    %c144 = arith.constant 144 : index
    %48 = vector.load %arg13[%c0_35, %c144] : memref<16x512xf32, #tpu.memory_space<vmem>>, vector<16x256xf32>
    %49 = arith.truncf %48 : vector<16x256xf32> to vector<16x256xbf16>
    %c112_36 = arith.constant 112 : index
    %c0_37 = arith.constant 0 : index
    %50 = vector.load %arg15[%c112_36, %c0_37] : memref<144x256xbf16, #tpu.memory_space<vmem>>, vector<16x256xbf16>
    tpu.vector_store %arg15[%c112_36, %c0_37], %49 {strides = array<i32>} : memref<144x256xbf16, #tpu.memory_space<vmem>>, vector<16x256xbf16>,
    %c0_38 = arith.constant 0 : index
    %c145 = arith.constant 145 : index
    %51 = vector.load %arg13[%c0_38, %c145] : memref<16x512xf32, #tpu.memory_space<vmem>>, vector<16x256xf32>
    %c8 = arith.constant 8 : index
    %c0_39 = arith.constant 0 : index
    %52 = vector.load %arg4[%c8, %c0_39] : memref<9x256xf32, #tpu.memory_space<vmem>>, vector<1x256xf32>
    %53 = vector.broadcast %52 : vector<1x256xf32> to vector<16x256xf32>
    %54 = arith.mulf %51, %53 : vector<16x256xf32>
    %55 = arith.truncf %54 : vector<16x256xf32> to vector<16x256xbf16>
    %c128_40 = arith.constant 128 : index
    %c0_41 = arith.constant 0 : index
    %56 = vector.load %arg15[%c128_40, %c0_41] : memref<144x256xbf16, #tpu.memory_space<vmem>>, vector<16x256xbf16>
    tpu.vector_store %arg15[%c128_40, %c0_41], %55 {strides = array<i32>} : memref<144x256xbf16, #tpu.memory_space<vmem>>, vector<16x256xbf16>,
    %c0_42 = arith.constant 0 : index
    %c0_43 = arith.constant 0 : index
    %57 = vector.load %arg5[%c0_42, %c0_43] : memref<24x144xbf16, #tpu.memory_space<vmem>>, vector<24x144xbf16>
    %c0_44 = arith.constant 0 : index
    %c0_45 = arith.constant 0 : index
    %58 = vector.load %arg15[%c0_44, %c0_45] : memref<144x256xbf16, #tpu.memory_space<vmem>>, vector<144x256xbf16>
    %cst_46 = arith.constant dense<0.000000e+00> : vector<24x256xf32>
    %59 = tpu.matmul %57, %58, %cst_46 {dimension_numbers = #tpu.dot_dimension_numbers<[1], [0], [0], [1], [0, 0, 1, 1], [], []>} : vector<24x144xbf16>, vector<144x256xbf16>, vector<24x256xf32> -> vector<24x256xf32>
    %c0_47 = arith.constant 0 : index
    %c0_48 = arith.constant 0 : index
    %60 = vector.load %arg6[%c0_47, %c0_48] : memref<24x1xf32, #tpu.memory_space<vmem>>, vector<24x1xf32>
    %61 = vector.broadcast %60 : vector<24x1xf32> to vector<24x256xf32>
    %62 = arith.addf %59, %61 : vector<24x256xf32>
    %63 = vector.extract_strided_slice %62 {offsets = [0, 0], sizes = [8, 256], strides = [1, 1]} : vector<24x256xf32> to vector<8x256xf32>
    %64 = arith.negf %63 : vector<8x256xf32>
    %65 = math.exp %64 : vector<8x256xf32>
    %cst_49 = arith.constant 1.000000e+00 : f32
    %66 = vector.broadcast %cst_49 : f32 to vector<8x256xf32>
    %67 = arith.addf %66, %65 : vector<8x256xf32>
    %68 = arith.divf %66, %67 : vector<8x256xf32>
    %69 = vector.extract_strided_slice %62 {offsets = [8, 0], sizes = [8, 256], strides = [1, 1]} : vector<24x256xf32> to vector<8x256xf32>
    %70 = arith.negf %69 : vector<8x256xf32>
    %71 = math.exp %70 : vector<8x256xf32>
    %cst_50 = arith.constant 1.000000e+00 : f32
    %72 = vector.broadcast %cst_50 : f32 to vector<8x256xf32>
    %73 = arith.addf %72, %71 : vector<8x256xf32>
    %74 = arith.divf %72, %73 : vector<8x256xf32>
    %cst_51 = arith.constant 0.000000e+00 : f32
    %75 = vector.broadcast %cst_51 : f32 to vector<16x128xf32>
    %c0_52 = arith.constant 0 : index
    %c0_53 = arith.constant 0 : index
    %76 = vector.load %arg14[%c0_52, %c0_53] : memref<16x512xf32, #tpu.memory_space<vmem>>, vector<16x128xf32>
    tpu.vector_store %arg14[%c0_52, %c0_53], %75 {strides = array<i32>} : memref<16x512xf32, #tpu.memory_space<vmem>>, vector<16x128xf32>,
    %cst_54 = arith.constant 0.000000e+00 : f32
    %77 = vector.broadcast %cst_54 : f32 to vector<16x128xf32>
    %c0_55 = arith.constant 0 : index
    %c384_56 = arith.constant 384 : index
    %78 = vector.load %arg14[%c0_55, %c384_56] : memref<16x512xf32, #tpu.memory_space<vmem>>, vector<16x128xf32>
    tpu.vector_store %arg14[%c0_55, %c384_56], %77 {strides = array<i32>} : memref<16x512xf32, #tpu.memory_space<vmem>>, vector<16x128xf32>,
    %cst_57 = arith.constant 0.000000e+00 : f32
    %79 = vector.broadcast %cst_57 : f32 to vector<8x256xf32>
    %c8_58 = arith.constant 8 : index
    %c128_59 = arith.constant 128 : index
    %80 = vector.load %arg14[%c8_58, %c128_59] : memref<16x512xf32, #tpu.memory_space<vmem>>, vector<8x256xf32>
    tpu.vector_store %arg14[%c8_58, %c128_59], %79 {strides = array<i32>} : memref<16x512xf32, #tpu.memory_space<vmem>>, vector<8x256xf32>,
    %81 = arith.mulf %3, %74 : vector<8x256xf32>
    %c0_60 = arith.constant 0 : index
    %c128_61 = arith.constant 128 : index
    %82 = vector.load %arg14[%c0_60, %c128_61] : memref<16x512xf32, #tpu.memory_space<vmem>>, vector<8x256xf32>
    tpu.vector_store %arg14[%c0_60, %c128_61], %81 {strides = array<i32>} : memref<16x512xf32, #tpu.memory_space<vmem>>, vector<8x256xf32>,
    %c0_62 = arith.constant 0 : index
    %c111_63 = arith.constant 111 : index
    %83 = vector.load %arg14[%c0_62, %c111_63] : memref<16x512xf32, #tpu.memory_space<vmem>>, vector<16x256xf32>
    %c0_64 = arith.constant 0 : index
    %c0_65 = arith.constant 0 : index
    %84 = vector.load %arg4[%c0_64, %c0_65] : memref<9x256xf32, #tpu.memory_space<vmem>>, vector<1x256xf32>
    %85 = vector.broadcast %84 : vector<1x256xf32> to vector<16x256xf32>
    %86 = arith.mulf %83, %85 : vector<16x256xf32>
    %87 = arith.truncf %86 : vector<16x256xf32> to vector<16x256xbf16>
    %c0_66 = arith.constant 0 : index
    %c0_67 = arith.constant 0 : index
    %88 = vector.load %arg16[%c0_66, %c0_67] : memref<144x256xbf16, #tpu.memory_space<vmem>>, vector<16x256xbf16>
    tpu.vector_store %arg16[%c0_66, %c0_67], %87 {strides = array<i32>} : memref<144x256xbf16, #tpu.memory_space<vmem>>, vector<16x256xbf16>,
    %c0_68 = arith.constant 0 : index
    %c112_69 = arith.constant 112 : index
    %89 = vector.load %arg14[%c0_68, %c112_69] : memref<16x512xf32, #tpu.memory_space<vmem>>, vector<16x256xf32>
    %90 = arith.truncf %89 : vector<16x256xf32> to vector<16x256xbf16>
    %c16_70 = arith.constant 16 : index
    %c0_71 = arith.constant 0 : index
    %91 = vector.load %arg16[%c16_70, %c0_71] : memref<144x256xbf16, #tpu.memory_space<vmem>>, vector<16x256xbf16>
    tpu.vector_store %arg16[%c16_70, %c0_71], %90 {strides = array<i32>} : memref<144x256xbf16, #tpu.memory_space<vmem>>, vector<16x256xbf16>,
    %c0_72 = arith.constant 0 : index
    %c113_73 = arith.constant 113 : index
    %92 = vector.load %arg14[%c0_72, %c113_73] : memref<16x512xf32, #tpu.memory_space<vmem>>, vector<16x256xf32>
    %c2_74 = arith.constant 2 : index
    %c0_75 = arith.constant 0 : index
    %93 = vector.load %arg4[%c2_74, %c0_75] : memref<9x256xf32, #tpu.memory_space<vmem>>, vector<1x256xf32>
    %94 = vector.broadcast %93 : vector<1x256xf32> to vector<16x256xf32>
    %95 = arith.mulf %92, %94 : vector<16x256xf32>
    %96 = arith.truncf %95 : vector<16x256xf32> to vector<16x256xbf16>
    %c32_76 = arith.constant 32 : index
    %c0_77 = arith.constant 0 : index
    %97 = vector.load %arg16[%c32_76, %c0_77] : memref<144x256xbf16, #tpu.memory_space<vmem>>, vector<16x256xbf16>
    tpu.vector_store %arg16[%c32_76, %c0_77], %96 {strides = array<i32>} : memref<144x256xbf16, #tpu.memory_space<vmem>>, vector<16x256xbf16>,
    %c0_78 = arith.constant 0 : index
    %c127_79 = arith.constant 127 : index
    %98 = vector.load %arg14[%c0_78, %c127_79] : memref<16x512xf32, #tpu.memory_space<vmem>>, vector<16x256xf32>
    %c3_80 = arith.constant 3 : index
    %c0_81 = arith.constant 0 : index
    %99 = vector.load %arg4[%c3_80, %c0_81] : memref<9x256xf32, #tpu.memory_space<vmem>>, vector<1x256xf32>
    %100 = vector.broadcast %99 : vector<1x256xf32> to vector<16x256xf32>
    %101 = arith.mulf %98, %100 : vector<16x256xf32>
    %102 = arith.truncf %101 : vector<16x256xf32> to vector<16x256xbf16>
    %c48_82 = arith.constant 48 : index
    %c0_83 = arith.constant 0 : index
    %103 = vector.load %arg16[%c48_82, %c0_83] : memref<144x256xbf16, #tpu.memory_space<vmem>>, vector<16x256xbf16>
    tpu.vector_store %arg16[%c48_82, %c0_83], %102 {strides = array<i32>} : memref<144x256xbf16, #tpu.memory_space<vmem>>, vector<16x256xbf16>,
    %c0_84 = arith.constant 0 : index
    %c128_85 = arith.constant 128 : index
    %104 = vector.load %arg14[%c0_84, %c128_85] : memref<16x512xf32, #tpu.memory_space<vmem>>, vector<16x256xf32>
    %105 = arith.truncf %104 : vector<16x256xf32> to vector<16x256xbf16>
    %c64_86 = arith.constant 64 : index
    %c0_87 = arith.constant 0 : index
    %106 = vector.load %arg16[%c64_86, %c0_87] : memref<144x256xbf16, #tpu.memory_space<vmem>>, vector<16x256xbf16>
    tpu.vector_store %arg16[%c64_86, %c0_87], %105 {strides = array<i32>} : memref<144x256xbf16, #tpu.memory_space<vmem>>, vector<16x256xbf16>,
    %c0_88 = arith.constant 0 : index
    %c129_89 = arith.constant 129 : index
    %107 = vector.load %arg14[%c0_88, %c129_89] : memref<16x512xf32, #tpu.memory_space<vmem>>, vector<16x256xf32>
    %c5_90 = arith.constant 5 : index
    %c0_91 = arith.constant 0 : index
    %108 = vector.load %arg4[%c5_90, %c0_91] : memref<9x256xf32, #tpu.memory_space<vmem>>, vector<1x256xf32>
    %109 = vector.broadcast %108 : vector<1x256xf32> to vector<16x256xf32>
    %110 = arith.mulf %107, %109 : vector<16x256xf32>
    %111 = arith.truncf %110 : vector<16x256xf32> to vector<16x256xbf16>
    %c80_92 = arith.constant 80 : index
    %c0_93 = arith.constant 0 : index
    %112 = vector.load %arg16[%c80_92, %c0_93] : memref<144x256xbf16, #tpu.memory_space<vmem>>, vector<16x256xbf16>
    tpu.vector_store %arg16[%c80_92, %c0_93], %111 {strides = array<i32>} : memref<144x256xbf16, #tpu.memory_space<vmem>>, vector<16x256xbf16>,
    %c0_94 = arith.constant 0 : index
    %c143_95 = arith.constant 143 : index
    %113 = vector.load %arg14[%c0_94, %c143_95] : memref<16x512xf32, #tpu.memory_space<vmem>>, vector<16x256xf32>
    %c6_96 = arith.constant 6 : index
    %c0_97 = arith.constant 0 : index
    %114 = vector.load %arg4[%c6_96, %c0_97] : memref<9x256xf32, #tpu.memory_space<vmem>>, vector<1x256xf32>
    %115 = vector.broadcast %114 : vector<1x256xf32> to vector<16x256xf32>
    %116 = arith.mulf %113, %115 : vector<16x256xf32>
    %117 = arith.truncf %116 : vector<16x256xf32> to vector<16x256xbf16>
    %c96_98 = arith.constant 96 : index
    %c0_99 = arith.constant 0 : index
    %118 = vector.load %arg16[%c96_98, %c0_99] : memref<144x256xbf16, #tpu.memory_space<vmem>>, vector<16x256xbf16>
    tpu.vector_store %arg16[%c96_98, %c0_99], %117 {strides = array<i32>} : memref<144x256xbf16, #tpu.memory_space<vmem>>, vector<16x256xbf16>,
    %c0_100 = arith.constant 0 : index
    %c144_101 = arith.constant 144 : index
    %119 = vector.load %arg14[%c0_100, %c144_101] : memref<16x512xf32, #tpu.memory_space<vmem>>, vector<16x256xf32>
    %120 = arith.truncf %119 : vector<16x256xf32> to vector<16x256xbf16>
    %c112_102 = arith.constant 112 : index
    %c0_103 = arith.constant 0 : index
    %121 = vector.load %arg16[%c112_102, %c0_103] : memref<144x256xbf16, #tpu.memory_space<vmem>>, vector<16x256xbf16>
    tpu.vector_store %arg16[%c112_102, %c0_103], %120 {strides = array<i32>} : memref<144x256xbf16, #tpu.memory_space<vmem>>, vector<16x256xbf16>,
    %c0_104 = arith.constant 0 : index
    %c145_105 = arith.constant 145 : index
    %122 = vector.load %arg14[%c0_104, %c145_105] : memref<16x512xf32, #tpu.memory_space<vmem>>, vector<16x256xf32>
    %c8_106 = arith.constant 8 : index
    %c0_107 = arith.constant 0 : index
    %123 = vector.load %arg4[%c8_106, %c0_107] : memref<9x256xf32, #tpu.memory_space<vmem>>, vector<1x256xf32>
    %124 = vector.broadcast %123 : vector<1x256xf32> to vector<16x256xf32>
    %125 = arith.mulf %122, %124 : vector<16x256xf32>
    %126 = arith.truncf %125 : vector<16x256xf32> to vector<16x256xbf16>
    %c128_108 = arith.constant 128 : index
    %c0_109 = arith.constant 0 : index
    %127 = vector.load %arg16[%c128_108, %c0_109] : memref<144x256xbf16, #tpu.memory_space<vmem>>, vector<16x256xbf16>
    tpu.vector_store %arg16[%c128_108, %c0_109], %126 {strides = array<i32>} : memref<144x256xbf16, #tpu.memory_space<vmem>>, vector<16x256xbf16>,
    %128 = vector.extract_strided_slice %62 {offsets = [16, 0], sizes = [8, 256], strides = [1, 1]} : vector<24x256xf32> to vector<8x256xf32>
    %c0_110 = arith.constant 0 : index
    %c0_111 = arith.constant 0 : index
    %129 = vector.load %arg7[%c0_110, %c0_111] : memref<8x144xbf16, #tpu.memory_space<vmem>>, vector<8x144xbf16>
    %c0_112 = arith.constant 0 : index
    %c0_113 = arith.constant 0 : index
    %130 = vector.load %arg16[%c0_112, %c0_113] : memref<144x256xbf16, #tpu.memory_space<vmem>>, vector<144x256xbf16>
    %cst_114 = arith.constant dense<0.000000e+00> : vector<8x256xf32>
    %131 = tpu.matmul %129, %130, %cst_114 {dimension_numbers = #tpu.dot_dimension_numbers<[1], [0], [0], [1], [0, 0, 1, 1], [], []>} : vector<8x144xbf16>, vector<144x256xbf16>, vector<8x256xf32> -> vector<8x256xf32>
    %132 = arith.addf %128, %131 : vector<8x256xf32>
    %133 = math.tanh %132 : vector<8x256xf32>
    %cst_115 = arith.constant 1.000000e+00 : f32
    %134 = vector.broadcast %cst_115 : f32 to vector<8x256xf32>
    %135 = arith.subf %134, %68 : vector<8x256xf32>
    %136 = arith.mulf %3, %135 : vector<8x256xf32>
    %137 = arith.mulf %133, %68 : vector<8x256xf32>
    %138 = arith.addf %136, %137 : vector<8x256xf32>
    %c0_116 = arith.constant 0 : index
    %c0_117 = arith.constant 0 : index
    %c0_118 = arith.constant 0 : index
    %139 = vector.load %arg11[%c0_116, %c0_117, %c0_118] : memref<1x8x256xf32, #tpu.memory_space<vmem>>, vector<1x8x256xf32>
    %140 = vector.shape_cast %139 : vector<1x8x256xf32> to vector<8x256xf32>
    %141 = vector.shape_cast %138 : vector<8x256xf32> to vector<1x8x256xf32>
    tpu.vector_store %arg11[%c0_116, %c0_117, %c0_118], %141 {strides = array<i32>} : memref<1x8x256xf32, #tpu.memory_space<vmem>>, vector<1x8x256xf32>,
    %c0_119 = arith.constant 0 : index
    %c0_120 = arith.constant 0 : index
    %c0_121 = arith.constant 0 : index
    %142 = vector.load %arg3[%c0_119, %c0_120, %c0_121] : memref<1x8x256xf32, #tpu.memory_space<vmem>>, vector<1x8x256xf32>
    %143 = vector.shape_cast %142 : vector<1x8x256xf32> to vector<8x256xf32>
    %cst_122 = arith.constant 0.000000e+00 : f32
    %144 = vector.broadcast %cst_122 : f32 to vector<16x128xf32>
    %c0_123 = arith.constant 0 : index
    %c0_124 = arith.constant 0 : index
    %145 = vector.load %arg13[%c0_123, %c0_124] : memref<16x512xf32, #tpu.memory_space<vmem>>, vector<16x128xf32>
    tpu.vector_store %arg13[%c0_123, %c0_124], %144 {strides = array<i32>} : memref<16x512xf32, #tpu.memory_space<vmem>>, vector<16x128xf32>,
    %cst_125 = arith.constant 0.000000e+00 : f32
    %146 = vector.broadcast %cst_125 : f32 to vector<16x128xf32>
    %c0_126 = arith.constant 0 : index
    %c384_127 = arith.constant 384 : index
    %147 = vector.load %arg13[%c0_126, %c384_127] : memref<16x512xf32, #tpu.memory_space<vmem>>, vector<16x128xf32>
    tpu.vector_store %arg13[%c0_126, %c384_127], %146 {strides = array<i32>} : memref<16x512xf32, #tpu.memory_space<vmem>>, vector<16x128xf32>,
    %c0_128 = arith.constant 0 : index
    %c128_129 = arith.constant 128 : index
    %148 = vector.load %arg13[%c0_128, %c128_129] : memref<16x512xf32, #tpu.memory_space<vmem>>, vector<8x256xf32>
    tpu.vector_store %arg13[%c0_128, %c128_129], %138 {strides = array<i32>} : memref<16x512xf32, #tpu.memory_space<vmem>>, vector<8x256xf32>,
    %c8_130 = arith.constant 8 : index
    %c128_131 = arith.constant 128 : index
    %149 = vector.load %arg13[%c8_130, %c128_131] : memref<16x512xf32, #tpu.memory_space<vmem>>, vector<8x256xf32>
    tpu.vector_store %arg13[%c8_130, %c128_131], %143 {strides = array<i32>} : memref<16x512xf32, #tpu.memory_space<vmem>>, vector<8x256xf32>,
    %c0_132 = arith.constant 0 : index
    %c111_133 = arith.constant 111 : index
    %150 = vector.load %arg13[%c0_132, %c111_133] : memref<16x512xf32, #tpu.memory_space<vmem>>, vector<16x256xf32>
    %c0_134 = arith.constant 0 : index
    %c0_135 = arith.constant 0 : index
    %151 = vector.load %arg4[%c0_134, %c0_135] : memref<9x256xf32, #tpu.memory_space<vmem>>, vector<1x256xf32>
    %152 = vector.broadcast %151 : vector<1x256xf32> to vector<16x256xf32>
    %153 = arith.mulf %150, %152 : vector<16x256xf32>
    %154 = arith.truncf %153 : vector<16x256xf32> to vector<16x256xbf16>
    %c0_136 = arith.constant 0 : index
    %c0_137 = arith.constant 0 : index
    %155 = vector.load %arg15[%c0_136, %c0_137] : memref<144x256xbf16, #tpu.memory_space<vmem>>, vector<16x256xbf16>
    tpu.vector_store %arg15[%c0_136, %c0_137], %154 {strides = array<i32>} : memref<144x256xbf16, #tpu.memory_space<vmem>>, vector<16x256xbf16>,
    %c0_138 = arith.constant 0 : index
    %c112_139 = arith.constant 112 : index
    %156 = vector.load %arg13[%c0_138, %c112_139] : memref<16x512xf32, #tpu.memory_space<vmem>>, vector<16x256xf32>
    %157 = arith.truncf %156 : vector<16x256xf32> to vector<16x256xbf16>
    %c16_140 = arith.constant 16 : index
    %c0_141 = arith.constant 0 : index
    %158 = vector.load %arg15[%c16_140, %c0_141] : memref<144x256xbf16, #tpu.memory_space<vmem>>, vector<16x256xbf16>
    tpu.vector_store %arg15[%c16_140, %c0_141], %157 {strides = array<i32>} : memref<144x256xbf16, #tpu.memory_space<vmem>>, vector<16x256xbf16>,
    %c0_142 = arith.constant 0 : index
    %c113_143 = arith.constant 113 : index
    %159 = vector.load %arg13[%c0_142, %c113_143] : memref<16x512xf32, #tpu.memory_space<vmem>>, vector<16x256xf32>
    %c2_144 = arith.constant 2 : index
    %c0_145 = arith.constant 0 : index
    %160 = vector.load %arg4[%c2_144, %c0_145] : memref<9x256xf32, #tpu.memory_space<vmem>>, vector<1x256xf32>
    %161 = vector.broadcast %160 : vector<1x256xf32> to vector<16x256xf32>
    %162 = arith.mulf %159, %161 : vector<16x256xf32>
    %163 = arith.truncf %162 : vector<16x256xf32> to vector<16x256xbf16>
    %c32_146 = arith.constant 32 : index
    %c0_147 = arith.constant 0 : index
    %164 = vector.load %arg15[%c32_146, %c0_147] : memref<144x256xbf16, #tpu.memory_space<vmem>>, vector<16x256xbf16>
    tpu.vector_store %arg15[%c32_146, %c0_147], %163 {strides = array<i32>} : memref<144x256xbf16, #tpu.memory_space<vmem>>, vector<16x256xbf16>,
    %c0_148 = arith.constant 0 : index
    %c127_149 = arith.constant 127 : index
    %165 = vector.load %arg13[%c0_148, %c127_149] : memref<16x512xf32, #tpu.memory_space<vmem>>, vector<16x256xf32>
    %c3_150 = arith.constant 3 : index
    %c0_151 = arith.constant 0 : index
    %166 = vector.load %arg4[%c3_150, %c0_151] : memref<9x256xf32, #tpu.memory_space<vmem>>, vector<1x256xf32>
    %167 = vector.broadcast %166 : vector<1x256xf32> to vector<16x256xf32>
    %168 = arith.mulf %165, %167 : vector<16x256xf32>
    %169 = arith.truncf %168 : vector<16x256xf32> to vector<16x256xbf16>
    %c48_152 = arith.constant 48 : index
    %c0_153 = arith.constant 0 : index
    %170 = vector.load %arg15[%c48_152, %c0_153] : memref<144x256xbf16, #tpu.memory_space<vmem>>, vector<16x256xbf16>
    tpu.vector_store %arg15[%c48_152, %c0_153], %169 {strides = array<i32>} : memref<144x256xbf16, #tpu.memory_space<vmem>>, vector<16x256xbf16>,
    %c0_154 = arith.constant 0 : index
    %c128_155 = arith.constant 128 : index
    %171 = vector.load %arg13[%c0_154, %c128_155] : memref<16x512xf32, #tpu.memory_space<vmem>>, vector<16x256xf32>
    %172 = arith.truncf %171 : vector<16x256xf32> to vector<16x256xbf16>
    %c64_156 = arith.constant 64 : index
    %c0_157 = arith.constant 0 : index
    %173 = vector.load %arg15[%c64_156, %c0_157] : memref<144x256xbf16, #tpu.memory_space<vmem>>, vector<16x256xbf16>
    tpu.vector_store %arg15[%c64_156, %c0_157], %172 {strides = array<i32>} : memref<144x256xbf16, #tpu.memory_space<vmem>>, vector<16x256xbf16>,
    %c0_158 = arith.constant 0 : index
    %c129_159 = arith.constant 129 : index
    %174 = vector.load %arg13[%c0_158, %c129_159] : memref<16x512xf32, #tpu.memory_space<vmem>>, vector<16x256xf32>
    %c5_160 = arith.constant 5 : index
    %c0_161 = arith.constant 0 : index
    %175 = vector.load %arg4[%c5_160, %c0_161] : memref<9x256xf32, #tpu.memory_space<vmem>>, vector<1x256xf32>
    %176 = vector.broadcast %175 : vector<1x256xf32> to vector<16x256xf32>
    %177 = arith.mulf %174, %176 : vector<16x256xf32>
    %178 = arith.truncf %177 : vector<16x256xf32> to vector<16x256xbf16>
    %c80_162 = arith.constant 80 : index
    %c0_163 = arith.constant 0 : index
    %179 = vector.load %arg15[%c80_162, %c0_163] : memref<144x256xbf16, #tpu.memory_space<vmem>>, vector<16x256xbf16>
    tpu.vector_store %arg15[%c80_162, %c0_163], %178 {strides = array<i32>} : memref<144x256xbf16, #tpu.memory_space<vmem>>, vector<16x256xbf16>,
    %c0_164 = arith.constant 0 : index
    %c143_165 = arith.constant 143 : index
    %180 = vector.load %arg13[%c0_164, %c143_165] : memref<16x512xf32, #tpu.memory_space<vmem>>, vector<16x256xf32>
    %c6_166 = arith.constant 6 : index
    %c0_167 = arith.constant 0 : index
    %181 = vector.load %arg4[%c6_166, %c0_167] : memref<9x256xf32, #tpu.memory_space<vmem>>, vector<1x256xf32>
    %182 = vector.broadcast %181 : vector<1x256xf32> to vector<16x256xf32>
    %183 = arith.mulf %180, %182 : vector<16x256xf32>
    %184 = arith.truncf %183 : vector<16x256xf32> to vector<16x256xbf16>
    %c96_168 = arith.constant 96 : index
    %c0_169 = arith.constant 0 : index
    %185 = vector.load %arg15[%c96_168, %c0_169] : memref<144x256xbf16, #tpu.memory_space<vmem>>, vector<16x256xbf16>
    tpu.vector_store %arg15[%c96_168, %c0_169], %184 {strides = array<i32>} : memref<144x256xbf16, #tpu.memory_space<vmem>>, vector<16x256xbf16>,
    %c0_170 = arith.constant 0 : index
    %c144_171 = arith.constant 144 : index
    %186 = vector.load %arg13[%c0_170, %c144_171] : memref<16x512xf32, #tpu.memory_space<vmem>>, vector<16x256xf32>
    %187 = arith.truncf %186 : vector<16x256xf32> to vector<16x256xbf16>
    %c112_172 = arith.constant 112 : index
    %c0_173 = arith.constant 0 : index
    %188 = vector.load %arg15[%c112_172, %c0_173] : memref<144x256xbf16, #tpu.memory_space<vmem>>, vector<16x256xbf16>
    tpu.vector_store %arg15[%c112_172, %c0_173], %187 {strides = array<i32>} : memref<144x256xbf16, #tpu.memory_space<vmem>>, vector<16x256xbf16>,
    %c0_174 = arith.constant 0 : index
    %c145_175 = arith.constant 145 : index
    %189 = vector.load %arg13[%c0_174, %c145_175] : memref<16x512xf32, #tpu.memory_space<vmem>>, vector<16x256xf32>
    %c8_176 = arith.constant 8 : index
    %c0_177 = arith.constant 0 : index
    %190 = vector.load %arg4[%c8_176, %c0_177] : memref<9x256xf32, #tpu.memory_space<vmem>>, vector<1x256xf32>
    %191 = vector.broadcast %190 : vector<1x256xf32> to vector<16x256xf32>
    %192 = arith.mulf %189, %191 : vector<16x256xf32>
    %193 = arith.truncf %192 : vector<16x256xf32> to vector<16x256xbf16>
    %c128_178 = arith.constant 128 : index
    %c0_179 = arith.constant 0 : index
    %194 = vector.load %arg15[%c128_178, %c0_179] : memref<144x256xbf16, #tpu.memory_space<vmem>>, vector<16x256xbf16>
    tpu.vector_store %arg15[%c128_178, %c0_179], %193 {strides = array<i32>} : memref<144x256xbf16, #tpu.memory_space<vmem>>, vector<16x256xbf16>,
    %c0_180 = arith.constant 0 : index
    %c0_181 = arith.constant 0 : index
    %195 = vector.load %arg8[%c0_180, %c0_181] : memref<24x144xbf16, #tpu.memory_space<vmem>>, vector<24x144xbf16>
    %c0_182 = arith.constant 0 : index
    %c0_183 = arith.constant 0 : index
    %196 = vector.load %arg15[%c0_182, %c0_183] : memref<144x256xbf16, #tpu.memory_space<vmem>>, vector<144x256xbf16>
    %cst_184 = arith.constant dense<0.000000e+00> : vector<24x256xf32>
    %197 = tpu.matmul %195, %196, %cst_184 {dimension_numbers = #tpu.dot_dimension_numbers<[1], [0], [0], [1], [0, 0, 1, 1], [], []>} : vector<24x144xbf16>, vector<144x256xbf16>, vector<24x256xf32> -> vector<24x256xf32>
    %c0_185 = arith.constant 0 : index
    %c0_186 = arith.constant 0 : index
    %198 = vector.load %arg9[%c0_185, %c0_186] : memref<24x1xf32, #tpu.memory_space<vmem>>, vector<24x1xf32>
    %199 = vector.broadcast %198 : vector<24x1xf32> to vector<24x256xf32>
    %200 = arith.addf %197, %199 : vector<24x256xf32>
    %201 = vector.extract_strided_slice %200 {offsets = [0, 0], sizes = [8, 256], strides = [1, 1]} : vector<24x256xf32> to vector<8x256xf32>
    %202 = arith.negf %201 : vector<8x256xf32>
    %203 = math.exp %202 : vector<8x256xf32>
    %cst_187 = arith.constant 1.000000e+00 : f32
    %204 = vector.broadcast %cst_187 : f32 to vector<8x256xf32>
    %205 = arith.addf %204, %203 : vector<8x256xf32>
    %206 = arith.divf %204, %205 : vector<8x256xf32>
    %207 = vector.extract_strided_slice %200 {offsets = [8, 0], sizes = [8, 256], strides = [1, 1]} : vector<24x256xf32> to vector<8x256xf32>
    %208 = arith.negf %207 : vector<8x256xf32>
    %209 = math.exp %208 : vector<8x256xf32>
    %cst_188 = arith.constant 1.000000e+00 : f32
    %210 = vector.broadcast %cst_188 : f32 to vector<8x256xf32>
    %211 = arith.addf %210, %209 : vector<8x256xf32>
    %212 = arith.divf %210, %211 : vector<8x256xf32>
    %cst_189 = arith.constant 0.000000e+00 : f32
    %213 = vector.broadcast %cst_189 : f32 to vector<16x128xf32>
    %c0_190 = arith.constant 0 : index
    %c0_191 = arith.constant 0 : index
    %214 = vector.load %arg14[%c0_190, %c0_191] : memref<16x512xf32, #tpu.memory_space<vmem>>, vector<16x128xf32>
    tpu.vector_store %arg14[%c0_190, %c0_191], %213 {strides = array<i32>} : memref<16x512xf32, #tpu.memory_space<vmem>>, vector<16x128xf32>,
    %cst_192 = arith.constant 0.000000e+00 : f32
    %215 = vector.broadcast %cst_192 : f32 to vector<16x128xf32>
    %c0_193 = arith.constant 0 : index
    %c384_194 = arith.constant 384 : index
    %216 = vector.load %arg14[%c0_193, %c384_194] : memref<16x512xf32, #tpu.memory_space<vmem>>, vector<16x128xf32>
    tpu.vector_store %arg14[%c0_193, %c384_194], %215 {strides = array<i32>} : memref<16x512xf32, #tpu.memory_space<vmem>>, vector<16x128xf32>,
    %cst_195 = arith.constant 0.000000e+00 : f32
    %217 = vector.broadcast %cst_195 : f32 to vector<8x256xf32>
    %c8_196 = arith.constant 8 : index
    %c128_197 = arith.constant 128 : index
    %218 = vector.load %arg14[%c8_196, %c128_197] : memref<16x512xf32, #tpu.memory_space<vmem>>, vector<8x256xf32>
    tpu.vector_store %arg14[%c8_196, %c128_197], %217 {strides = array<i32>} : memref<16x512xf32, #tpu.memory_space<vmem>>, vector<8x256xf32>,
    %219 = arith.mulf %143, %212 : vector<8x256xf32>
    %c0_198 = arith.constant 0 : index
    %c128_199 = arith.constant 128 : index
    %220 = vector.load %arg14[%c0_198, %c128_199] : memref<16x512xf32, #tpu.memory_space<vmem>>, vector<8x256xf32>
    tpu.vector_store %arg14[%c0_198, %c128_199], %219 {strides = array<i32>} : memref<16x512xf32, #tpu.memory_space<vmem>>, vector<8x256xf32>,
    %c0_200 = arith.constant 0 : index
    %c111_201 = arith.constant 111 : index
    %221 = vector.load %arg14[%c0_200, %c111_201] : memref<16x512xf32, #tpu.memory_space<vmem>>, vector<16x256xf32>
    %c0_202 = arith.constant 0 : index
    %c0_203 = arith.constant 0 : index
    %222 = vector.load %arg4[%c0_202, %c0_203] : memref<9x256xf32, #tpu.memory_space<vmem>>, vector<1x256xf32>
    %223 = vector.broadcast %222 : vector<1x256xf32> to vector<16x256xf32>
    %224 = arith.mulf %221, %223 : vector<16x256xf32>
    %225 = arith.truncf %224 : vector<16x256xf32> to vector<16x256xbf16>
    %c0_204 = arith.constant 0 : index
    %c0_205 = arith.constant 0 : index
    %226 = vector.load %arg16[%c0_204, %c0_205] : memref<144x256xbf16, #tpu.memory_space<vmem>>, vector<16x256xbf16>
    tpu.vector_store %arg16[%c0_204, %c0_205], %225 {strides = array<i32>} : memref<144x256xbf16, #tpu.memory_space<vmem>>, vector<16x256xbf16>,
    %c0_206 = arith.constant 0 : index
    %c112_207 = arith.constant 112 : index
    %227 = vector.load %arg14[%c0_206, %c112_207] : memref<16x512xf32, #tpu.memory_space<vmem>>, vector<16x256xf32>
    %228 = arith.truncf %227 : vector<16x256xf32> to vector<16x256xbf16>
    %c16_208 = arith.constant 16 : index
    %c0_209 = arith.constant 0 : index
    %229 = vector.load %arg16[%c16_208, %c0_209] : memref<144x256xbf16, #tpu.memory_space<vmem>>, vector<16x256xbf16>
    tpu.vector_store %arg16[%c16_208, %c0_209], %228 {strides = array<i32>} : memref<144x256xbf16, #tpu.memory_space<vmem>>, vector<16x256xbf16>,
    %c0_210 = arith.constant 0 : index
    %c113_211 = arith.constant 113 : index
    %230 = vector.load %arg14[%c0_210, %c113_211] : memref<16x512xf32, #tpu.memory_space<vmem>>, vector<16x256xf32>
    %c2_212 = arith.constant 2 : index
    %c0_213 = arith.constant 0 : index
    %231 = vector.load %arg4[%c2_212, %c0_213] : memref<9x256xf32, #tpu.memory_space<vmem>>, vector<1x256xf32>
    %232 = vector.broadcast %231 : vector<1x256xf32> to vector<16x256xf32>
    %233 = arith.mulf %230, %232 : vector<16x256xf32>
    %234 = arith.truncf %233 : vector<16x256xf32> to vector<16x256xbf16>
    %c32_214 = arith.constant 32 : index
    %c0_215 = arith.constant 0 : index
    %235 = vector.load %arg16[%c32_214, %c0_215] : memref<144x256xbf16, #tpu.memory_space<vmem>>, vector<16x256xbf16>
    tpu.vector_store %arg16[%c32_214, %c0_215], %234 {strides = array<i32>} : memref<144x256xbf16, #tpu.memory_space<vmem>>, vector<16x256xbf16>,
    %c0_216 = arith.constant 0 : index
    %c127_217 = arith.constant 127 : index
    %236 = vector.load %arg14[%c0_216, %c127_217] : memref<16x512xf32, #tpu.memory_space<vmem>>, vector<16x256xf32>
    %c3_218 = arith.constant 3 : index
    %c0_219 = arith.constant 0 : index
    %237 = vector.load %arg4[%c3_218, %c0_219] : memref<9x256xf32, #tpu.memory_space<vmem>>, vector<1x256xf32>
    %238 = vector.broadcast %237 : vector<1x256xf32> to vector<16x256xf32>
    %239 = arith.mulf %236, %238 : vector<16x256xf32>
    %240 = arith.truncf %239 : vector<16x256xf32> to vector<16x256xbf16>
    %c48_220 = arith.constant 48 : index
    %c0_221 = arith.constant 0 : index
    %241 = vector.load %arg16[%c48_220, %c0_221] : memref<144x256xbf16, #tpu.memory_space<vmem>>, vector<16x256xbf16>
    tpu.vector_store %arg16[%c48_220, %c0_221], %240 {strides = array<i32>} : memref<144x256xbf16, #tpu.memory_space<vmem>>, vector<16x256xbf16>,
    %c0_222 = arith.constant 0 : index
    %c128_223 = arith.constant 128 : index
    %242 = vector.load %arg14[%c0_222, %c128_223] : memref<16x512xf32, #tpu.memory_space<vmem>>, vector<16x256xf32>
    %243 = arith.truncf %242 : vector<16x256xf32> to vector<16x256xbf16>
    %c64_224 = arith.constant 64 : index
    %c0_225 = arith.constant 0 : index
    %244 = vector.load %arg16[%c64_224, %c0_225] : memref<144x256xbf16, #tpu.memory_space<vmem>>, vector<16x256xbf16>
    tpu.vector_store %arg16[%c64_224, %c0_225], %243 {strides = array<i32>} : memref<144x256xbf16, #tpu.memory_space<vmem>>, vector<16x256xbf16>,
    %c0_226 = arith.constant 0 : index
    %c129_227 = arith.constant 129 : index
    %245 = vector.load %arg14[%c0_226, %c129_227] : memref<16x512xf32, #tpu.memory_space<vmem>>, vector<16x256xf32>
    %c5_228 = arith.constant 5 : index
    %c0_229 = arith.constant 0 : index
    %246 = vector.load %arg4[%c5_228, %c0_229] : memref<9x256xf32, #tpu.memory_space<vmem>>, vector<1x256xf32>
    %247 = vector.broadcast %246 : vector<1x256xf32> to vector<16x256xf32>
    %248 = arith.mulf %245, %247 : vector<16x256xf32>
    %249 = arith.truncf %248 : vector<16x256xf32> to vector<16x256xbf16>
    %c80_230 = arith.constant 80 : index
    %c0_231 = arith.constant 0 : index
    %250 = vector.load %arg16[%c80_230, %c0_231] : memref<144x256xbf16, #tpu.memory_space<vmem>>, vector<16x256xbf16>
    tpu.vector_store %arg16[%c80_230, %c0_231], %249 {strides = array<i32>} : memref<144x256xbf16, #tpu.memory_space<vmem>>, vector<16x256xbf16>,
    %c0_232 = arith.constant 0 : index
    %c143_233 = arith.constant 143 : index
    %251 = vector.load %arg14[%c0_232, %c143_233] : memref<16x512xf32, #tpu.memory_space<vmem>>, vector<16x256xf32>
    %c6_234 = arith.constant 6 : index
    %c0_235 = arith.constant 0 : index
    %252 = vector.load %arg4[%c6_234, %c0_235] : memref<9x256xf32, #tpu.memory_space<vmem>>, vector<1x256xf32>
    %253 = vector.broadcast %252 : vector<1x256xf32> to vector<16x256xf32>
    %254 = arith.mulf %251, %253 : vector<16x256xf32>
    %255 = arith.truncf %254 : vector<16x256xf32> to vector<16x256xbf16>
    %c96_236 = arith.constant 96 : index
    %c0_237 = arith.constant 0 : index
    %256 = vector.load %arg16[%c96_236, %c0_237] : memref<144x256xbf16, #tpu.memory_space<vmem>>, vector<16x256xbf16>
    tpu.vector_store %arg16[%c96_236, %c0_237], %255 {strides = array<i32>} : memref<144x256xbf16, #tpu.memory_space<vmem>>, vector<16x256xbf16>,
    %c0_238 = arith.constant 0 : index
    %c144_239 = arith.constant 144 : index
    %257 = vector.load %arg14[%c0_238, %c144_239] : memref<16x512xf32, #tpu.memory_space<vmem>>, vector<16x256xf32>
    %258 = arith.truncf %257 : vector<16x256xf32> to vector<16x256xbf16>
    %c112_240 = arith.constant 112 : index
    %c0_241 = arith.constant 0 : index
    %259 = vector.load %arg16[%c112_240, %c0_241] : memref<144x256xbf16, #tpu.memory_space<vmem>>, vector<16x256xbf16>
    tpu.vector_store %arg16[%c112_240, %c0_241], %258 {strides = array<i32>} : memref<144x256xbf16, #tpu.memory_space<vmem>>, vector<16x256xbf16>,
    %c0_242 = arith.constant 0 : index
    %c145_243 = arith.constant 145 : index
    %260 = vector.load %arg14[%c0_242, %c145_243] : memref<16x512xf32, #tpu.memory_space<vmem>>, vector<16x256xf32>
    %c8_244 = arith.constant 8 : index
    %c0_245 = arith.constant 0 : index
    %261 = vector.load %arg4[%c8_244, %c0_245] : memref<9x256xf32, #tpu.memory_space<vmem>>, vector<1x256xf32>
    %262 = vector.broadcast %261 : vector<1x256xf32> to vector<16x256xf32>
    %263 = arith.mulf %260, %262 : vector<16x256xf32>
    %264 = arith.truncf %263 : vector<16x256xf32> to vector<16x256xbf16>
    %c128_246 = arith.constant 128 : index
    %c0_247 = arith.constant 0 : index
    %265 = vector.load %arg16[%c128_246, %c0_247] : memref<144x256xbf16, #tpu.memory_space<vmem>>, vector<16x256xbf16>
    tpu.vector_store %arg16[%c128_246, %c0_247], %264 {strides = array<i32>} : memref<144x256xbf16, #tpu.memory_space<vmem>>, vector<16x256xbf16>,
    %266 = vector.extract_strided_slice %200 {offsets = [16, 0], sizes = [8, 256], strides = [1, 1]} : vector<24x256xf32> to vector<8x256xf32>
    %c0_248 = arith.constant 0 : index
    %c0_249 = arith.constant 0 : index
    %267 = vector.load %arg10[%c0_248, %c0_249] : memref<8x144xbf16, #tpu.memory_space<vmem>>, vector<8x144xbf16>
    %c0_250 = arith.constant 0 : index
    %c0_251 = arith.constant 0 : index
    %268 = vector.load %arg16[%c0_250, %c0_251] : memref<144x256xbf16, #tpu.memory_space<vmem>>, vector<144x256xbf16>
    %cst_252 = arith.constant dense<0.000000e+00> : vector<8x256xf32>
    %269 = tpu.matmul %267, %268, %cst_252 {dimension_numbers = #tpu.dot_dimension_numbers<[1], [0], [0], [1], [0, 0, 1, 1], [], []>} : vector<8x144xbf16>, vector<144x256xbf16>, vector<8x256xf32> -> vector<8x256xf32>
    %270 = arith.addf %266, %269 : vector<8x256xf32>
    %271 = math.tanh %270 : vector<8x256xf32>
    %cst_253 = arith.constant 1.000000e+00 : f32
    %272 = vector.broadcast %cst_253 : f32 to vector<8x256xf32>
    %273 = arith.subf %272, %206 : vector<8x256xf32>
    %274 = arith.mulf %143, %273 : vector<8x256xf32>
    %275 = arith.mulf %271, %206 : vector<8x256xf32>
    %276 = arith.addf %274, %275 : vector<8x256xf32>
    %c0_254 = arith.constant 0 : index
    %c0_255 = arith.constant 0 : index
    %c0_256 = arith.constant 0 : index
    %277 = vector.load %arg12[%c0_254, %c0_255, %c0_256] : memref<1x8x256xf32, #tpu.memory_space<vmem>>, vector<1x8x256xf32>
    %278 = vector.shape_cast %277 : vector<1x8x256xf32> to vector<8x256xf32>
    %279 = vector.shape_cast %276 : vector<8x256xf32> to vector<1x8x256xf32>
    tpu.vector_store %arg12[%c0_254, %c0_255, %c0_256], %279 {strides = array<i32>} : memref<1x8x256xf32, #tpu.memory_space<vmem>>, vector<1x8x256xf32>,
    return
  }
  func.func @transform_0(%arg0: i32) -> (i32, i32, i32) {
    %c0_i32 = arith.constant 0 : i32
    %c0_i32_0 = arith.constant 0 : i32
    %c0_i32_1 = arith.constant 0 : i32
    return %arg0, %c0_i32, %c0_i32_0 : i32, i32, i32
  }
  func.func @transform_1(%arg0: i32) -> (i32, i32, i32) {
    %c0_i32 = arith.constant 0 : i32
    %c0_i32_0 = arith.constant 0 : i32
    %c0_i32_1 = arith.constant 0 : i32
    return %arg0, %c0_i32, %c0_i32_0 : i32, i32, i32
  }
  func.func @transform_2(%arg0: i32) -> (i32, i32, i32) {
    %c0_i32 = arith.constant 0 : i32
    %c0_i32_0 = arith.constant 0 : i32
    %c0_i32_1 = arith.constant 0 : i32
    return %arg0, %c0_i32, %c0_i32_0 : i32, i32, i32
  }
  func.func @transform_3(%arg0: i32) -> (i32, i32) {
    %c0_i32 = arith.constant 0 : i32
    %c0_i32_0 = arith.constant 0 : i32
    %c0_i32_1 = arith.constant 0 : i32
    return %c0_i32, %c0_i32_0 : i32, i32
  }
  func.func @transform_4(%arg0: i32) -> (i32, i32) {
    %c0_i32 = arith.constant 0 : i32
    %c0_i32_0 = arith.constant 0 : i32
    %c0_i32_1 = arith.constant 0 : i32
    return %c0_i32, %c0_i32_0 : i32, i32
  }
  func.func @transform_5(%arg0: i32) -> (i32, i32) {
    %c0_i32 = arith.constant 0 : i32
    %c0_i32_0 = arith.constant 0 : i32
    %c0_i32_1 = arith.constant 0 : i32
    return %c0_i32, %c0_i32_0 : i32, i32
  }
  func.func @transform_6(%arg0: i32) -> (i32, i32) {
    %c0_i32 = arith.constant 0 : i32
    %c0_i32_0 = arith.constant 0 : i32
    %c0_i32_1 = arith.constant 0 : i32
    return %c0_i32, %c0_i32_0 : i32, i32
  }
  func.func @transform_7(%arg0: i32) -> (i32, i32) {
    %c0_i32 = arith.constant 0 : i32
    %c0_i32_0 = arith.constant 0 : i32
    %c0_i32_1 = arith.constant 0 : i32
    return %c0_i32, %c0_i32_0 : i32, i32
  }
  func.func @transform_8(%arg0: i32) -> (i32, i32) {
    %c0_i32 = arith.constant 0 : i32
    %c0_i32_0 = arith.constant 0 : i32
    %c0_i32_1 = arith.constant 0 : i32
    return %c0_i32, %c0_i32_0 : i32, i32
  }
  func.func @transform_9(%arg0: i32) -> (i32, i32) {
    %c0_i32 = arith.constant 0 : i32
    %c0_i32_0 = arith.constant 0 : i32
    %c0_i32_1 = arith.constant 0 : i32
    return %c0_i32, %c0_i32_0 : i32, i32
  }
  func.func @transform_10(%arg0: i32) -> (i32, i32, i32) {
    %c0_i32 = arith.constant 0 : i32
    %c0_i32_0 = arith.constant 0 : i32
    %c0_i32_1 = arith.constant 0 : i32
    return %arg0, %c0_i32, %c0_i32_0 : i32, i32, i32
  }
  func.func @transform_11(%arg0: i32) -> (i32, i32, i32) {
    %c0_i32 = arith.constant 0 : i32
    %c0_i32_0 = arith.constant 0 : i32
    %c0_i32_1 = arith.constant 0 : i32
    return %arg0, %c0_i32, %c0_i32_0 : i32, i32, i32
  }
}

</mosaic_0001>

<llo_original>
// kernel: tpu_custom_call.1
$region0: #{tpu_custom_call.1}
  #allocation0 [shape = 'u32[]', space=smem, size = 0x4, offset = 0x4, fixed_abs, tag = 'smem constant byte address 0x4 - core index']
  #allocation1 [shape = 'u32[144,128]{1,0:T(1,128)}', space=vmem, size = 0x12000, scoped, tag = 'internal scratch']
  #allocation2 [shape = 'f32[16,512]{1,0:T(8,128)}', space=vmem, size = 0x8000, scoped, tag = 'scratch operand']
  #allocation3 [shape = 'f32[16,512]{1,0:T(8,128)}', space=vmem, size = 0x8000, scoped, tag = 'scratch operand']
  #allocation4 [shape = 'bf16[144,256]{1,0:T(8,128)(2,1)}', space=vmem, size = 0x12000, scoped, tag = 'scratch operand']
  #allocation5 [shape = 'bf16[144,256]{1,0:T(8,128)(2,1)}', space=vmem, size = 0x12000, scoped, tag = 'scratch operand']
  %s0 = inlined_call_operand.hbm [shape: f32[2,4,256], index: 0, kind: input, shape index: {}]
  %s1 = inlined_call_operand.vmem [shape: f32[2,8,256], index: 1, kind: input, shape index: {}]
  %s2 = inlined_call_operand.hbm [shape: f32[2,8,256], index: 2, kind: input, shape index: {}]
  %s3 = inlined_call_operand.hbm [shape: f32[9,256], index: 3, kind: input, shape index: {}]
  %s4 = inlined_call_operand.vmem [shape: bf16[24,144], index: 4, kind: input, shape index: {}]
  %s5 = inlined_call_operand.vmem [shape: f32[24,1], index: 5, kind: input, shape index: {}]
  %s6 = inlined_call_operand.hbm [shape: bf16[8,144], index: 6, kind: input, shape index: {}]
  %s7 = inlined_call_operand.hbm [shape: bf16[24,144], index: 7, kind: input, shape index: {}]
  %s8 = inlined_call_operand.vmem [shape: f32[24,1], index: 8, kind: input, shape index: {}]
  %s9 = inlined_call_operand.vmem [shape: bf16[8,144], index: 9, kind: input, shape index: {}]
  %s10 = inlined_call_operand.hbm [shape: f32[2,8,256], index: 10, kind: output, shape index: {0}]
  %s11 = inlined_call_operand.hbm [shape: f32[2,8,256], index: 11, kind: output, shape index: {1}]
  %12 = xla_tuple %s10, %s11
  %s13 = sld [smem:[#allocation0]]
  $region101: #{tpu_custom_call.1} parent=0
    _
  %s15 = ssub.s32 1, %s13
  %s16 = scalar_select 0, %s15, %s13
  $region1: #{tpu_custom_call.1} parent=0
    #allocation6 [shape = 'u8[8192]{0}', space=vmem, size = 0x2000, scoped, tag = 'input window, operand 0']
    #allocation7 [shape = 's32[2]{0}', space=sflag, size = 0x8, scoped, tag = 'scoped memory for tpu_custom_call.1']
    #allocation8 [shape = 's32[2]{0}', space=sflag, size = 0x8, scoped, tag = 'scoped memory for tpu_custom_call.1']
    #allocation9 [shape = 'u8[16384]{0}', space=vmem, size = 0x4000, scoped, tag = 'input window, operand 2']
    #allocation10 [shape = 's32[2]{0}', space=sflag, size = 0x8, scoped, tag = 'scoped memory for tpu_custom_call.1']
    #allocation11 [shape = 'u8[16384]{0}', space=vmem, size = 0x4000, scoped, tag = 'input window, operand 3, single buffered']
    #allocation12 [shape = 'u8[4096]{0}', space=vmem, size = 0x1000, scoped, tag = 'input window, operand 6, single buffered']
    #allocation13 [shape = 's32[1]{0}', space=sflag, size = 0x4, scoped, tag = 'scoped memory for tpu_custom_call.1']
    #allocation14 [shape = 'u8[12288]{0}', space=vmem, size = 0x3000, scoped, tag = 'input window, operand 7, single buffered']
    #allocation15 [shape = 'u8[16384]{0}', space=vmem, size = 0x4000, scoped, tag = 'output window, operand 0']
    #allocation16 [shape = 'u8[16384]{0}', space=vmem, size = 0x4000, scoped, tag = 'output window, operand 1']
    #allocation17 [shape = 's32[2]{0}', space=sflag, size = 0x8, scoped, tag = 'scoped memory for tpu_custom_call.1']
    %17 = vsyncpa [#allocation7], 0
    %s18 = scalar_lea.sflag [#allocation7], 1
    %19 = vsyncpa %s18, 0
    %20 = vsyncpa [#allocation10], 0
    %s21 = scalar_lea.sflag [#allocation10], 1
    %22 = vsyncpa %s21, 0
    %23 = vsyncpa [#allocation13], 0
    %24 = vsyncpa [#allocation8], 0
    %s25 = scalar_lea.sflag [#allocation8], 1
    %26 = vsyncpa %s25, 0
    %27 = vsyncpa [#allocation17], 0
    %s28 = scalar_lea.sflag [#allocation17], 1
    %29 = vsyncpa %s28, 0
    loop: start=0, step=1, limit=4
    $region2: #{tpu_custom_call.1} parent=1 // loop_pre_header
      _
    $region3: #{tpu_custom_call.1} parent=1 // loop_header
      %s31 = sphi 0, %s35
      %p32 = scmp.ge.s32.totalorder %s31, 4
      %s41 = sphi 0, %s43
      %s44 = sphi 0, %s41
      %s45 = sphi 0, %s44
      %s61 = sphi 0, %s45
      %s67 = sphi 0, %s69
      %s70 = sphi 0, %s67
      %s71 = sphi 0, %s70
      %s87 = sphi 0, %s71
      %s93 = sphi 0, %s95
      %s96 = sphi 0, %s93
      %s97 = sphi 0, %s96
      %s113 = sphi 0, %s97
      %s117 = sphi 0, %s117
      %s119 = sphi 0, %s117
      %s120 = sphi 0, %s119
      %s134 = sphi 0, %s120
      %s138 = sphi 0, %s138
      %s140 = sphi 0, %s138
      %s141 = sphi 0, %s140
      %s155 = sphi 0, %s141
      %s159 = sphi 0, %s159
      %s161 = sphi 0, %s159
      %s162 = sphi 0, %s161
      %s176 = sphi 0, %s162
      %s180 = sphi 0, %s180
      %s182 = sphi 0, %s180
      %s183 = sphi 0, %s182
      %s197 = sphi 0, %s183
      %s201 = sphi 0, %s201
      %s203 = sphi 0, %s201
      %s204 = sphi 0, %s203
      %s218 = sphi 0, %s204
      %s222 = sphi 0, %s222
      %s224 = sphi 0, %s222
      %s225 = sphi 0, %s224
      %s239 = sphi 0, %s225
      %s243 = sphi 0, %s243
      %s245 = sphi 0, %s243
      %s246 = sphi 0, %s245
      %s260 = sphi 0, %s246
      %s266 = sphi 0, %s268
      %s269 = sphi 0, %s266
      %s270 = sphi 0, %s269
      %s286 = sphi 0, %s270
      %s292 = sphi 0, %s294
      %s295 = sphi 0, %s292
      %s296 = sphi 0, %s295
      %s312 = sphi 0, %s296
    $region4: #{tpu_custom_call.1} parent=1 // loop_header_branch
      %34 = sbr.rel (%p32) target = $region8
    $region5: #{tpu_custom_call.1} parent=1 // loop_body
      %s36 = ssub.s32 %s31, 1
      %s37 = ssub.s32 %s31, 2
      %s38 = sadd.s32 %s31, 1
      %s39 = ssub.s32 %s31, %s38
      %p40 = scmp.eq.s32.totalorder %s39, 0
      %s42 = sadd.s32 %s41, 1
      %s43 = scalar_select %p40, %s41, %s42
      %p46 = pneg %p40
      %p47 = scmp.eq.s32.totalorder %s31, 1
      %p48 = por %p46, %p47
      %p49 = scmp.ne.s32.totalorder %s41, %s44
      %p50 = scmp.eq.s32.totalorder %s31, 0
      %p51 = por %p49, %p50
      %p52 = scmp.ne.s32.totalorder %s41, %s44
      %p53 = scmp.eq.s32.totalorder %s36, 1
      %p54 = por %p52, %p53
      %p55 = scmp.ne.s32.totalorder %s44, %s45
      %p56 = scmp.eq.s32.totalorder %s36, 0
      %p57 = por %p55, %p56
      %p58 = scmp.ne.s32.totalorder %s44, %s45
      %p59 = scmp.eq.s32.totalorder %s37, 1
      %p60 = por %p58, %p59
      %p62 = scmp.ne.s32.totalorder %s45, %s61
      %p63 = scmp.eq.s32.totalorder %s37, 0
      %p64 = por %p62, %p63
      %s65 = ssub.s32 %s31, %s38
      %p66 = scmp.eq.s32.totalorder %s65, 0
      %s68 = sadd.s32 %s67, 1
      %s69 = scalar_select %p66, %s67, %s68
      %p72 = pneg %p66
      %p73 = scmp.eq.s32.totalorder %s31, 1
      %p74 = por %p72, %p73
      %p75 = scmp.ne.s32.totalorder %s67, %s70
      %p76 = scmp.eq.s32.totalorder %s31, 0
      %p77 = por %p75, %p76
      %p78 = scmp.ne.s32.totalorder %s67, %s70
      %p79 = scmp.eq.s32.totalorder %s36, 1
      %p80 = por %p78, %p79
      %p81 = scmp.ne.s32.totalorder %s70, %s71
      %p82 = scmp.eq.s32.totalorder %s36, 0
      %p83 = por %p81, %p82
      %p84 = scmp.ne.s32.totalorder %s70, %s71
      %p85 = scmp.eq.s32.totalorder %s37, 1
      %p86 = por %p84, %p85
      %p88 = scmp.ne.s32.totalorder %s71, %s87
      %p89 = scmp.eq.s32.totalorder %s37, 0
      %p90 = por %p88, %p89
      %s91 = ssub.s32 %s31, %s38
      %p92 = scmp.eq.s32.totalorder %s91, 0
      %s94 = sadd.s32 %s93, 1
      %s95 = scalar_select %p92, %s93, %s94
      %p98 = pneg %p92
      %p99 = scmp.eq.s32.totalorder %s31, 1
      %p100 = por %p98, %p99
      %p101 = scmp.ne.s32.totalorder %s93, %s96
      %p102 = scmp.eq.s32.totalorder %s31, 0
      %p103 = por %p101, %p102
      %p104 = scmp.ne.s32.totalorder %s93, %s96
      %p105 = scmp.eq.s32.totalorder %s36, 1
      %p106 = por %p104, %p105
      %p107 = scmp.ne.s32.totalorder %s96, %s97
      %p108 = scmp.eq.s32.totalorder %s36, 0
      %p109 = por %p107, %p108
      %p110 = scmp.ne.s32.totalorder %s96, %s97
      %p111 = scmp.eq.s32.totalorder %s37, 1
      %p112 = por %p110, %p111
      %p114 = scmp.ne.s32.totalorder %s97, %s113
      %p115 = scmp.eq.s32.totalorder %s37, 0
      %p116 = por %p114, %p115
      %s118 = sadd.s32 %s117, 1
      %p121 = scmp.eq.s32.totalorder %s31, 1
      %p122 = scmp.ne.s32.totalorder %s117, %s119
      %p123 = scmp.eq.s32.totalorder %s31, 0
      %p124 = por %p122, %p123
      %p125 = scmp.ne.s32.totalorder %s117, %s119
      %p126 = scmp.eq.s32.totalorder %s36, 1
      %p127 = por %p125, %p126
      %p128 = scmp.ne.s32.totalorder %s119, %s120
      %p129 = scmp.eq.s32.totalorder %s36, 0
      %p130 = por %p128, %p129
      %p131 = scmp.ne.s32.totalorder %s119, %s120
      %p132 = scmp.eq.s32.totalorder %s37, 1
      %p133 = por %p131, %p132
      %p135 = scmp.ne.s32.totalorder %s120, %s134
      %p136 = scmp.eq.s32.totalorder %s37, 0
      %p137 = por %p135, %p136
      %s139 = sadd.s32 %s138, 1
      %p142 = scmp.eq.s32.totalorder %s31, 1
      %p143 = scmp.ne.s32.totalorder %s138, %s140
      %p144 = scmp.eq.s32.totalorder %s31, 0
      %p145 = por %p143, %p144
      %p146 = scmp.ne.s32.totalorder %s138, %s140
      %p147 = scmp.eq.s32.totalorder %s36, 1
      %p148 = por %p146, %p147
      %p149 = scmp.ne.s32.totalorder %s140, %s141
      %p150 = scmp.eq.s32.totalorder %s36, 0
      %p151 = por %p149, %p150
      %p152 = scmp.ne.s32.totalorder %s140, %s141
      %p153 = scmp.eq.s32.totalorder %s37, 1
      %p154 = por %p152, %p153
      %p156 = scmp.ne.s32.totalorder %s141, %s155
      %p157 = scmp.eq.s32.totalorder %s37, 0
      %p158 = por %p156, %p157
      %s160 = sadd.s32 %s159, 1
      %p163 = scmp.eq.s32.totalorder %s31, 1
      %p164 = scmp.ne.s32.totalorder %s159, %s161
      %p165 = scmp.eq.s32.totalorder %s31, 0
      %p166 = por %p164, %p165
      %p167 = scmp.ne.s32.totalorder %s159, %s161
      %p168 = scmp.eq.s32.totalorder %s36, 1
      %p169 = por %p167, %p168
      %p170 = scmp.ne.s32.totalorder %s161, %s162
      %p171 = scmp.eq.s32.totalorder %s36, 0
      %p172 = por %p170, %p171
      %p173 = scmp.ne.s32.totalorder %s161, %s162
      %p174 = scmp.eq.s32.totalorder %s37, 1
      %p175 = por %p173, %p174
      %p177 = scmp.ne.s32.totalorder %s162, %s176
      %p178 = scmp.eq.s32.totalorder %s37, 0
      %p179 = por %p177, %p178
      %s181 = sadd.s32 %s180, 1
      %p184 = scmp.eq.s32.totalorder %s31, 1
      %p185 = scmp.ne.s32.totalorder %s180, %s182
      %p186 = scmp.eq.s32.totalorder %s31, 0
      %p187 = por %p185, %p186
      %p188 = scmp.ne.s32.totalorder %s180, %s182
      %p189 = scmp.eq.s32.totalorder %s36, 1
      %p190 = por %p188, %p189
      %p191 = scmp.ne.s32.totalorder %s182, %s183
      %p192 = scmp.eq.s32.totalorder %s36, 0
      %p193 = por %p191, %p192
      %p194 = scmp.ne.s32.totalorder %s182, %s183
      %p195 = scmp.eq.s32.totalorder %s37, 1
      %p196 = por %p194, %p195
      %p198 = scmp.ne.s32.totalorder %s183, %s197
      %p199 = scmp.eq.s32.totalorder %s37, 0
      %p200 = por %p198, %p199
      %s202 = sadd.s32 %s201, 1
      %p205 = scmp.eq.s32.totalorder %s31, 1
      %p206 = scmp.ne.s32.totalorder %s201, %s203
      %p207 = scmp.eq.s32.totalorder %s31, 0
      %p208 = por %p206, %p207
      %p209 = scmp.ne.s32.totalorder %s201, %s203
      %p210 = scmp.eq.s32.totalorder %s36, 1
      %p211 = por %p209, %p210
      %p212 = scmp.ne.s32.totalorder %s203, %s204
      %p213 = scmp.eq.s32.totalorder %s36, 0
      %p214 = por %p212, %p213
      %p215 = scmp.ne.s32.totalorder %s203, %s204
      %p216 = scmp.eq.s32.totalorder %s37, 1
      %p217 = por %p215, %p216
      %p219 = scmp.ne.s32.totalorder %s204, %s218
      %p220 = scmp.eq.s32.totalorder %s37, 0
      %p221 = por %p219, %p220
      %s223 = sadd.s32 %s222, 1
      %p226 = scmp.eq.s32.totalorder %s31, 1
      %p227 = scmp.ne.s32.totalorder %s222, %s224
      %p228 = scmp.eq.s32.totalorder %s31, 0
      %p229 = por %p227, %p228
      %p230 = scmp.ne.s32.totalorder %s222, %s224
      %p231 = scmp.eq.s32.totalorder %s36, 1
      %p232 = por %p230, %p231
      %p233 = scmp.ne.s32.totalorder %s224, %s225
      %p234 = scmp.eq.s32.totalorder %s36, 0
      %p235 = por %p233, %p234
      %p236 = scmp.ne.s32.totalorder %s224, %s225
      %p237 = scmp.eq.s32.totalorder %s37, 1
      %p238 = por %p236, %p237
      %p240 = scmp.ne.s32.totalorder %s225, %s239
      %p241 = scmp.eq.s32.totalorder %s37, 0
      %p242 = por %p240, %p241
      %s244 = sadd.s32 %s243, 1
      %p247 = scmp.eq.s32.totalorder %s31, 1
      %p248 = scmp.ne.s32.totalorder %s243, %s245
      %p249 = scmp.eq.s32.totalorder %s31, 0
      %p250 = por %p248, %p249
      %p251 = scmp.ne.s32.totalorder %s243, %s245
      %p252 = scmp.eq.s32.totalorder %s36, 1
      %p253 = por %p251, %p252
      %p254 = scmp.ne.s32.totalorder %s245, %s246
      %p255 = scmp.eq.s32.totalorder %s36, 0
      %p256 = por %p254, %p255
      %p257 = scmp.ne.s32.totalorder %s245, %s246
      %p258 = scmp.eq.s32.totalorder %s37, 1
      %p259 = por %p257, %p258
      %p261 = scmp.ne.s32.totalorder %s246, %s260
      %p262 = scmp.eq.s32.totalorder %s37, 0
      %p263 = por %p261, %p262
      %s264 = ssub.s32 %s31, %s38
      %p265 = scmp.eq.s32.totalorder %s264, 0
      %s267 = sadd.s32 %s266, 1
      %s268 = scalar_select %p265, %s266, %s267
      %p271 = pneg %p265
      %p272 = scmp.eq.s32.totalorder %s31, 1
      %p273 = por %p271, %p272
      %p274 = scmp.ne.s32.totalorder %s266, %s269
      %p275 = scmp.eq.s32.totalorder %s31, 0
      %p276 = por %p274, %p275
      %p277 = scmp.ne.s32.totalorder %s266, %s269
      %p278 = scmp.eq.s32.totalorder %s36, 1
      %p279 = por %p277, %p278
      %p280 = scmp.ne.s32.totalorder %s269, %s270
      %p281 = scmp.eq.s32.totalorder %s36, 0
      %p282 = por %p280, %p281
      %p283 = scmp.ne.s32.totalorder %s269, %s270
      %p284 = scmp.eq.s32.totalorder %s37, 1
      %p285 = por %p283, %p284
      %p287 = scmp.ne.s32.totalorder %s270, %s286
      %p288 = scmp.eq.s32.totalorder %s37, 0
      %p289 = por %p287, %p288
      %s290 = ssub.s32 %s31, %s38
      %p291 = scmp.eq.s32.totalorder %s290, 0
      %s293 = sadd.s32 %s292, 1
      %s294 = scalar_select %p291, %s292, %s293
      %p297 = pneg %p291
      %p298 = scmp.eq.s32.totalorder %s31, 1
      %p299 = por %p297, %p298
      %p300 = scmp.ne.s32.totalorder %s292, %s295
      %p301 = scmp.eq.s32.totalorder %s31, 0
      %p302 = por %p300, %p301
      %p303 = scmp.ne.s32.totalorder %s292, %s295
      %p304 = scmp.eq.s32.totalorder %s36, 1
      %p305 = por %p303, %p304
      %p306 = scmp.ne.s32.totalorder %s295, %s296
      %p307 = scmp.eq.s32.totalorder %s36, 0
      %p308 = por %p306, %p307
      %p309 = scmp.ne.s32.totalorder %s295, %s296
      %p310 = scmp.eq.s32.totalorder %s37, 1
      %p311 = por %p309, %p310
      %p313 = scmp.ne.s32.totalorder %s296, %s312
      %p314 = scmp.eq.s32.totalorder %s37, 0
      %p315 = por %p313, %p314
      %p316 = scmp.le.s32.totalorder 1, %s31
      %p317 = scmp.lt.s32.totalorder %s31, 3
      %p318 = pnand %p316, %p317
      %p319 = pneg %p318
      // Predicated region
      $region9: #{tpu_custom_call.1} parent=5 // pred_check
        _
      $region10: #{tpu_custom_call.1} parent=5 // pred_check_branch
        %321 = sbr.rel (%p318) target = $region12
      $region11: #{tpu_custom_call.1} parent=5 // pred_region
        %s322 = ssub.s32 %s31, 1
        // Predicated region
        $region13: #{tpu_custom_call.1} parent=11 // pred_check
          %p323 = pneg %p130
        $region14: #{tpu_custom_call.1} parent=11 // pred_check_branch
          %325 = sbr.rel (%p323) target = $region16
        $region15: #{tpu_custom_call.1} parent=11 // pred_region
          %s327 = ssub.s32 512, 512
          %328 = vsyncadd [#allocation10], %s327
          %s329 = sshll.u32 [#allocation11], 4
          %s330 = int_to_ptr.vmem [resolvable:$true] %s329
          %335 = dma.hbm_to_vmem [thread:$0]  %s3, 512, %s330, [#allocation10], 256, 256, 16
        $region16: #{tpu_custom_call.1} parent=11 // pred_fallthru
          _
        // Predicated region
        $region17: #{tpu_custom_call.1} parent=11 // pred_check
          %p336 = pneg %p151
        $region18: #{tpu_custom_call.1} parent=11 // pred_check_branch
          %338 = sbr.rel (%p336) target = $region20
        $region19: #{tpu_custom_call.1} parent=11 // pred_region
          _
        $region20: #{tpu_custom_call.1} parent=11 // pred_fallthru
          _
        // Predicated region
        $region21: #{tpu_custom_call.1} parent=11 // pred_check
          %p339 = pneg %p172
        $region22: #{tpu_custom_call.1} parent=11 // pred_check_branch
          %341 = sbr.rel (%p339) target = $region24
        $region23: #{tpu_custom_call.1} parent=11 // pred_region
          _
        $region24: #{tpu_custom_call.1} parent=11 // pred_fallthru
          _
        // Predicated region
        $region25: #{tpu_custom_call.1} parent=11 // pred_check
          %p342 = pneg %p193
        $region26: #{tpu_custom_call.1} parent=11 // pred_check_branch
          %344 = sbr.rel (%p342) target = $region28
        $region27: #{tpu_custom_call.1} parent=11 // pred_region
          %s346 = ssub.s32 128, 128
          %347 = vsyncadd [#allocation13], %s346
          %s349 = sshll.u32 [#allocation12], 4
          %s350 = int_to_ptr.vmem [resolvable:$true] %s349
          %352 = dma.hbm_to_vmem [thread:$0]  %s6, 128, %s350, [#allocation13]
        $region28: #{tpu_custom_call.1} parent=11 // pred_fallthru
          _
        // Predicated region
        $region29: #{tpu_custom_call.1} parent=11 // pred_check
          %p353 = pneg %p214
        $region30: #{tpu_custom_call.1} parent=11 // pred_check_branch
          %355 = sbr.rel (%p353) target = $region32
        $region31: #{tpu_custom_call.1} parent=11 // pred_region
          %s357 = ssub.s32 384, 384
          %358 = vsyncadd [#allocation13], %s357
          %s359 = sshll.u32 [#allocation14], 4
          %s360 = int_to_ptr.vmem [resolvable:$true] %s359
          %365 = dma.hbm_to_vmem [thread:$0]  %s7, 384, %s360, [#allocation13], 128, 128, 8
        $region32: #{tpu_custom_call.1} parent=11 // pred_fallthru
          _
        // Predicated region
        $region33: #{tpu_custom_call.1} parent=11 // pred_check
          %p366 = pneg %p235
        $region34: #{tpu_custom_call.1} parent=11 // pred_check_branch
          %368 = sbr.rel (%p366) target = $region36
        $region35: #{tpu_custom_call.1} parent=11 // pred_region
          _
        $region36: #{tpu_custom_call.1} parent=11 // pred_fallthru
          _
        // Predicated region
        $region37: #{tpu_custom_call.1} parent=11 // pred_check
          %p369 = pneg %p256
        $region38: #{tpu_custom_call.1} parent=11 // pred_check_branch
          %371 = sbr.rel (%p369) target = $region40
        $region39: #{tpu_custom_call.1} parent=11 // pred_region
          _
        $region40: #{tpu_custom_call.1} parent=11 // pred_fallthru
          _
      $region12: #{tpu_custom_call.1} parent=5 // pred_fallthru
        _
      %p372 = scmp.lt.s32.totalorder %s31, 2
      // Predicated region
      $region41: #{tpu_custom_call.1} parent=5 // pred_check
        %p373 = pneg %p372
      $region42: #{tpu_custom_call.1} parent=5 // pred_check_branch
        %375 = sbr.rel (%p373) target = $region44
      $region43: #{tpu_custom_call.1} parent=5 // pred_region
        // Predicated region
        $region45: #{tpu_custom_call.1} parent=43 // pred_check
          %p376 = pneg %p51
        $region46: #{tpu_custom_call.1} parent=43 // pred_check_branch
          %378 = sbr.rel (%p376) target = $region48
        $region47: #{tpu_custom_call.1} parent=43 // pred_region
          %s379 = sand.u32 %s41, 1
          %s380 = scalar_lea.sflag [#allocation7], %s379
          %s381 = sand.u32 %s41, 1
          %s382 = smul.addr %s381, 8
          %s383 = scalar_lea.vmem [#allocation6], %s382
          %s385 = ssub.s32 128, 128
          %386 = vsyncadd %s380, %s385
          %s387 = smul.addr %s31, 2
          %s388 = smul.addr %s387, 64
          %s389 = scalar_lea.hbm %s0, %s388
          %s391 = sshll.u32 %s383, 4
          %s392 = int_to_ptr.vmem [resolvable:$true] %s391
          %394 = dma.hbm_to_vmem [thread:$0]  %s389, 128, %s392, %s380
        $region48: #{tpu_custom_call.1} parent=43 // pred_fallthru
          _
        // Predicated region
        $region49: #{tpu_custom_call.1} parent=43 // pred_check
          %p395 = pneg %p77
        $region50: #{tpu_custom_call.1} parent=43 // pred_check_branch
          %397 = sbr.rel (%p395) target = $region52
        $region51: #{tpu_custom_call.1} parent=43 // pred_region
          %p398 = scmp.lt.s32.totalorder %s31, 1
          %s399 = scalar_select %p398, %s31, 1
          %s400 = smul.addr %s399, 2
          %s401 = smul.addr %s400, 8
          %s402 = scalar_lea.vmem %s1, %s401
        $region52: #{tpu_custom_call.1} parent=43 // pred_fallthru
          _
        // Predicated region
        $region53: #{tpu_custom_call.1} parent=43 // pred_check
          %p403 = pneg %p103
        $region54: #{tpu_custom_call.1} parent=43 // pred_check_branch
          %405 = sbr.rel (%p403) target = $region56
        $region55: #{tpu_custom_call.1} parent=43 // pred_region
          %s406 = sand.u32 %s31, 1
          %s407 = scalar_lea.sflag [#allocation10], %s406
          %s408 = sand.u32 %s93, 1
          %s409 = smul.addr %s408, 16
          %s410 = scalar_lea.vmem [#allocation9], %s409
          %s412 = ssub.s32 256, 256
          %413 = vsyncadd %s407, %s412
          %s414 = smul.addr %s31, 2
          %s415 = smul.addr %s414, 128
          %s416 = scalar_lea.hbm %s2, %s415
          %s418 = sshll.u32 %s410, 4
          %s419 = int_to_ptr.vmem [resolvable:$true] %s418
          %421 = dma.hbm_to_vmem [thread:$0]  %s416, 256, %s419, %s407
        $region56: #{tpu_custom_call.1} parent=43 // pred_fallthru
          _
      $region44: #{tpu_custom_call.1} parent=5 // pred_fallthru
        _
      %p422 = scmp.le.s32.totalorder 1, %s31
      %p423 = scmp.lt.s32.totalorder %s31, 3
      %p424 = pnand %p422, %p423
      %p425 = pneg %p424
      // Predicated region
      $region57: #{tpu_custom_call.1} parent=5 // pred_check
        _
      $region58: #{tpu_custom_call.1} parent=5 // pred_check_branch
        %427 = sbr.rel (%p424) target = $region60
      $region59: #{tpu_custom_call.1} parent=5 // pred_region
        %s428 = ssub.s32 %s31, 1
        %s429 = sand.u32 %s44, 1
        %s430 = scalar_lea.sflag [#allocation7], %s429
        %s431 = sand.u32 %s44, 1
        %s432 = smul.addr %s431, 8
        %s433 = scalar_lea.vmem [#allocation6], %s432
        // Predicated region
        $region61: #{tpu_custom_call.1} parent=59 // pred_check
          %p434 = pneg %p57
        $region62: #{tpu_custom_call.1} parent=59 // pred_check_branch
          %436 = sbr.rel (%p434) target = $region64
        $region63: #{tpu_custom_call.1} parent=59 // pred_region
          %437 = dma.done %s430, 128
        $region64: #{tpu_custom_call.1} parent=59 // pred_fallthru
          _
        %s438 = sand.u32 %s36, 1
        %s439 = scalar_lea.sflag [#allocation10], %s438
        %s440 = sand.u32 %s96, 1
        %s441 = smul.addr %s440, 16
        %s442 = scalar_lea.vmem [#allocation9], %s441
        // Predicated region
        $region65: #{tpu_custom_call.1} parent=59 // pred_check
          %p443 = pneg %p109
        $region66: #{tpu_custom_call.1} parent=59 // pred_check_branch
          %445 = sbr.rel (%p443) target = $region68
        $region67: #{tpu_custom_call.1} parent=59 // pred_region
          %446 = dma.done %s439, 256
        $region68: #{tpu_custom_call.1} parent=59 // pred_fallthru
          _
        // Predicated region
        $region69: #{tpu_custom_call.1} parent=59 // pred_check
          %p447 = pneg %p130
        $region70: #{tpu_custom_call.1} parent=59 // pred_check_branch
          %449 = sbr.rel (%p447) target = $region72
        $region71: #{tpu_custom_call.1} parent=59 // pred_region
          %450 = dma.done [#allocation10], 512
        $region72: #{tpu_custom_call.1} parent=59 // pred_fallthru
          _
        // Predicated region
        $region73: #{tpu_custom_call.1} parent=59 // pred_check
          %p451 = pneg %p193
        $region74: #{tpu_custom_call.1} parent=59 // pred_check_branch
          %453 = sbr.rel (%p451) target = $region76
        $region75: #{tpu_custom_call.1} parent=59 // pred_region
          %454 = dma.done [#allocation13], 128
        $region76: #{tpu_custom_call.1} parent=59 // pred_fallthru
          _
        // Predicated region
        $region77: #{tpu_custom_call.1} parent=59 // pred_check
          %p455 = pneg %p214
        $region78: #{tpu_custom_call.1} parent=59 // pred_check_branch
          %457 = sbr.rel (%p455) target = $region80
        $region79: #{tpu_custom_call.1} parent=59 // pred_region
          %458 = dma.done [#allocation13], 384
        $region80: #{tpu_custom_call.1} parent=59 // pred_fallthru
          _
        %s459 = sand.u32 %s44, 1
        %s460 = scalar_lea.sflag [#allocation7], %s459
        %s461 = sand.u32 %s44, 1
        %s462 = smul.addr %s461, 8
        %s463 = scalar_lea.vmem [#allocation6], %s462
        %p464 = pneg %p57
        %p465 = pneg %p54
        %p466 = scmp.lt.s32.totalorder %s36, 1
        %s467 = scalar_select %p466, %s36, 1
        %s468 = smul.addr %s467, 2
        %s469 = smul.addr %s468, 8
        %s470 = scalar_lea.vmem %s1, %s469
        %p471 = pneg %p83
        %p472 = pneg %p80
        %s473 = sand.u32 %s36, 1
        %s474 = scalar_lea.sflag [#allocation10], %s473
        %s475 = sand.u32 %s96, 1
        %s476 = smul.addr %s475, 16
        %s477 = scalar_lea.vmem [#allocation9], %s476
        %p478 = pneg %p109
        %p479 = pneg %p106
        %p480 = pneg %p130
        %p481 = pneg %p127
        %p482 = pneg %p151
        %p483 = pneg %p148
        %p484 = pneg %p172
        %p485 = pneg %p169
        %p486 = pneg %p193
        %p487 = pneg %p190
        %p488 = pneg %p214
        %p489 = pneg %p211
        %p490 = pneg %p235
        %p491 = pneg %p232
        %p492 = pneg %p256
        %p493 = pneg %p253
        %p494 = pneg %p282
        %p495 = pneg %p279
        %s496 = sand.u32 %s269, 1
        %s497 = scalar_lea.sflag [#allocation8], %s496
        %s498 = sand.u32 %s269, 1
        %s499 = smul.addr %s498, 16
        %s500 = scalar_lea.vmem [#allocation15], %s499
        %p501 = pneg %p308
        %p502 = pneg %p305
        %s503 = sand.u32 %s295, 1
        %s504 = scalar_lea.sflag [#allocation17], %s503
        %s505 = sand.u32 %s295, 1
        %s506 = smul.addr %s505, 16
        %s507 = scalar_lea.vmem [#allocation16], %s506
        %p508 = scmp.lt.s32.totalorder %s36, 1
        %s509 = scalar_select %p508, %s36, 1
        %s510 = smul.addr %s509, 2
        %s511 = smul.addr %s510, 8
        %s512 = scalar_lea.vmem %s1, %s511
        %v514 = vld [vmem:[%s433] sm:$0xff]
        %v515 = vld [vmem:[%s512] sm:$0xff]
        %v516 = vld [vmem:[%s512 + $0x8] sm:$0xff]
        %517 = vst [vmem:[#allocation2] sm:$0xff] 0.0
        %518 = vst [vmem:[#allocation2 + $0x20] sm:$0xff] 0.0
        %519 = vst [vmem:[#allocation2 + $0x18] sm:$0xff] 0.0
        %520 = vst [vmem:[#allocation2 + $0x38] sm:$0xff] 0.0
        %521 = vst [vmem:[#allocation2 + $0x28] sm:$0xf0] 0.0
        %522 = vst [vmem:[#allocation2 + $0x30] sm:$0xf0] 0.0
        %v524 = vcombine.high %v514, %v514
        %526 = vst [vmem:[#allocation2 + $0x8] sm:$0xf] %v514
        %527 = vst [vmem:[#allocation2 + $0x10] sm:$0xf] %v524
        %v530 = vrot.slane %v515, 4
        %v531 = vrot.slane %v516, 4
        %534 = vst [vmem:[#allocation2 + $0x8] sm:$0xf0] %v530
        %535 = vst [vmem:[#allocation2 + $0x10] sm:$0xf0] %v531
        %536 = vst [vmem:[#allocation2 + $0x28] sm:$0xf] %v530
        %537 = vst [vmem:[#allocation2 + $0x30] sm:$0xf] %v531
        %v538 = vld [vmem:[#allocation2] sm:$0xff]
        %v539 = vld [vmem:[#allocation2 + $0x8] sm:$0xff]
        %v540 = vld [vmem:[#allocation2 + $0x10] sm:$0xff]
        %v541 = vld [vmem:[#allocation2 + $0x20] sm:$0xff]
        %v542 = vld [vmem:[#allocation2 + $0x28] sm:$0xff]
        %v543 = vld [vmem:[#allocation2 + $0x30] sm:$0xff]
        %v544 = vld [vmem:[#allocation11] ss:$8 sm:$0x3]
        %v546 = vlaneseq
        %v547 = vshrl.u32 %v546, 7
        %v548 = vsub.s32 0, %v547
        %v549 = vrot.slane %v544, %v548
        %v550 = vlaneseq
        %v551 = vshrl.u32 %v550, 7
        %v552 = vsub.s32 1, %v551
        %v553 = vrot.slane %v544, %v552
        %554 = vrot.lane.b32.xlu0 %v549, 111
        %v555 = vpop.permute.xlu0 %554
        %556 = vrot.lane.b32.xlu0 %v553, 111
        %v557 = vpop.permute.xlu0 %556
        %vm558 = vcmask 908288
        %v559 = vsel %vm558, %v555, %v557
        %v563 = vmul.f32 %v538, %v555
        %v564 = vmul.f32 %v539, %v559
        %v565 = vmul.f32 %v540, %v557
        %v566 = vmul.f32 %v541, %v555
        %v567 = vmul.f32 %v542, %v559
        %v568 = vmul.f32 %v543, %v557
        %v569 = vpack.c.bf16 %v566, %v563
        %v570 = vpack.c.bf16 %v567, %v564
        %v571 = vpack.c.bf16 %v568, %v565
        %v575 = vunpack.c.l.b16 %v569
        %v576 = vunpack.c.l.b16 %v570
        %v577 = vunpack.c.l.b16 %v571
        %v578 = vunpack.c.h.b16 %v569
        %v579 = vunpack.c.h.b16 %v570
        %v580 = vunpack.c.h.b16 %v571
        %v581 = vpack.c.b16 %v576, %v575
        %v582 = vpack.c.b16 %v577, %v577
        %v583 = vpack.c.b16 %v579, %v578
        %v584 = vpack.c.b16 %v580, %v580
        %585 = vrot.lane.b32.xlu0 %v581, 17
        %v586 = vpop.permute.xlu0 %585
        %587 = vrot.lane.b32.xlu0 %v582, 17
        %v588 = vpop.permute.xlu0 %587
        %589 = vrot.lane.b32.xlu0 %v583, 17
        %v590 = vpop.permute.xlu0 %589
        %591 = vrot.lane.b32.xlu0 %v584, 17
        %v592 = vpop.permute.xlu0 %591
        %v593 = vrot.slane %v586, 4
        %v594 = vrot.slane %v588, 4
        %v595 = vrot.slane %v590, 4
        %v596 = vrot.slane %v592, 4
        %vm597 = vcmask 1043456
        %v598 = vsel %vm597, %v593, %v594
        %vm599 = vcmask 138240
        %v600 = vsel %vm599, %v586, %v598
        %v601 = vsel %vm597, %v595, %v596
        %v602 = vsel %vm599, %v590, %v601
        %605 = vst [vmem:[#allocation4] sm:$0xff] %v600
        %606 = vst [vmem:[#allocation4 + $0x8] sm:$0xff] %v602
        %v607 = vld [vmem:[#allocation2] sm:$0xff]
        %v608 = vld [vmem:[#allocation2 + $0x8] sm:$0xff]
        %v609 = vld [vmem:[#allocation2 + $0x10] sm:$0xff]
        %v610 = vld [vmem:[#allocation2 + $0x20] sm:$0xff]
        %v611 = vld [vmem:[#allocation2 + $0x28] sm:$0xff]
        %v612 = vld [vmem:[#allocation2 + $0x30] sm:$0xff]
        %v613 = vpack.c.bf16 %v610, %v607
        %v614 = vpack.c.bf16 %v611, %v608
        %v615 = vpack.c.bf16 %v612, %v609
        %v619 = vunpack.c.l.b16 %v613
        %v620 = vunpack.c.l.b16 %v614
        %v621 = vunpack.c.l.b16 %v615
        %v622 = vunpack.c.h.b16 %v613
        %v623 = vunpack.c.h.b16 %v614
        %v624 = vunpack.c.h.b16 %v615
        %v625 = vpack.c.b16 %v620, %v619
        %v626 = vpack.c.b16 %v621, %v621
        %v627 = vpack.c.b16 %v623, %v622
        %v628 = vpack.c.b16 %v624, %v624
        %629 = vrot.lane.b32.xlu0 %v625, 16
        %v630 = vpop.permute.xlu0 %629
        %631 = vrot.lane.b32.xlu0 %v626, 16
        %v632 = vpop.permute.xlu0 %631
        %633 = vrot.lane.b32.xlu0 %v627, 16
        %v634 = vpop.permute.xlu0 %633
        %635 = vrot.lane.b32.xlu0 %v628, 16
        %v636 = vpop.permute.xlu0 %635
        %v637 = vrot.slane %v630, 4
        %v638 = vrot.slane %v632, 4
        %v639 = vrot.slane %v634, 4
        %v640 = vrot.slane %v636, 4
        %v641 = vsel %vm597, %v637, %v638
        %vm642 = vcmask 130048
        %v643 = vsel %vm642, %v630, %v641
        %v644 = vsel %vm597, %v639, %v640
        %v645 = vsel %vm642, %v634, %v644
        %648 = vst [vmem:[#allocation4 + $0x10] sm:$0xff] %v643
        %649 = vst [vmem:[#allocation4 + $0x18] sm:$0xff] %v645
        %v650 = vld [vmem:[#allocation2] sm:$0xff]
        %v651 = vld [vmem:[#allocation2 + $0x8] sm:$0xff]
        %v652 = vld [vmem:[#allocation2 + $0x10] sm:$0xff]
        %v653 = vld [vmem:[#allocation2 + $0x20] sm:$0xff]
        %v654 = vld [vmem:[#allocation2 + $0x28] sm:$0xff]
        %v655 = vld [vmem:[#allocation2 + $0x30] sm:$0xff]
        %s656 = scalar_lea.vmem [#allocation11], 2
        %v657 = vld [vmem:[%s656] ss:$8 sm:$0x3]
        %v659 = vlaneseq
        %v660 = vshrl.u32 %v659, 7
        %v661 = vsub.s32 0, %v660
        %v662 = vrot.slane %v657, %v661
        %v663 = vlaneseq
        %v664 = vshrl.u32 %v663, 7
        %v665 = vsub.s32 1, %v664
        %v666 = vrot.slane %v657, %v665
        %667 = vrot.lane.b32.xlu0 %v662, 113
        %v668 = vpop.permute.xlu0 %667
        %669 = vrot.lane.b32.xlu0 %v666, 113
        %v670 = vpop.permute.xlu0 %669
        %vm671 = vcmask 924672
        %v672 = vsel %vm671, %v668, %v670
        %v676 = vmul.f32 %v650, %v668
        %v677 = vmul.f32 %v651, %v672
        %v678 = vmul.f32 %v652, %v670
        %v679 = vmul.f32 %v653, %v668
        %v680 = vmul.f32 %v654, %v672
        %v681 = vmul.f32 %v655, %v670
        %v682 = vpack.c.bf16 %v679, %v676
        %v683 = vpack.c.bf16 %v680, %v677
        %v684 = vpack.c.bf16 %v681, %v678
        %v688 = vunpack.c.l.b16 %v682
        %v689 = vunpack.c.l.b16 %v683
        %v690 = vunpack.c.l.b16 %v684
        %v691 = vunpack.c.h.b16 %v682
        %v692 = vunpack.c.h.b16 %v683
        %v693 = vunpack.c.h.b16 %v684
        %v694 = vpack.c.b16 %v689, %v688
        %v695 = vpack.c.b16 %v690, %v690
        %v696 = vpack.c.b16 %v692, %v691
        %v697 = vpack.c.b16 %v693, %v693
        %698 = vrot.lane.b32.xlu0 %v694, 15
        %v699 = vpop.permute.xlu0 %698
        %700 = vrot.lane.b32.xlu0 %v695, 15
        %v701 = vpop.permute.xlu0 %700
        %702 = vrot.lane.b32.xlu0 %v696, 15
        %v703 = vpop.permute.xlu0 %702
        %704 = vrot.lane.b32.xlu0 %v697, 15
        %v705 = vpop.permute.xlu0 %704
        %v706 = vrot.slane %v699, 4
        %v707 = vrot.slane %v701, 4
        %v708 = vrot.slane %v703, 4
        %v709 = vrot.slane %v705, 4
        %v710 = vsel %vm597, %v706, %v707
        %vm711 = vcmask 121856
        %v712 = vsel %vm711, %v699, %v710
        %v713 = vsel %vm597, %v708, %v709
        %v714 = vsel %vm711, %v703, %v713
        %717 = vst [vmem:[#allocation4 + $0x20] sm:$0xff] %v712
        %718 = vst [vmem:[#allocation4 + $0x28] sm:$0xff] %v714
        %v719 = vld [vmem:[#allocation2] sm:$0xff]
        %v720 = vld [vmem:[#allocation2 + $0x8] sm:$0xff]
        %v721 = vld [vmem:[#allocation2 + $0x10] sm:$0xff]
        %v722 = vld [vmem:[#allocation2 + $0x20] sm:$0xff]
        %v723 = vld [vmem:[#allocation2 + $0x28] sm:$0xff]
        %v724 = vld [vmem:[#allocation2 + $0x30] sm:$0xff]
        %s725 = scalar_lea.vmem [#allocation11], 3
        %v726 = vld [vmem:[%s725] ss:$8 sm:$0x3]
        %v728 = vlaneseq
        %v729 = vshrl.u32 %v728, 7
        %v730 = vsub.s32 0, %v729
        %v731 = vrot.slane %v726, %v730
        %v732 = vlaneseq
        %v733 = vshrl.u32 %v732, 7
        %v734 = vsub.s32 1, %v733
        %v735 = vrot.slane %v726, %v734
        %736 = vrot.lane.b32.xlu0 %v731, 127
        %v737 = vpop.permute.xlu0 %736
        %738 = vrot.lane.b32.xlu0 %v735, 127
        %v739 = vpop.permute.xlu0 %738
        %vm740 = vcmask 1039360
        %v741 = vsel %vm740, %v737, %v739
        %v745 = vmul.f32 %v719, %v737
        %v746 = vmul.f32 %v720, %v741
        %v747 = vmul.f32 %v721, %v739
        %v748 = vmul.f32 %v722, %v737
        %v749 = vmul.f32 %v723, %v741
        %v750 = vmul.f32 %v724, %v739
        %v751 = vpack.c.bf16 %v748, %v745
        %v752 = vpack.c.bf16 %v749, %v746
        %v753 = vpack.c.bf16 %v750, %v747
        %v757 = vunpack.c.l.b16 %v751
        %v758 = vunpack.c.l.b16 %v752
        %v759 = vunpack.c.l.b16 %v753
        %v760 = vunpack.c.h.b16 %v751
        %v761 = vunpack.c.h.b16 %v752
        %v762 = vunpack.c.h.b16 %v753
        %v763 = vpack.c.b16 %v758, %v757
        %v764 = vpack.c.b16 %v759, %v759
        %v765 = vpack.c.b16 %v761, %v760
        %v766 = vpack.c.b16 %v762, %v762
        %767 = vrot.lane.b32.xlu0 %v763, 1
        %v768 = vpop.permute.xlu0 %767
        %769 = vrot.lane.b32.xlu0 %v764, 1
        %v770 = vpop.permute.xlu0 %769
        %771 = vrot.lane.b32.xlu0 %v765, 1
        %v772 = vpop.permute.xlu0 %771
        %773 = vrot.lane.b32.xlu0 %v766, 1
        %v774 = vpop.permute.xlu0 %773
        %v775 = vrot.slane %v768, 4
        %v776 = vrot.slane %v770, 4
        %v777 = vrot.slane %v772, 4
        %v778 = vrot.slane %v774, 4
        %v779 = vsel %vm597, %v775, %v776
        %vm780 = vcmask 7168
        %v781 = vsel %vm780, %v768, %v779
        %v782 = vsel %vm597, %v777, %v778
        %v783 = vsel %vm780, %v772, %v782
        %786 = vst [vmem:[#allocation4 + $0x30] sm:$0xff] %v781
        %787 = vst [vmem:[#allocation4 + $0x38] sm:$0xff] %v783
        %v788 = vld [vmem:[#allocation2 + $0x8] sm:$0xff]
        %v789 = vld [vmem:[#allocation2 + $0x10] sm:$0xff]
        %v790 = vld [vmem:[#allocation2 + $0x28] sm:$0xff]
        %v791 = vld [vmem:[#allocation2 + $0x30] sm:$0xff]
        %v792 = vpack.c.bf16 %v790, %v788
        %v793 = vpack.c.bf16 %v791, %v789
        %v796 = vunpack.c.l.b16 %v792
        %v797 = vunpack.c.l.b16 %v793
        %v798 = vunpack.c.h.b16 %v792
        %v799 = vunpack.c.h.b16 %v793
        %v800 = vpack.c.b16 %v797, %v796
        %v801 = vpack.c.b16 %v799, %v798
        %804 = vst [vmem:[#allocation4 + $0x40] sm:$0xff] %v800
        %805 = vst [vmem:[#allocation4 + $0x48] sm:$0xff] %v801
        %v806 = vld [vmem:[#allocation2 + $0x8] sm:$0xff]
        %v807 = vld [vmem:[#allocation2 + $0x10] sm:$0xff]
        %v808 = vld [vmem:[#allocation2 + $0x18] sm:$0xff]
        %v809 = vld [vmem:[#allocation2 + $0x28] sm:$0xff]
        %v810 = vld [vmem:[#allocation2 + $0x30] sm:$0xff]
        %v811 = vld [vmem:[#allocation2 + $0x38] sm:$0xff]
        %s812 = scalar_lea.vmem [#allocation11], 5
        %v813 = vld [vmem:[%s812] ss:$8 sm:$0x3]
        %v815 = vlaneseq
        %v816 = vshrl.u32 %v815, 7
        %v817 = vsub.s32 0, %v816
        %v818 = vrot.slane %v813, %v817
        %v819 = vlaneseq
        %v820 = vshrl.u32 %v819, 7
        %v821 = vsub.s32 1, %v820
        %v822 = vrot.slane %v813, %v821
        %823 = vrot.lane.b32.xlu0 %v818, 1
        %v824 = vpop.permute.xlu0 %823
        %825 = vrot.lane.b32.xlu0 %v822, 1
        %v826 = vpop.permute.xlu0 %825
        %vm827 = vcmask 7168
        %v828 = vsel %vm827, %v824, %v826
        %v832 = vmul.f32 %v806, %v824
        %v833 = vmul.f32 %v807, %v828
        %v834 = vmul.f32 %v808, %v826
        %v835 = vmul.f32 %v809, %v824
        %v836 = vmul.f32 %v810, %v828
        %v837 = vmul.f32 %v811, %v826
        %v838 = vpack.c.bf16 %v835, %v832
        %v839 = vpack.c.bf16 %v836, %v833
        %v840 = vpack.c.bf16 %v837, %v834
        %v844 = vunpack.c.l.b16 %v838
        %v845 = vunpack.c.l.b16 %v839
        %v846 = vunpack.c.l.b16 %v840
        %v847 = vunpack.c.h.b16 %v838
        %v848 = vunpack.c.h.b16 %v839
        %v849 = vunpack.c.h.b16 %v840
        %v850 = vpack.c.b16 %v845, %v844
        %v851 = vpack.c.b16 %v846, %v846
        %v852 = vpack.c.b16 %v848, %v847
        %v853 = vpack.c.b16 %v849, %v849
        %854 = vrot.lane.b32.xlu0 %v850, 127
        %v855 = vpop.permute.xlu0 %854
        %856 = vrot.lane.b32.xlu0 %v851, 127
        %v857 = vpop.permute.xlu0 %856
        %858 = vrot.lane.b32.xlu0 %v852, 127
        %v859 = vpop.permute.xlu0 %858
        %860 = vrot.lane.b32.xlu0 %v853, 127
        %v861 = vpop.permute.xlu0 %860
        %v862 = vrot.slane %v855, 4
        %v863 = vrot.slane %v857, 4
        %v864 = vrot.slane %v859, 4
        %v865 = vrot.slane %v861, 4
        %v866 = vsel %vm597, %v862, %v863
        %vm867 = vcmask 1039360
        %v868 = vsel %vm867, %v855, %v866
        %v869 = vsel %vm597, %v864, %v865
        %v870 = vsel %vm867, %v859, %v869
        %873 = vst [vmem:[#allocation4 + $0x50] sm:$0xff] %v868
        %874 = vst [vmem:[#allocation4 + $0x58] sm:$0xff] %v870
        %v875 = vld [vmem:[#allocation2 + $0x8] sm:$0xff]
        %v876 = vld [vmem:[#allocation2 + $0x10] sm:$0xff]
        %v877 = vld [vmem:[#allocation2 + $0x18] sm:$0xff]
        %v878 = vld [vmem:[#allocation2 + $0x28] sm:$0xff]
        %v879 = vld [vmem:[#allocation2 + $0x30] sm:$0xff]
        %v880 = vld [vmem:[#allocation2 + $0x38] sm:$0xff]
        %s881 = scalar_lea.vmem [#allocation11], 6
        %v882 = vld [vmem:[%s881] ss:$8 sm:$0x3]
        %v884 = vlaneseq
        %v885 = vshrl.u32 %v884, 7
        %v886 = vsub.s32 0, %v885
        %v887 = vrot.slane %v882, %v886
        %v888 = vlaneseq
        %v889 = vshrl.u32 %v888, 7
        %v890 = vsub.s32 1, %v889
        %v891 = vrot.slane %v882, %v890
        %892 = vrot.lane.b32.xlu0 %v887, 15
        %v893 = vpop.permute.xlu0 %892
        %894 = vrot.lane.b32.xlu0 %v891, 15
        %v895 = vpop.permute.xlu0 %894
        %vm896 = vcmask 121856
        %v897 = vsel %vm896, %v893, %v895
        %v901 = vmul.f32 %v875, %v893
        %v902 = vmul.f32 %v876, %v897
        %v903 = vmul.f32 %v877, %v895
        %v904 = vmul.f32 %v878, %v893
        %v905 = vmul.f32 %v879, %v897
        %v906 = vmul.f32 %v880, %v895
        %v907 = vpack.c.bf16 %v904, %v901
        %v908 = vpack.c.bf16 %v905, %v902
        %v909 = vpack.c.bf16 %v906, %v903
        %v913 = vunpack.c.l.b16 %v907
        %v914 = vunpack.c.l.b16 %v908
        %v915 = vunpack.c.l.b16 %v909
        %v916 = vunpack.c.h.b16 %v907
        %v917 = vunpack.c.h.b16 %v908
        %v918 = vunpack.c.h.b16 %v909
        %v919 = vpack.c.b16 %v914, %v913
        %v920 = vpack.c.b16 %v915, %v915
        %v921 = vpack.c.b16 %v917, %v916
        %v922 = vpack.c.b16 %v918, %v918
        %923 = vrot.lane.b32.xlu0 %v919, 113
        %v924 = vpop.permute.xlu0 %923
        %925 = vrot.lane.b32.xlu0 %v920, 113
        %v926 = vpop.permute.xlu0 %925
        %927 = vrot.lane.b32.xlu0 %v921, 113
        %v928 = vpop.permute.xlu0 %927
        %929 = vrot.lane.b32.xlu0 %v922, 113
        %v930 = vpop.permute.xlu0 %929
        %v931 = vrot.slane %v924, 4
        %v932 = vrot.slane %v926, 4
        %v933 = vrot.slane %v928, 4
        %v934 = vrot.slane %v930, 4
        %v935 = vsel %vm597, %v931, %v932
        %vm936 = vcmask 924672
        %v937 = vsel %vm936, %v924, %v935
        %v938 = vsel %vm597, %v933, %v934
        %v939 = vsel %vm936, %v928, %v938
        %942 = vst [vmem:[#allocation4 + $0x60] sm:$0xff] %v937
        %943 = vst [vmem:[#allocation4 + $0x68] sm:$0xff] %v939
        %v944 = vld [vmem:[#allocation2 + $0x8] sm:$0xff]
        %v945 = vld [vmem:[#allocation2 + $0x10] sm:$0xff]
        %v946 = vld [vmem:[#allocation2 + $0x18] sm:$0xff]
        %v947 = vld [vmem:[#allocation2 + $0x28] sm:$0xff]
        %v948 = vld [vmem:[#allocation2 + $0x30] sm:$0xff]
        %v949 = vld [vmem:[#allocation2 + $0x38] sm:$0xff]
        %v950 = vpack.c.bf16 %v947, %v944
        %v951 = vpack.c.bf16 %v948, %v945
        %v952 = vpack.c.bf16 %v949, %v946
        %v956 = vunpack.c.l.b16 %v950
        %v957 = vunpack.c.l.b16 %v951
        %v958 = vunpack.c.l.b16 %v952
        %v959 = vunpack.c.h.b16 %v950
        %v960 = vunpack.c.h.b16 %v951
        %v961 = vunpack.c.h.b16 %v952
        %v962 = vpack.c.b16 %v957, %v956
        %v963 = vpack.c.b16 %v958, %v958
        %v964 = vpack.c.b16 %v960, %v959
        %v965 = vpack.c.b16 %v961, %v961
        %966 = vrot.lane.b32.xlu0 %v962, 112
        %v967 = vpop.permute.xlu0 %966
        %968 = vrot.lane.b32.xlu0 %v963, 112
        %v969 = vpop.permute.xlu0 %968
        %970 = vrot.lane.b32.xlu0 %v964, 112
        %v971 = vpop.permute.xlu0 %970
        %972 = vrot.lane.b32.xlu0 %v965, 112
        %v973 = vpop.permute.xlu0 %972
        %v974 = vrot.slane %v967, 4
        %v975 = vrot.slane %v969, 4
        %v976 = vrot.slane %v971, 4
        %v977 = vrot.slane %v973, 4
        %v978 = vsel %vm597, %v974, %v975
        %vm979 = vcmask 916480
        %v980 = vsel %vm979, %v967, %v978
        %v981 = vsel %vm597, %v976, %v977
        %v982 = vsel %vm979, %v971, %v981
        %985 = vst [vmem:[#allocation4 + $0x70] sm:$0xff] %v980
        %986 = vst [vmem:[#allocation4 + $0x78] sm:$0xff] %v982
        %v987 = vld [vmem:[#allocation2 + $0x8] sm:$0xff]
        %v988 = vld [vmem:[#allocation2 + $0x10] sm:$0xff]
        %v989 = vld [vmem:[#allocation2 + $0x18] sm:$0xff]
        %v990 = vld [vmem:[#allocation2 + $0x28] sm:$0xff]
        %v991 = vld [vmem:[#allocation2 + $0x30] sm:$0xff]
        %v992 = vld [vmem:[#allocation2 + $0x38] sm:$0xff]
        %s993 = scalar_lea.vmem [#allocation11], 16
        %v994 = vld [vmem:[%s993] ss:$8 sm:$0x3]
        %v996 = vlaneseq
        %v997 = vshrl.u32 %v996, 7
        %v998 = vsub.s32 0, %v997
        %v999 = vrot.slane %v994, %v998
        %v1000 = vlaneseq
        %v1001 = vshrl.u32 %v1000, 7
        %v1002 = vsub.s32 1, %v1001
        %v1003 = vrot.slane %v994, %v1002
        %1004 = vrot.lane.b32.xlu0 %v999, 17
        %v1005 = vpop.permute.xlu0 %1004
        %1006 = vrot.lane.b32.xlu0 %v1003, 17
        %v1007 = vpop.permute.xlu0 %1006
        %vm1008 = vcmask 138240
        %v1009 = vsel %vm1008, %v1005, %v1007
        %v1013 = vmul.f32 %v987, %v1005
        %v1014 = vmul.f32 %v988, %v1009
        %v1015 = vmul.f32 %v989, %v1007
        %v1016 = vmul.f32 %v990, %v1005
        %v1017 = vmul.f32 %v991, %v1009
        %v1018 = vmul.f32 %v992, %v1007
        %v1019 = vpack.c.bf16 %v1016, %v1013
        %v1020 = vpack.c.bf16 %v1017, %v1014
        %v1021 = vpack.c.bf16 %v1018, %v1015
        %v1025 = vunpack.c.l.b16 %v1019
        %v1026 = vunpack.c.l.b16 %v1020
        %v1027 = vunpack.c.l.b16 %v1021
        %v1028 = vunpack.c.h.b16 %v1019
        %v1029 = vunpack.c.h.b16 %v1020
        %v1030 = vunpack.c.h.b16 %v1021
        %v1031 = vpack.c.b16 %v1026, %v1025
        %v1032 = vpack.c.b16 %v1027, %v1027
        %v1033 = vpack.c.b16 %v1029, %v1028
        %v1034 = vpack.c.b16 %v1030, %v1030
        %1035 = vrot.lane.b32.xlu0 %v1031, 111
        %v1036 = vpop.permute.xlu0 %1035
        %1037 = vrot.lane.b32.xlu0 %v1032, 111
        %v1038 = vpop.permute.xlu0 %1037
        %1039 = vrot.lane.b32.xlu0 %v1033, 111
        %v1040 = vpop.permute.xlu0 %1039
        %1041 = vrot.lane.b32.xlu0 %v1034, 111
        %v1042 = vpop.permute.xlu0 %1041
        %v1043 = vrot.slane %v1036, 4
        %v1044 = vrot.slane %v1038, 4
        %v1045 = vrot.slane %v1040, 4
        %v1046 = vrot.slane %v1042, 4
        %v1047 = vsel %vm597, %v1043, %v1044
        %vm1048 = vcmask 908288
        %v1049 = vsel %vm1048, %v1036, %v1047
        %v1050 = vsel %vm597, %v1045, %v1046
        %v1051 = vsel %vm1048, %v1040, %v1050
        %1054 = vst [vmem:[#allocation4 + $0x80] sm:$0xff] %v1049
        %1055 = vst [vmem:[#allocation4 + $0x88] sm:$0xff] %v1051
        %v1056 = vld [vmem:[%s4] sm:$0xff]
        %v1057 = vld [vmem:[%s4 + $0x8] sm:$0xff]
        %v1058 = vld [vmem:[%s4 + $0x10] sm:$0xff]
        %v1059 = vld [vmem:[#allocation4] sm:$0xff]
        %v1060 = vld [vmem:[#allocation4 + $0x8] sm:$0xff]
        %v1061 = vld [vmem:[#allocation4 + $0x10] sm:$0xff]
        %v1062 = vld [vmem:[#allocation4 + $0x18] sm:$0xff]
        %v1063 = vld [vmem:[#allocation4 + $0x20] sm:$0xff]
        %v1064 = vld [vmem:[#allocation4 + $0x28] sm:$0xff]
        %v1065 = vld [vmem:[#allocation4 + $0x30] sm:$0xff]
        %v1066 = vld [vmem:[#allocation4 + $0x38] sm:$0xff]
        %v1067 = vld [vmem:[#allocation4 + $0x40] sm:$0xff]
        %v1068 = vld [vmem:[#allocation4 + $0x48] sm:$0xff]
        %v1069 = vld [vmem:[#allocation4 + $0x50] sm:$0xff]
        %v1070 = vld [vmem:[#allocation4 + $0x58] sm:$0xff]
        %v1071 = vld [vmem:[#allocation4 + $0x60] sm:$0xff]
        %v1072 = vld [vmem:[#allocation4 + $0x68] sm:$0xff]
        %v1073 = vld [vmem:[#allocation4 + $0x70] sm:$0xff]
        %v1074 = vld [vmem:[#allocation4 + $0x78] sm:$0xff]
        %v1075 = vld [vmem:[#allocation4 + $0x80] sm:$0xff]
        %v1076 = vld [vmem:[#allocation4 + $0x88] sm:$0xff]
        %v1077 = vld [vmem:[%s5] sm:$0xff]
        %v1078 = vld [vmem:[%s5 + $0x8] sm:$0xff]
        %v1079 = vld [vmem:[%s5 + $0x10] sm:$0xff]
        %1081 = vset.pattern.permute.xlu0 0
        %1082 = vperm.xlu0 %1081, %v1077
        %v1083 = vpop.permute.xlu0 %1082
        %1086 = vset.pattern.permute.xlu0 0
        %1087 = vperm.xlu0 %1086, %v1078
        %v1088 = vpop.permute.xlu0 %1087
        %1091 = vset.pattern.permute.xlu0 0
        %1092 = vperm.xlu0 %1091, %v1079
        %v1093 = vpop.permute.xlu0 %1092
        %v1098 = vunpack.c.l.b16 %v1056
        %v1099 = vunpack.c.h.b16 %v1056
        %v1100 = vunpack.c.l.b16 %v1057
        %v1101 = vunpack.c.h.b16 %v1057
        %v1102 = vunpack.c.l.b16 %v1058
        %v1103 = vunpack.c.h.b16 %v1058
        %v1104 = vpack.c.b16 %v1100, %v1098
        %v1105 = vpack.c.b16 %v1101, %v1099
        %v1106 = vpack.c.b16 %v1102, %v1102
        %v1107 = vpack.c.b16 %v1103, %v1103
        %v1128 = vunpack.c.l.b16 %v1059
        %v1129 = vunpack.c.h.b16 %v1059
        %v1130 = vunpack.c.l.b16 %v1060
        %v1131 = vunpack.c.h.b16 %v1060
        %v1132 = vunpack.c.l.b16 %v1061
        %v1133 = vunpack.c.h.b16 %v1061
        %v1134 = vunpack.c.l.b16 %v1062
        %v1135 = vunpack.c.h.b16 %v1062
        %v1136 = vunpack.c.l.b16 %v1063
        %v1137 = vunpack.c.h.b16 %v1063
        %v1138 = vunpack.c.l.b16 %v1064
        %v1139 = vunpack.c.h.b16 %v1064
        %v1140 = vunpack.c.l.b16 %v1065
        %v1141 = vunpack.c.h.b16 %v1065
        %v1142 = vunpack.c.l.b16 %v1066
        %v1143 = vunpack.c.h.b16 %v1066
        %v1144 = vunpack.c.l.b16 %v1067
        %v1145 = vunpack.c.h.b16 %v1067
        %v1146 = vunpack.c.l.b16 %v1068
        %v1147 = vunpack.c.h.b16 %v1068
        %v1148 = vunpack.c.l.b16 %v1069
        %v1149 = vunpack.c.h.b16 %v1069
        %v1150 = vunpack.c.l.b16 %v1070
        %v1151 = vunpack.c.h.b16 %v1070
        %v1152 = vunpack.c.l.b16 %v1071
        %v1153 = vunpack.c.h.b16 %v1071
        %v1154 = vunpack.c.l.b16 %v1072
        %v1155 = vunpack.c.h.b16 %v1072
        %v1156 = vunpack.c.l.b16 %v1073
        %v1157 = vunpack.c.h.b16 %v1073
        %v1158 = vunpack.c.l.b16 %v1074
        %v1159 = vunpack.c.h.b16 %v1074
        %v1160 = vunpack.c.l.b16 %v1075
        %v1161 = vunpack.c.h.b16 %v1075
        %v1162 = vunpack.c.l.b16 %v1076
        %v1163 = vunpack.c.h.b16 %v1076
        %v1164 = vpack.c.b16 %v1130, %v1128
        %v1165 = vpack.c.b16 %v1131, %v1129
        %v1166 = vpack.c.b16 %v1134, %v1132
        %v1167 = vpack.c.b16 %v1135, %v1133
        %v1168 = vpack.c.b16 %v1138, %v1136
        %v1169 = vpack.c.b16 %v1139, %v1137
        %v1170 = vpack.c.b16 %v1142, %v1140
        %v1171 = vpack.c.b16 %v1143, %v1141
        %v1172 = vpack.c.b16 %v1146, %v1144
        %v1173 = vpack.c.b16 %v1147, %v1145
        %v1174 = vpack.c.b16 %v1150, %v1148
        %v1175 = vpack.c.b16 %v1151, %v1149
        %v1176 = vpack.c.b16 %v1154, %v1152
        %v1177 = vpack.c.b16 %v1155, %v1153
        %v1178 = vpack.c.b16 %v1158, %v1156
        %v1179 = vpack.c.b16 %v1159, %v1157
        %v1180 = vpack.c.b16 %v1162, %v1160
        %v1181 = vpack.c.b16 %v1163, %v1161
        %vm1200 = vcmask 130048
        %v1202 = vsel %vm1200, %v1105, 0
        %v1205 = vsel %vm1200, %v1107, 0
        %1207 = vmatprep.subr.bf16.mxu0 %v1179
        %1208 = vmatpush1.bf16.msra.mxu0 %v1178
        %1209 = vmatprep.subr.bf16.mxu0 %v1177
        %1210 = vmatpush1.bf16.msra.mxu0 %v1176
        %1211 = vmatprep.subr.bf16.mxu0 %v1175
        %1212 = vmatpush1.bf16.msra.mxu0 %v1174
        %1213 = vmatprep.subr.bf16.mxu0 %v1173
        %1214 = vmatpush1.bf16.msra.mxu0 %v1172
        %1215 = vmatprep.subr.bf16.mxu0 %v1171
        %1216 = vmatpush1.bf16.msra.mxu0 %v1170
        %1217 = vmatprep.subr.bf16.mxu0 %v1169
        %1218 = vmatpush1.bf16.msra.mxu0 %v1168
        %1219 = vmatprep.subr.bf16.mxu0 %v1167
        %1220 = vmatpush1.bf16.msra.mxu0 %v1166
        %1221 = vmatprep.subr.bf16.mxu0 %v1165
        %1222 = vmatpush1.bf16.msra.mxu0 %v1164
        %1223 = vmatprep.subr.bf16.mxu0 0
        %1224 = vmatpush2.bf16.msra.mxu0 0
        %1225 = vmatprep.subr.bf16.mxu0 0
        %1226 = vmatpush2.bf16.msra.mxu0 0
        %1227 = vmatprep.subr.bf16.mxu0 0
        %1228 = vmatpush2.bf16.msra.mxu0 0
        %1229 = vmatprep.subr.bf16.mxu0 0
        %1230 = vmatpush2.bf16.msra.mxu0 0
        %1231 = vmatprep.subr.bf16.mxu0 0
        %1232 = vmatpush2.bf16.msra.mxu0 0
        %1233 = vmatprep.subr.bf16.mxu0 0
        %1234 = vmatpush2.bf16.msra.mxu0 0
        %1235 = vmatprep.subr.bf16.mxu0 0
        %1236 = vmatpush2.bf16.msra.mxu0 0
        %1237 = vmatprep.subr.bf16.mxu0 %v1181
        %1238 = vmatpush2.bf16.msra.mxu0 %v1180
        %1239 = vmatprep.mubr.bf16.mxu0 %v1202
        %1240 = vmatmul.mubr.bf16.gmra.mxu0 %v1104
        %v1241 = vpop.f32.mrf.mxu0
        %v1242 = vadd.f32 %v1083, %v1241
        %v1243 = vpop.f32.mrf.mxu0
        %v1244 = vadd.f32 %v1083, %v1243
        %v1245 = vpop.f32.mrf.mxu0
        %v1246 = vadd.f32 %v1088, %v1245
        %v1247 = vpop.f32.mrf.mxu0
        %v1248 = vadd.f32 %v1088, %v1247
        %1249 = vmatprep.mubr.bf16.mxu0 %v1205
        %1250 = vmatmul.mubr.bf16.gmra.mxu0 %v1106
        %v1251 = vpop.f32.mrf.mxu0
        %v1252 = vadd.f32 %v1093, %v1251
        %v1253 = vpop.f32.mrf.mxu0
        %v1254 = vadd.f32 %v1093, %v1253
        %v1255 = vpop.f32.mrf.mxu0
        %v1256 = vpop.f32.mrf.mxu0
        %1257 = vdwg.mxu0
        %v1258 = vxor.u32 %v1242, 2147483648
        %v1259 = vxor.u32 %v1244, 2147483648
        %v1260 = vmul.f32 %v1258, 1.442695
        %v1261 = vpow.pop %v1260
        %v1262 = vmul.f32 %v1259, 1.442695
        %v1263 = vpow.pop %v1262
        %v1264 = vadd.f32 %v1261, 1.0
        %v1265 = vadd.f32 %v1263, 1.0
        %v1266 = vrcp.pop %v1264
        %v1267 = vmul.f32 1.0, %v1266
        %v1268 = vrcp.pop %v1265
        %v1269 = vmul.f32 1.0, %v1268
        %v1270 = vxor.u32 %v1246, 2147483648
        %v1271 = vxor.u32 %v1248, 2147483648
        %v1272 = vmul.f32 %v1270, 1.442695
        %v1273 = vpow.pop %v1272
        %v1274 = vmul.f32 %v1271, 1.442695
        %v1275 = vpow.pop %v1274
        %v1276 = vadd.f32 %v1273, 1.0
        %v1277 = vadd.f32 %v1275, 1.0
        %v1278 = vrcp.pop %v1276
        %v1279 = vmul.f32 1.0, %v1278
        %v1280 = vrcp.pop %v1277
        %v1281 = vmul.f32 1.0, %v1280
        %1282 = vst [vmem:[#allocation3] sm:$0xff] 0.0
        %1283 = vst [vmem:[#allocation3 + $0x20] sm:$0xff] 0.0
        %1284 = vst [vmem:[#allocation3 + $0x18] sm:$0xff] 0.0
        %1285 = vst [vmem:[#allocation3 + $0x38] sm:$0xff] 0.0
        %1286 = vst [vmem:[#allocation3 + $0x28] sm:$0xff] 0.0
        %1287 = vst [vmem:[#allocation3 + $0x30] sm:$0xff] 0.0
        %v1288 = vmul.f32 %v515, %v1279
        %v1289 = vmul.f32 %v516, %v1281
        %1290 = vst [vmem:[#allocation3 + $0x8] sm:$0xff] %v1288
        %1291 = vst [vmem:[#allocation3 + $0x10] sm:$0xff] %v1289
        %v1292 = vld [vmem:[#allocation3] sm:$0xff]
        %v1293 = vld [vmem:[#allocation3 + $0x8] sm:$0xff]
        %v1294 = vld [vmem:[#allocation3 + $0x10] sm:$0xff]
        %v1295 = vld [vmem:[#allocation3 + $0x20] sm:$0xff]
        %v1296 = vld [vmem:[#allocation3 + $0x28] sm:$0xff]
        %v1297 = vld [vmem:[#allocation3 + $0x30] sm:$0xff]
        %v1298 = vld [vmem:[#allocation11] ss:$8 sm:$0x3]
        %v1300 = vlaneseq
        %v1301 = vshrl.u32 %v1300, 7
        %v1302 = vsub.s32 0, %v1301
        %v1303 = vrot.slane %v1298, %v1302
        %v1304 = vlaneseq
        %v1305 = vshrl.u32 %v1304, 7
        %v1306 = vsub.s32 1, %v1305
        %v1307 = vrot.slane %v1298, %v1306
        %1308 = vrot.lane.b32.xlu0 %v1303, 111
        %v1309 = vpop.permute.xlu0 %1308
        %1310 = vrot.lane.b32.xlu0 %v1307, 111
        %v1311 = vpop.permute.xlu0 %1310
        %v1312 = vsel %vm558, %v1309, %v1311
        %v1316 = vmul.f32 %v1292, %v1309
        %v1317 = vmul.f32 %v1293, %v1312
        %v1318 = vmul.f32 %v1294, %v1311
        %v1319 = vmul.f32 %v1295, %v1309
        %v1320 = vmul.f32 %v1296, %v1312
        %v1321 = vmul.f32 %v1297, %v1311
        %v1322 = vpack.c.bf16 %v1319, %v1316
        %v1323 = vpack.c.bf16 %v1320, %v1317
        %v1324 = vpack.c.bf16 %v1321, %v1318
        %v1328 = vunpack.c.l.b16 %v1322
        %v1329 = vunpack.c.l.b16 %v1323
        %v1330 = vunpack.c.l.b16 %v1324
        %v1331 = vunpack.c.h.b16 %v1322
        %v1332 = vunpack.c.h.b16 %v1323
        %v1333 = vunpack.c.h.b16 %v1324
        %v1334 = vpack.c.b16 %v1329, %v1328
        %v1335 = vpack.c.b16 %v1330, %v1330
        %v1336 = vpack.c.b16 %v1332, %v1331
        %v1337 = vpack.c.b16 %v1333, %v1333
        %1338 = vrot.lane.b32.xlu0 %v1334, 17
        %v1339 = vpop.permute.xlu0 %1338
        %1340 = vrot.lane.b32.xlu0 %v1335, 17
        %v1341 = vpop.permute.xlu0 %1340
        %1342 = vrot.lane.b32.xlu0 %v1336, 17
        %v1343 = vpop.permute.xlu0 %1342
        %1344 = vrot.lane.b32.xlu0 %v1337, 17
        %v1345 = vpop.permute.xlu0 %1344
        %v1346 = vrot.slane %v1339, 4
        %v1347 = vrot.slane %v1341, 4
        %v1348 = vrot.slane %v1343, 4
        %v1349 = vrot.slane %v1345, 4
        %v1350 = vsel %vm597, %v1346, %v1347
        %v1351 = vsel %vm599, %v1339, %v1350
        %v1352 = vsel %vm597, %v1348, %v1349
        %v1353 = vsel %vm599, %v1343, %v1352
        %1356 = vst [vmem:[#allocation5] sm:$0xff] %v1351
        %1357 = vst [vmem:[#allocation5 + $0x8] sm:$0xff] %v1353
        %v1358 = vld [vmem:[#allocation3] sm:$0xff]
        %v1359 = vld [vmem:[#allocation3 + $0x8] sm:$0xff]
        %v1360 = vld [vmem:[#allocation3 + $0x10] sm:$0xff]
        %v1361 = vld [vmem:[#allocation3 + $0x20] sm:$0xff]
        %v1362 = vld [vmem:[#allocation3 + $0x28] sm:$0xff]
        %v1363 = vld [vmem:[#allocation3 + $0x30] sm:$0xff]
        %v1364 = vpack.c.bf16 %v1361, %v1358
        %v1365 = vpack.c.bf16 %v1362, %v1359
        %v1366 = vpack.c.bf16 %v1363, %v1360
        %v1370 = vunpack.c.l.b16 %v1364
        %v1371 = vunpack.c.l.b16 %v1365
        %v1372 = vunpack.c.l.b16 %v1366
        %v1373 = vunpack.c.h.b16 %v1364
        %v1374 = vunpack.c.h.b16 %v1365
        %v1375 = vunpack.c.h.b16 %v1366
        %v1376 = vpack.c.b16 %v1371, %v1370
        %v1377 = vpack.c.b16 %v1372, %v1372
        %v1378 = vpack.c.b16 %v1374, %v1373
        %v1379 = vpack.c.b16 %v1375, %v1375
        %1380 = vrot.lane.b32.xlu0 %v1376, 16
        %v1381 = vpop.permute.xlu0 %1380
        %1382 = vrot.lane.b32.xlu0 %v1377, 16
        %v1383 = vpop.permute.xlu0 %1382
        %1384 = vrot.lane.b32.xlu0 %v1378, 16
        %v1385 = vpop.permute.xlu0 %1384
        %1386 = vrot.lane.b32.xlu0 %v1379, 16
        %v1387 = vpop.permute.xlu0 %1386
        %v1388 = vrot.slane %v1381, 4
        %v1389 = vrot.slane %v1383, 4
        %v1390 = vrot.slane %v1385, 4
        %v1391 = vrot.slane %v1387, 4
        %v1392 = vsel %vm597, %v1388, %v1389
        %v1393 = vsel %vm642, %v1381, %v1392
        %v1394 = vsel %vm597, %v1390, %v1391
        %v1395 = vsel %vm642, %v1385, %v1394
        %1398 = vst [vmem:[#allocation5 + $0x10] sm:$0xff] %v1393
        %1399 = vst [vmem:[#allocation5 + $0x18] sm:$0xff] %v1395
        %v1400 = vld [vmem:[#allocation3] sm:$0xff]
        %v1401 = vld [vmem:[#allocation3 + $0x8] sm:$0xff]
        %v1402 = vld [vmem:[#allocation3 + $0x10] sm:$0xff]
        %v1403 = vld [vmem:[#allocation3 + $0x20] sm:$0xff]
        %v1404 = vld [vmem:[#allocation3 + $0x28] sm:$0xff]
        %v1405 = vld [vmem:[#allocation3 + $0x30] sm:$0xff]
        %v1406 = vld [vmem:[%s656] ss:$8 sm:$0x3]
        %v1408 = vlaneseq
        %v1409 = vshrl.u32 %v1408, 7
        %v1410 = vsub.s32 0, %v1409
        %v1411 = vrot.slane %v1406, %v1410
        %v1412 = vlaneseq
        %v1413 = vshrl.u32 %v1412, 7
        %v1414 = vsub.s32 1, %v1413
        %v1415 = vrot.slane %v1406, %v1414
        %1416 = vrot.lane.b32.xlu0 %v1411, 113
        %v1417 = vpop.permute.xlu0 %1416
        %1418 = vrot.lane.b32.xlu0 %v1415, 113
        %v1419 = vpop.permute.xlu0 %1418
        %v1420 = vsel %vm671, %v1417, %v1419
        %v1424 = vmul.f32 %v1400, %v1417
        %v1425 = vmul.f32 %v1401, %v1420
        %v1426 = vmul.f32 %v1402, %v1419
        %v1427 = vmul.f32 %v1403, %v1417
        %v1428 = vmul.f32 %v1404, %v1420
        %v1429 = vmul.f32 %v1405, %v1419
        %v1430 = vpack.c.bf16 %v1427, %v1424
        %v1431 = vpack.c.bf16 %v1428, %v1425
        %v1432 = vpack.c.bf16 %v1429, %v1426
        %v1436 = vunpack.c.l.b16 %v1430
        %v1437 = vunpack.c.l.b16 %v1431
        %v1438 = vunpack.c.l.b16 %v1432
        %v1439 = vunpack.c.h.b16 %v1430
        %v1440 = vunpack.c.h.b16 %v1431
        %v1441 = vunpack.c.h.b16 %v1432
        %v1442 = vpack.c.b16 %v1437, %v1436
        %v1443 = vpack.c.b16 %v1438, %v1438
        %v1444 = vpack.c.b16 %v1440, %v1439
        %v1445 = vpack.c.b16 %v1441, %v1441
        %1446 = vrot.lane.b32.xlu0 %v1442, 15
        %v1447 = vpop.permute.xlu0 %1446
        %1448 = vrot.lane.b32.xlu0 %v1443, 15
        %v1449 = vpop.permute.xlu0 %1448
        %1450 = vrot.lane.b32.xlu0 %v1444, 15
        %v1451 = vpop.permute.xlu0 %1450
        %1452 = vrot.lane.b32.xlu0 %v1445, 15
        %v1453 = vpop.permute.xlu0 %1452
        %v1454 = vrot.slane %v1447, 4
        %v1455 = vrot.slane %v1449, 4
        %v1456 = vrot.slane %v1451, 4
        %v1457 = vrot.slane %v1453, 4
        %v1458 = vsel %vm597, %v1454, %v1455
        %v1459 = vsel %vm711, %v1447, %v1458
        %v1460 = vsel %vm597, %v1456, %v1457
        %v1461 = vsel %vm711, %v1451, %v1460
        %1464 = vst [vmem:[#allocation5 + $0x20] sm:$0xff] %v1459
        %1465 = vst [vmem:[#allocation5 + $0x28] sm:$0xff] %v1461
        %v1466 = vld [vmem:[#allocation3] sm:$0xff]
        %v1467 = vld [vmem:[#allocation3 + $0x8] sm:$0xff]
        %v1468 = vld [vmem:[#allocation3 + $0x10] sm:$0xff]
        %v1469 = vld [vmem:[#allocation3 + $0x20] sm:$0xff]
        %v1470 = vld [vmem:[#allocation3 + $0x28] sm:$0xff]
        %v1471 = vld [vmem:[#allocation3 + $0x30] sm:$0xff]
        %v1472 = vld [vmem:[%s725] ss:$8 sm:$0x3]
        %v1474 = vlaneseq
        %v1475 = vshrl.u32 %v1474, 7
        %v1476 = vsub.s32 0, %v1475
        %v1477 = vrot.slane %v1472, %v1476
        %v1478 = vlaneseq
        %v1479 = vshrl.u32 %v1478, 7
        %v1480 = vsub.s32 1, %v1479
        %v1481 = vrot.slane %v1472, %v1480
        %1482 = vrot.lane.b32.xlu0 %v1477, 127
        %v1483 = vpop.permute.xlu0 %1482
        %1484 = vrot.lane.b32.xlu0 %v1481, 127
        %v1485 = vpop.permute.xlu0 %1484
        %v1486 = vsel %vm740, %v1483, %v1485
        %v1490 = vmul.f32 %v1466, %v1483
        %v1491 = vmul.f32 %v1467, %v1486
        %v1492 = vmul.f32 %v1468, %v1485
        %v1493 = vmul.f32 %v1469, %v1483
        %v1494 = vmul.f32 %v1470, %v1486
        %v1495 = vmul.f32 %v1471, %v1485
        %v1496 = vpack.c.bf16 %v1493, %v1490
        %v1497 = vpack.c.bf16 %v1494, %v1491
        %v1498 = vpack.c.bf16 %v1495, %v1492
        %v1502 = vunpack.c.l.b16 %v1496
        %v1503 = vunpack.c.l.b16 %v1497
        %v1504 = vunpack.c.l.b16 %v1498
        %v1505 = vunpack.c.h.b16 %v1496
        %v1506 = vunpack.c.h.b16 %v1497
        %v1507 = vunpack.c.h.b16 %v1498
        %v1508 = vpack.c.b16 %v1503, %v1502
        %v1509 = vpack.c.b16 %v1504, %v1504
        %v1510 = vpack.c.b16 %v1506, %v1505
        %v1511 = vpack.c.b16 %v1507, %v1507
        %1512 = vrot.lane.b32.xlu0 %v1508, 1
        %v1513 = vpop.permute.xlu0 %1512
        %1514 = vrot.lane.b32.xlu0 %v1509, 1
        %v1515 = vpop.permute.xlu0 %1514
        %1516 = vrot.lane.b32.xlu0 %v1510, 1
        %v1517 = vpop.permute.xlu0 %1516
        %1518 = vrot.lane.b32.xlu0 %v1511, 1
        %v1519 = vpop.permute.xlu0 %1518
        %v1520 = vrot.slane %v1513, 4
        %v1521 = vrot.slane %v1515, 4
        %v1522 = vrot.slane %v1517, 4
        %v1523 = vrot.slane %v1519, 4
        %v1524 = vsel %vm597, %v1520, %v1521
        %v1525 = vsel %vm780, %v1513, %v1524
        %v1526 = vsel %vm597, %v1522, %v1523
        %v1527 = vsel %vm780, %v1517, %v1526
        %1530 = vst [vmem:[#allocation5 + $0x30] sm:$0xff] %v1525
        %1531 = vst [vmem:[#allocation5 + $0x38] sm:$0xff] %v1527
        %v1532 = vld [vmem:[#allocation3 + $0x8] sm:$0xff]
        %v1533 = vld [vmem:[#allocation3 + $0x10] sm:$0xff]
        %v1534 = vld [vmem:[#allocation3 + $0x28] sm:$0xff]
        %v1535 = vld [vmem:[#allocation3 + $0x30] sm:$0xff]
        %v1536 = vpack.c.bf16 %v1534, %v1532
        %v1537 = vpack.c.bf16 %v1535, %v1533
        %v1540 = vunpack.c.l.b16 %v1536
        %v1541 = vunpack.c.l.b16 %v1537
        %v1542 = vunpack.c.h.b16 %v1536
        %v1543 = vunpack.c.h.b16 %v1537
        %v1544 = vpack.c.b16 %v1541, %v1540
        %v1545 = vpack.c.b16 %v1543, %v1542
        %1548 = vst [vmem:[#allocation5 + $0x40] sm:$0xff] %v1544
        %1549 = vst [vmem:[#allocation5 + $0x48] sm:$0xff] %v1545
        %v1550 = vld [vmem:[#allocation3 + $0x8] sm:$0xff]
        %v1551 = vld [vmem:[#allocation3 + $0x10] sm:$0xff]
        %v1552 = vld [vmem:[#allocation3 + $0x18] sm:$0xff]
        %v1553 = vld [vmem:[#allocation3 + $0x28] sm:$0xff]
        %v1554 = vld [vmem:[#allocation3 + $0x30] sm:$0xff]
        %v1555 = vld [vmem:[#allocation3 + $0x38] sm:$0xff]
        %v1556 = vld [vmem:[%s812] ss:$8 sm:$0x3]
        %v1558 = vlaneseq
        %v1559 = vshrl.u32 %v1558, 7
        %v1560 = vsub.s32 0, %v1559
        %v1561 = vrot.slane %v1556, %v1560
        %v1562 = vlaneseq
        %v1563 = vshrl.u32 %v1562, 7
        %v1564 = vsub.s32 1, %v1563
        %v1565 = vrot.slane %v1556, %v1564
        %1566 = vrot.lane.b32.xlu0 %v1561, 1
        %v1567 = vpop.permute.xlu0 %1566
        %1568 = vrot.lane.b32.xlu0 %v1565, 1
        %v1569 = vpop.permute.xlu0 %1568
        %v1570 = vsel %vm827, %v1567, %v1569
        %v1574 = vmul.f32 %v1550, %v1567
        %v1575 = vmul.f32 %v1551, %v1570
        %v1576 = vmul.f32 %v1552, %v1569
        %v1577 = vmul.f32 %v1553, %v1567
        %v1578 = vmul.f32 %v1554, %v1570
        %v1579 = vmul.f32 %v1555, %v1569
        %v1580 = vpack.c.bf16 %v1577, %v1574
        %v1581 = vpack.c.bf16 %v1578, %v1575
        %v1582 = vpack.c.bf16 %v1579, %v1576
        %v1586 = vunpack.c.l.b16 %v1580
        %v1587 = vunpack.c.l.b16 %v1581
        %v1588 = vunpack.c.l.b16 %v1582
        %v1589 = vunpack.c.h.b16 %v1580
        %v1590 = vunpack.c.h.b16 %v1581
        %v1591 = vunpack.c.h.b16 %v1582
        %v1592 = vpack.c.b16 %v1587, %v1586
        %v1593 = vpack.c.b16 %v1588, %v1588
        %v1594 = vpack.c.b16 %v1590, %v1589
        %v1595 = vpack.c.b16 %v1591, %v1591
        %1596 = vrot.lane.b32.xlu0 %v1592, 127
        %v1597 = vpop.permute.xlu0 %1596
        %1598 = vrot.lane.b32.xlu0 %v1593, 127
        %v1599 = vpop.permute.xlu0 %1598
        %1600 = vrot.lane.b32.xlu0 %v1594, 127
        %v1601 = vpop.permute.xlu0 %1600
        %1602 = vrot.lane.b32.xlu0 %v1595, 127
        %v1603 = vpop.permute.xlu0 %1602
        %v1604 = vrot.slane %v1597, 4
        %v1605 = vrot.slane %v1599, 4
        %v1606 = vrot.slane %v1601, 4
        %v1607 = vrot.slane %v1603, 4
        %v1608 = vsel %vm597, %v1604, %v1605
        %v1609 = vsel %vm867, %v1597, %v1608
        %v1610 = vsel %vm597, %v1606, %v1607
        %v1611 = vsel %vm867, %v1601, %v1610
        %1614 = vst [vmem:[#allocation5 + $0x50] sm:$0xff] %v1609
        %1615 = vst [vmem:[#allocation5 + $0x58] sm:$0xff] %v1611
        %v1616 = vld [vmem:[#allocation3 + $0x8] sm:$0xff]
        %v1617 = vld [vmem:[#allocation3 + $0x10] sm:$0xff]
        %v1618 = vld [vmem:[#allocation3 + $0x18] sm:$0xff]
        %v1619 = vld [vmem:[#allocation3 + $0x28] sm:$0xff]
        %v1620 = vld [vmem:[#allocation3 + $0x30] sm:$0xff]
        %v1621 = vld [vmem:[#allocation3 + $0x38] sm:$0xff]
        %v1622 = vld [vmem:[%s881] ss:$8 sm:$0x3]
        %v1624 = vlaneseq
        %v1625 = vshrl.u32 %v1624, 7
        %v1626 = vsub.s32 0, %v1625
        %v1627 = vrot.slane %v1622, %v1626
        %v1628 = vlaneseq
        %v1629 = vshrl.u32 %v1628, 7
        %v1630 = vsub.s32 1, %v1629
        %v1631 = vrot.slane %v1622, %v1630
        %1632 = vrot.lane.b32.xlu0 %v1627, 15
        %v1633 = vpop.permute.xlu0 %1632
        %1634 = vrot.lane.b32.xlu0 %v1631, 15
        %v1635 = vpop.permute.xlu0 %1634
        %v1636 = vsel %vm896, %v1633, %v1635
        %v1640 = vmul.f32 %v1616, %v1633
        %v1641 = vmul.f32 %v1617, %v1636
        %v1642 = vmul.f32 %v1618, %v1635
        %v1643 = vmul.f32 %v1619, %v1633
        %v1644 = vmul.f32 %v1620, %v1636
        %v1645 = vmul.f32 %v1621, %v1635
        %v1646 = vpack.c.bf16 %v1643, %v1640
        %v1647 = vpack.c.bf16 %v1644, %v1641
        %v1648 = vpack.c.bf16 %v1645, %v1642
        %v1652 = vunpack.c.l.b16 %v1646
        %v1653 = vunpack.c.l.b16 %v1647
        %v1654 = vunpack.c.l.b16 %v1648
        %v1655 = vunpack.c.h.b16 %v1646
        %v1656 = vunpack.c.h.b16 %v1647
        %v1657 = vunpack.c.h.b16 %v1648
        %v1658 = vpack.c.b16 %v1653, %v1652
        %v1659 = vpack.c.b16 %v1654, %v1654
        %v1660 = vpack.c.b16 %v1656, %v1655
        %v1661 = vpack.c.b16 %v1657, %v1657
        %1662 = vrot.lane.b32.xlu0 %v1658, 113
        %v1663 = vpop.permute.xlu0 %1662
        %1664 = vrot.lane.b32.xlu0 %v1659, 113
        %v1665 = vpop.permute.xlu0 %1664
        %1666 = vrot.lane.b32.xlu0 %v1660, 113
        %v1667 = vpop.permute.xlu0 %1666
        %1668 = vrot.lane.b32.xlu0 %v1661, 113
        %v1669 = vpop.permute.xlu0 %1668
        %v1670 = vrot.slane %v1663, 4
        %v1671 = vrot.slane %v1665, 4
        %v1672 = vrot.slane %v1667, 4
        %v1673 = vrot.slane %v1669, 4
        %v1674 = vsel %vm597, %v1670, %v1671
        %v1675 = vsel %vm936, %v1663, %v1674
        %v1676 = vsel %vm597, %v1672, %v1673
        %v1677 = vsel %vm936, %v1667, %v1676
        %1680 = vst [vmem:[#allocation5 + $0x60] sm:$0xff] %v1675
        %1681 = vst [vmem:[#allocation5 + $0x68] sm:$0xff] %v1677
        %v1682 = vld [vmem:[#allocation3 + $0x8] sm:$0xff]
        %v1683 = vld [vmem:[#allocation3 + $0x10] sm:$0xff]
        %v1684 = vld [vmem:[#allocation3 + $0x18] sm:$0xff]
        %v1685 = vld [vmem:[#allocation3 + $0x28] sm:$0xff]
        %v1686 = vld [vmem:[#allocation3 + $0x30] sm:$0xff]
        %v1687 = vld [vmem:[#allocation3 + $0x38] sm:$0xff]
        %v1688 = vpack.c.bf16 %v1685, %v1682
        %v1689 = vpack.c.bf16 %v1686, %v1683
        %v1690 = vpack.c.bf16 %v1687, %v1684
        %v1694 = vunpack.c.l.b16 %v1688
        %v1695 = vunpack.c.l.b16 %v1689
        %v1696 = vunpack.c.l.b16 %v1690
        %v1697 = vunpack.c.h.b16 %v1688
        %v1698 = vunpack.c.h.b16 %v1689
        %v1699 = vunpack.c.h.b16 %v1690
        %v1700 = vpack.c.b16 %v1695, %v1694
        %v1701 = vpack.c.b16 %v1696, %v1696
        %v1702 = vpack.c.b16 %v1698, %v1697
        %v1703 = vpack.c.b16 %v1699, %v1699
        %1704 = vrot.lane.b32.xlu0 %v1700, 112
        %v1705 = vpop.permute.xlu0 %1704
        %1706 = vrot.lane.b32.xlu0 %v1701, 112
        %v1707 = vpop.permute.xlu0 %1706
        %1708 = vrot.lane.b32.xlu0 %v1702, 112
        %v1709 = vpop.permute.xlu0 %1708
        %1710 = vrot.lane.b32.xlu0 %v1703, 112
        %v1711 = vpop.permute.xlu0 %1710
        %v1712 = vrot.slane %v1705, 4
        %v1713 = vrot.slane %v1707, 4
        %v1714 = vrot.slane %v1709, 4
        %v1715 = vrot.slane %v1711, 4
        %v1716 = vsel %vm597, %v1712, %v1713
        %v1717 = vsel %vm979, %v1705, %v1716
        %v1718 = vsel %vm597, %v1714, %v1715
        %v1719 = vsel %vm979, %v1709, %v1718
        %1722 = vst [vmem:[#allocation5 + $0x70] sm:$0xff] %v1717
        %1723 = vst [vmem:[#allocation5 + $0x78] sm:$0xff] %v1719
        %v1724 = vld [vmem:[#allocation3 + $0x8] sm:$0xff]
        %v1725 = vld [vmem:[#allocation3 + $0x10] sm:$0xff]
        %v1726 = vld [vmem:[#allocation3 + $0x18] sm:$0xff]
        %v1727 = vld [vmem:[#allocation3 + $0x28] sm:$0xff]
        %v1728 = vld [vmem:[#allocation3 + $0x30] sm:$0xff]
        %v1729 = vld [vmem:[#allocation3 + $0x38] sm:$0xff]
        %v1730 = vld [vmem:[%s993] ss:$8 sm:$0x3]
        %v1732 = vlaneseq
        %v1733 = vshrl.u32 %v1732, 7
        %v1734 = vsub.s32 0, %v1733
        %v1735 = vrot.slane %v1730, %v1734
        %v1736 = vlaneseq
        %v1737 = vshrl.u32 %v1736, 7
        %v1738 = vsub.s32 1, %v1737
        %v1739 = vrot.slane %v1730, %v1738
        %1740 = vrot.lane.b32.xlu0 %v1735, 17
        %v1741 = vpop.permute.xlu0 %1740
        %1742 = vrot.lane.b32.xlu0 %v1739, 17
        %v1743 = vpop.permute.xlu0 %1742
        %v1744 = vsel %vm1008, %v1741, %v1743
        %v1748 = vmul.f32 %v1724, %v1741
        %v1749 = vmul.f32 %v1725, %v1744
        %v1750 = vmul.f32 %v1726, %v1743
        %v1751 = vmul.f32 %v1727, %v1741
        %v1752 = vmul.f32 %v1728, %v1744
        %v1753 = vmul.f32 %v1729, %v1743
        %v1754 = vpack.c.bf16 %v1751, %v1748
        %v1755 = vpack.c.bf16 %v1752, %v1749
        %v1756 = vpack.c.bf16 %v1753, %v1750
        %v1760 = vunpack.c.l.b16 %v1754
        %v1761 = vunpack.c.l.b16 %v1755
        %v1762 = vunpack.c.l.b16 %v1756
        %v1763 = vunpack.c.h.b16 %v1754
        %v1764 = vunpack.c.h.b16 %v1755
        %v1765 = vunpack.c.h.b16 %v1756
        %v1766 = vpack.c.b16 %v1761, %v1760
        %v1767 = vpack.c.b16 %v1762, %v1762
        %v1768 = vpack.c.b16 %v1764, %v1763
        %v1769 = vpack.c.b16 %v1765, %v1765
        %1770 = vrot.lane.b32.xlu0 %v1766, 111
        %v1771 = vpop.permute.xlu0 %1770
        %1772 = vrot.lane.b32.xlu0 %v1767, 111
        %v1773 = vpop.permute.xlu0 %1772
        %1774 = vrot.lane.b32.xlu0 %v1768, 111
        %v1775 = vpop.permute.xlu0 %1774
        %1776 = vrot.lane.b32.xlu0 %v1769, 111
        %v1777 = vpop.permute.xlu0 %1776
        %v1778 = vrot.slane %v1771, 4
        %v1779 = vrot.slane %v1773, 4
        %v1780 = vrot.slane %v1775, 4
        %v1781 = vrot.slane %v1777, 4
        %v1782 = vsel %vm597, %v1778, %v1779
        %v1783 = vsel %vm1048, %v1771, %v1782
        %v1784 = vsel %vm597, %v1780, %v1781
        %v1785 = vsel %vm1048, %v1775, %v1784
        %1788 = vst [vmem:[#allocation5 + $0x80] sm:$0xff] %v1783
        %1789 = vst [vmem:[#allocation5 + $0x88] sm:$0xff] %v1785
        %v1790 = vld [vmem:[#allocation12] sm:$0xff]
        %v1791 = vld [vmem:[#allocation5] sm:$0xff]
        %v1792 = vld [vmem:[#allocation5 + $0x8] sm:$0xff]
        %v1793 = vld [vmem:[#allocation5 + $0x10] sm:$0xff]
        %v1794 = vld [vmem:[#allocation5 + $0x18] sm:$0xff]
        %v1795 = vld [vmem:[#allocation5 + $0x20] sm:$0xff]
        %v1796 = vld [vmem:[#allocation5 + $0x28] sm:$0xff]
        %v1797 = vld [vmem:[#allocation5 + $0x30] sm:$0xff]
        %v1798 = vld [vmem:[#allocation5 + $0x38] sm:$0xff]
        %v1799 = vld [vmem:[#allocation5 + $0x40] sm:$0xff]
        %v1800 = vld [vmem:[#allocation5 + $0x48] sm:$0xff]
        %v1801 = vld [vmem:[#allocation5 + $0x50] sm:$0xff]
        %v1802 = vld [vmem:[#allocation5 + $0x58] sm:$0xff]
        %v1803 = vld [vmem:[#allocation5 + $0x60] sm:$0xff]
        %v1804 = vld [vmem:[#allocation5 + $0x68] sm:$0xff]
        %v1805 = vld [vmem:[#allocation5 + $0x70] sm:$0xff]
        %v1806 = vld [vmem:[#allocation5 + $0x78] sm:$0xff]
        %v1807 = vld [vmem:[#allocation5 + $0x80] sm:$0xff]
        %v1808 = vld [vmem:[#allocation5 + $0x88] sm:$0xff]
        %v1810 = vunpack.c.l.b16 %v1790
        %v1811 = vunpack.c.h.b16 %v1790
        %v1812 = vpack.c.b16 %v1810, %v1810
        %v1813 = vpack.c.b16 %v1811, %v1811
        %v1833 = vunpack.c.l.b16 %v1791
        %v1834 = vunpack.c.h.b16 %v1791
        %v1835 = vunpack.c.l.b16 %v1792
        %v1836 = vunpack.c.h.b16 %v1792
        %v1837 = vunpack.c.l.b16 %v1793
        %v1838 = vunpack.c.h.b16 %v1793
        %v1839 = vunpack.c.l.b16 %v1794
        %v1840 = vunpack.c.h.b16 %v1794
        %v1841 = vunpack.c.l.b16 %v1795
        %v1842 = vunpack.c.h.b16 %v1795
        %v1843 = vunpack.c.l.b16 %v1796
        %v1844 = vunpack.c.h.b16 %v1796
        %v1845 = vunpack.c.l.b16 %v1797
        %v1846 = vunpack.c.h.b16 %v1797
        %v1847 = vunpack.c.l.b16 %v1798
        %v1848 = vunpack.c.h.b16 %v1798
        %v1849 = vunpack.c.l.b16 %v1799
        %v1850 = vunpack.c.h.b16 %v1799
        %v1851 = vunpack.c.l.b16 %v1800
        %v1852 = vunpack.c.h.b16 %v1800
        %v1853 = vunpack.c.l.b16 %v1801
        %v1854 = vunpack.c.h.b16 %v1801
        %v1855 = vunpack.c.l.b16 %v1802
        %v1856 = vunpack.c.h.b16 %v1802
        %v1857 = vunpack.c.l.b16 %v1803
        %v1858 = vunpack.c.h.b16 %v1803
        %v1859 = vunpack.c.l.b16 %v1804
        %v1860 = vunpack.c.h.b16 %v1804
        %v1861 = vunpack.c.l.b16 %v1805
        %v1862 = vunpack.c.h.b16 %v1805
        %v1863 = vunpack.c.l.b16 %v1806
        %v1864 = vunpack.c.h.b16 %v1806
        %v1865 = vunpack.c.l.b16 %v1807
        %v1866 = vunpack.c.h.b16 %v1807
        %v1867 = vunpack.c.l.b16 %v1808
        %v1868 = vunpack.c.h.b16 %v1808
        %v1869 = vpack.c.b16 %v1835, %v1833
        %v1870 = vpack.c.b16 %v1836, %v1834
        %v1871 = vpack.c.b16 %v1839, %v1837
        %v1872 = vpack.c.b16 %v1840, %v1838
        %v1873 = vpack.c.b16 %v1843, %v1841
        %v1874 = vpack.c.b16 %v1844, %v1842
        %v1875 = vpack.c.b16 %v1847, %v1845
        %v1876 = vpack.c.b16 %v1848, %v1846
        %v1877 = vpack.c.b16 %v1851, %v1849
        %v1878 = vpack.c.b16 %v1852, %v1850
        %v1879 = vpack.c.b16 %v1855, %v1853
        %v1880 = vpack.c.b16 %v1856, %v1854
        %v1881 = vpack.c.b16 %v1859, %v1857
        %v1882 = vpack.c.b16 %v1860, %v1858
        %v1883 = vpack.c.b16 %v1863, %v1861
        %v1884 = vpack.c.b16 %v1864, %v1862
        %v1885 = vpack.c.b16 %v1867, %v1865
        %v1886 = vpack.c.b16 %v1868, %v1866
        %v1906 = vsel %vm1200, %v1813, 0
        %1908 = vmatprep.subr.bf16.mxu0 %v1884
        %1909 = vmatpush1.bf16.msra.mxu0 %v1883
        %1910 = vmatprep.subr.bf16.mxu0 %v1882
        %1911 = vmatpush1.bf16.msra.mxu0 %v1881
        %1912 = vmatprep.subr.bf16.mxu0 %v1880
        %1913 = vmatpush1.bf16.msra.mxu0 %v1879
        %1914 = vmatprep.subr.bf16.mxu0 %v1878
        %1915 = vmatpush1.bf16.msra.mxu0 %v1877
        %1916 = vmatprep.subr.bf16.mxu0 %v1876
        %1917 = vmatpush1.bf16.msra.mxu0 %v1875
        %1918 = vmatprep.subr.bf16.mxu0 %v1874
        %1919 = vmatpush1.bf16.msra.mxu0 %v1873
        %1920 = vmatprep.subr.bf16.mxu0 %v1872
        %1921 = vmatpush1.bf16.msra.mxu0 %v1871
        %1922 = vmatprep.subr.bf16.mxu0 %v1870
        %1923 = vmatpush1.bf16.msra.mxu0 %v1869
        %1924 = vmatprep.subr.bf16.mxu0 0
        %1925 = vmatpush2.bf16.msra.mxu0 0
        %1926 = vmatprep.subr.bf16.mxu0 0
        %1927 = vmatpush2.bf16.msra.mxu0 0
        %1928 = vmatprep.subr.bf16.mxu0 0
        %1929 = vmatpush2.bf16.msra.mxu0 0
        %1930 = vmatprep.subr.bf16.mxu0 0
        %1931 = vmatpush2.bf16.msra.mxu0 0
        %1932 = vmatprep.subr.bf16.mxu0 0
        %1933 = vmatpush2.bf16.msra.mxu0 0
        %1934 = vmatprep.subr.bf16.mxu0 0
        %1935 = vmatpush2.bf16.msra.mxu0 0
        %1936 = vmatprep.subr.bf16.mxu0 0
        %1937 = vmatpush2.bf16.msra.mxu0 0
        %1938 = vmatprep.subr.bf16.mxu0 %v1886
        %1939 = vmatpush2.bf16.msra.mxu0 %v1885
        %1940 = vmatprep.mubr.bf16.mxu0 %v1906
        %1941 = vmatmul.mubr.bf16.gmra.mxu0 %v1812
        %v1942 = vpop.f32.mrf.mxu0
        %v1943 = vadd.f32 0.0, %v1942
        %v1944 = vpop.f32.mrf.mxu0
        %v1945 = vadd.f32 0.0, %v1944
        %v1946 = vpop.f32.mrf.mxu0
        %v1947 = vpop.f32.mrf.mxu0
        %1948 = vdwg.mxu0
        %v1949 = vadd.f32 %v1252, %v1943
        %v1950 = vadd.f32 %v1254, %v1945
        %v1951 = vtanh.pop %v1949
        %v1952 = vtanh.pop %v1950
        %v1953 = vsub.f32 1.0, %v1267
        %v1954 = vsub.f32 1.0, %v1269
        %v1955 = vmul.f32 %v515, %v1953
        %v1956 = vmul.f32 %v516, %v1954
        %v1957 = vmul.f32 %v1951, %v1267
        %v1958 = vmul.f32 %v1952, %v1269
        %v1959 = vadd.f32 %v1955, %v1957
        %v1960 = vadd.f32 %v1956, %v1958
        %1961 = vst [vmem:[%s500] sm:$0xff] %v1959
        %1962 = vst [vmem:[%s500 + $0x8] sm:$0xff] %v1960
        %v1963 = vld [vmem:[%s442] sm:$0xff]
        %v1964 = vld [vmem:[%s442 + $0x8] sm:$0xff]
        %1965 = vst [vmem:[#allocation2] sm:$0xff] 0.0
        %1966 = vst [vmem:[#allocation2 + $0x20] sm:$0xff] 0.0
        %1967 = vst [vmem:[#allocation2 + $0x18] sm:$0xff] 0.0
        %1968 = vst [vmem:[#allocation2 + $0x38] sm:$0xff] 0.0
        %1969 = vst [vmem:[#allocation2 + $0x8] sm:$0xff] %v1959
        %1970 = vst [vmem:[#allocation2 + $0x10] sm:$0xff] %v1960
        %1971 = vst [vmem:[#allocation2 + $0x28] sm:$0xff] %v1963
        %1972 = vst [vmem:[#allocation2 + $0x30] sm:$0xff] %v1964
        %v1973 = vld [vmem:[#allocation2] sm:$0xff]
        %v1974 = vld [vmem:[#allocation2 + $0x8] sm:$0xff]
        %v1975 = vld [vmem:[#allocation2 + $0x10] sm:$0xff]
        %v1976 = vld [vmem:[#allocation2 + $0x20] sm:$0xff]
        %v1977 = vld [vmem:[#allocation2 + $0x28] sm:$0xff]
        %v1978 = vld [vmem:[#allocation2 + $0x30] sm:$0xff]
        %v1979 = vld [vmem:[#allocation11] ss:$8 sm:$0x3]
        %v1981 = vlaneseq
        %v1982 = vshrl.u32 %v1981, 7
        %v1983 = vsub.s32 0, %v1982
        %v1984 = vrot.slane %v1979, %v1983
        %v1985 = vlaneseq
        %v1986 = vshrl.u32 %v1985, 7
        %v1987 = vsub.s32 1, %v1986
        %v1988 = vrot.slane %v1979, %v1987
        %1989 = vrot.lane.b32.xlu0 %v1984, 111
        %v1990 = vpop.permute.xlu0 %1989
        %1991 = vrot.lane.b32.xlu0 %v1988, 111
        %v1992 = vpop.permute.xlu0 %1991
        %v1993 = vsel %vm558, %v1990, %v1992
        %v1997 = vmul.f32 %v1973, %v1990
        %v1998 = vmul.f32 %v1974, %v1993
        %v1999 = vmul.f32 %v1975, %v1992
        %v2000 = vmul.f32 %v1976, %v1990
        %v2001 = vmul.f32 %v1977, %v1993
        %v2002 = vmul.f32 %v1978, %v1992
        %v2003 = vpack.c.bf16 %v2000, %v1997
        %v2004 = vpack.c.bf16 %v2001, %v1998
        %v2005 = vpack.c.bf16 %v2002, %v1999
        %v2009 = vunpack.c.l.b16 %v2003
        %v2010 = vunpack.c.l.b16 %v2004
        %v2011 = vunpack.c.l.b16 %v2005
        %v2012 = vunpack.c.h.b16 %v2003
        %v2013 = vunpack.c.h.b16 %v2004
        %v2014 = vunpack.c.h.b16 %v2005
        %v2015 = vpack.c.b16 %v2010, %v2009
        %v2016 = vpack.c.b16 %v2011, %v2011
        %v2017 = vpack.c.b16 %v2013, %v2012
        %v2018 = vpack.c.b16 %v2014, %v2014
        %2019 = vrot.lane.b32.xlu0 %v2015, 17
        %v2020 = vpop.permute.xlu0 %2019
        %2021 = vrot.lane.b32.xlu0 %v2016, 17
        %v2022 = vpop.permute.xlu0 %2021
        %2023 = vrot.lane.b32.xlu0 %v2017, 17
        %v2024 = vpop.permute.xlu0 %2023
        %2025 = vrot.lane.b32.xlu0 %v2018, 17
        %v2026 = vpop.permute.xlu0 %2025
        %v2027 = vrot.slane %v2020, 4
        %v2028 = vrot.slane %v2022, 4
        %v2029 = vrot.slane %v2024, 4
        %v2030 = vrot.slane %v2026, 4
        %v2031 = vsel %vm597, %v2027, %v2028
        %v2032 = vsel %vm599, %v2020, %v2031
        %v2033 = vsel %vm597, %v2029, %v2030
        %v2034 = vsel %vm599, %v2024, %v2033
        %2037 = vst [vmem:[#allocation4] sm:$0xff] %v2032
        %2038 = vst [vmem:[#allocation4 + $0x8] sm:$0xff] %v2034
        %v2039 = vld [vmem:[#allocation2] sm:$0xff]
        %v2040 = vld [vmem:[#allocation2 + $0x8] sm:$0xff]
        %v2041 = vld [vmem:[#allocation2 + $0x10] sm:$0xff]
        %v2042 = vld [vmem:[#allocation2 + $0x20] sm:$0xff]
        %v2043 = vld [vmem:[#allocation2 + $0x28] sm:$0xff]
        %v2044 = vld [vmem:[#allocation2 + $0x30] sm:$0xff]
        %v2045 = vpack.c.bf16 %v2042, %v2039
        %v2046 = vpack.c.bf16 %v2043, %v2040
        %v2047 = vpack.c.bf16 %v2044, %v2041
        %v2051 = vunpack.c.l.b16 %v2045
        %v2052 = vunpack.c.l.b16 %v2046
        %v2053 = vunpack.c.l.b16 %v2047
        %v2054 = vunpack.c.h.b16 %v2045
        %v2055 = vunpack.c.h.b16 %v2046
        %v2056 = vunpack.c.h.b16 %v2047
        %v2057 = vpack.c.b16 %v2052, %v2051
        %v2058 = vpack.c.b16 %v2053, %v2053
        %v2059 = vpack.c.b16 %v2055, %v2054
        %v2060 = vpack.c.b16 %v2056, %v2056
        %2061 = vrot.lane.b32.xlu0 %v2057, 16
        %v2062 = vpop.permute.xlu0 %2061
        %2063 = vrot.lane.b32.xlu0 %v2058, 16
        %v2064 = vpop.permute.xlu0 %2063
        %2065 = vrot.lane.b32.xlu0 %v2059, 16
        %v2066 = vpop.permute.xlu0 %2065
        %2067 = vrot.lane.b32.xlu0 %v2060, 16
        %v2068 = vpop.permute.xlu0 %2067
        %v2069 = vrot.slane %v2062, 4
        %v2070 = vrot.slane %v2064, 4
        %v2071 = vrot.slane %v2066, 4
        %v2072 = vrot.slane %v2068, 4
        %v2073 = vsel %vm597, %v2069, %v2070
        %v2074 = vsel %vm642, %v2062, %v2073
        %v2075 = vsel %vm597, %v2071, %v2072
        %v2076 = vsel %vm642, %v2066, %v2075
        %2079 = vst [vmem:[#allocation4 + $0x10] sm:$0xff] %v2074
        %2080 = vst [vmem:[#allocation4 + $0x18] sm:$0xff] %v2076
        %v2081 = vld [vmem:[#allocation2] sm:$0xff]
        %v2082 = vld [vmem:[#allocation2 + $0x8] sm:$0xff]
        %v2083 = vld [vmem:[#allocation2 + $0x10] sm:$0xff]
        %v2084 = vld [vmem:[#allocation2 + $0x20] sm:$0xff]
        %v2085 = vld [vmem:[#allocation2 + $0x28] sm:$0xff]
        %v2086 = vld [vmem:[#allocation2 + $0x30] sm:$0xff]
        %v2087 = vld [vmem:[%s656] ss:$8 sm:$0x3]
        %v2089 = vlaneseq
        %v2090 = vshrl.u32 %v2089, 7
        %v2091 = vsub.s32 0, %v2090
        %v2092 = vrot.slane %v2087, %v2091
        %v2093 = vlaneseq
        %v2094 = vshrl.u32 %v2093, 7
        %v2095 = vsub.s32 1, %v2094
        %v2096 = vrot.slane %v2087, %v2095
        %2097 = vrot.lane.b32.xlu0 %v2092, 113
        %v2098 = vpop.permute.xlu0 %2097
        %2099 = vrot.lane.b32.xlu0 %v2096, 113
        %v2100 = vpop.permute.xlu0 %2099
        %v2101 = vsel %vm671, %v2098, %v2100
        %v2105 = vmul.f32 %v2081, %v2098
        %v2106 = vmul.f32 %v2082, %v2101
        %v2107 = vmul.f32 %v2083, %v2100
        %v2108 = vmul.f32 %v2084, %v2098
        %v2109 = vmul.f32 %v2085, %v2101
        %v2110 = vmul.f32 %v2086, %v2100
        %v2111 = vpack.c.bf16 %v2108, %v2105
        %v2112 = vpack.c.bf16 %v2109, %v2106
        %v2113 = vpack.c.bf16 %v2110, %v2107
        %v2117 = vunpack.c.l.b16 %v2111
        %v2118 = vunpack.c.l.b16 %v2112
        %v2119 = vunpack.c.l.b16 %v2113
        %v2120 = vunpack.c.h.b16 %v2111
        %v2121 = vunpack.c.h.b16 %v2112
        %v2122 = vunpack.c.h.b16 %v2113
        %v2123 = vpack.c.b16 %v2118, %v2117
        %v2124 = vpack.c.b16 %v2119, %v2119
        %v2125 = vpack.c.b16 %v2121, %v2120
        %v2126 = vpack.c.b16 %v2122, %v2122
        %2127 = vrot.lane.b32.xlu0 %v2123, 15
        %v2128 = vpop.permute.xlu0 %2127
        %2129 = vrot.lane.b32.xlu0 %v2124, 15
        %v2130 = vpop.permute.xlu0 %2129
        %2131 = vrot.lane.b32.xlu0 %v2125, 15
        %v2132 = vpop.permute.xlu0 %2131
        %2133 = vrot.lane.b32.xlu0 %v2126, 15
        %v2134 = vpop.permute.xlu0 %2133
        %v2135 = vrot.slane %v2128, 4
        %v2136 = vrot.slane %v2130, 4
        %v2137 = vrot.slane %v2132, 4
        %v2138 = vrot.slane %v2134, 4
        %v2139 = vsel %vm597, %v2135, %v2136
        %v2140 = vsel %vm711, %v2128, %v2139
        %v2141 = vsel %vm597, %v2137, %v2138
        %v2142 = vsel %vm711, %v2132, %v2141
        %2145 = vst [vmem:[#allocation4 + $0x20] sm:$0xff] %v2140
        %2146 = vst [vmem:[#allocation4 + $0x28] sm:$0xff] %v2142
        %v2147 = vld [vmem:[#allocation2] sm:$0xff]
        %v2148 = vld [vmem:[#allocation2 + $0x8] sm:$0xff]
        %v2149 = vld [vmem:[#allocation2 + $0x10] sm:$0xff]
        %v2150 = vld [vmem:[#allocation2 + $0x20] sm:$0xff]
        %v2151 = vld [vmem:[#allocation2 + $0x28] sm:$0xff]
        %v2152 = vld [vmem:[#allocation2 + $0x30] sm:$0xff]
        %v2153 = vld [vmem:[%s725] ss:$8 sm:$0x3]
        %v2155 = vlaneseq
        %v2156 = vshrl.u32 %v2155, 7
        %v2157 = vsub.s32 0, %v2156
        %v2158 = vrot.slane %v2153, %v2157
        %v2159 = vlaneseq
        %v2160 = vshrl.u32 %v2159, 7
        %v2161 = vsub.s32 1, %v2160
        %v2162 = vrot.slane %v2153, %v2161
        %2163 = vrot.lane.b32.xlu0 %v2158, 127
        %v2164 = vpop.permute.xlu0 %2163
        %2165 = vrot.lane.b32.xlu0 %v2162, 127
        %v2166 = vpop.permute.xlu0 %2165
        %v2167 = vsel %vm740, %v2164, %v2166
        %v2171 = vmul.f32 %v2147, %v2164
        %v2172 = vmul.f32 %v2148, %v2167
        %v2173 = vmul.f32 %v2149, %v2166
        %v2174 = vmul.f32 %v2150, %v2164
        %v2175 = vmul.f32 %v2151, %v2167
        %v2176 = vmul.f32 %v2152, %v2166
        %v2177 = vpack.c.bf16 %v2174, %v2171
        %v2178 = vpack.c.bf16 %v2175, %v2172
        %v2179 = vpack.c.bf16 %v2176, %v2173
        %v2183 = vunpack.c.l.b16 %v2177
        %v2184 = vunpack.c.l.b16 %v2178
        %v2185 = vunpack.c.l.b16 %v2179
        %v2186 = vunpack.c.h.b16 %v2177
        %v2187 = vunpack.c.h.b16 %v2178
        %v2188 = vunpack.c.h.b16 %v2179
        %v2189 = vpack.c.b16 %v2184, %v2183
        %v2190 = vpack.c.b16 %v2185, %v2185
        %v2191 = vpack.c.b16 %v2187, %v2186
        %v2192 = vpack.c.b16 %v2188, %v2188
        %2193 = vrot.lane.b32.xlu0 %v2189, 1
        %v2194 = vpop.permute.xlu0 %2193
        %2195 = vrot.lane.b32.xlu0 %v2190, 1
        %v2196 = vpop.permute.xlu0 %2195
        %2197 = vrot.lane.b32.xlu0 %v2191, 1
        %v2198 = vpop.permute.xlu0 %2197
        %2199 = vrot.lane.b32.xlu0 %v2192, 1
        %v2200 = vpop.permute.xlu0 %2199
        %v2201 = vrot.slane %v2194, 4
        %v2202 = vrot.slane %v2196, 4
        %v2203 = vrot.slane %v2198, 4
        %v2204 = vrot.slane %v2200, 4
        %v2205 = vsel %vm597, %v2201, %v2202
        %v2206 = vsel %vm780, %v2194, %v2205
        %v2207 = vsel %vm597, %v2203, %v2204
        %v2208 = vsel %vm780, %v2198, %v2207
        %2211 = vst [vmem:[#allocation4 + $0x30] sm:$0xff] %v2206
        %2212 = vst [vmem:[#allocation4 + $0x38] sm:$0xff] %v2208
        %v2213 = vld [vmem:[#allocation2 + $0x8] sm:$0xff]
        %v2214 = vld [vmem:[#allocation2 + $0x10] sm:$0xff]
        %v2215 = vld [vmem:[#allocation2 + $0x28] sm:$0xff]
        %v2216 = vld [vmem:[#allocation2 + $0x30] sm:$0xff]
        %v2217 = vpack.c.bf16 %v2215, %v2213
        %v2218 = vpack.c.bf16 %v2216, %v2214
        %v2221 = vunpack.c.l.b16 %v2217
        %v2222 = vunpack.c.l.b16 %v2218
        %v2223 = vunpack.c.h.b16 %v2217
        %v2224 = vunpack.c.h.b16 %v2218
        %v2225 = vpack.c.b16 %v2222, %v2221
        %v2226 = vpack.c.b16 %v2224, %v2223
        %2229 = vst [vmem:[#allocation4 + $0x40] sm:$0xff] %v2225
        %2230 = vst [vmem:[#allocation4 + $0x48] sm:$0xff] %v2226
        %v2231 = vld [vmem:[#allocation2 + $0x8] sm:$0xff]
        %v2232 = vld [vmem:[#allocation2 + $0x10] sm:$0xff]
        %v2233 = vld [vmem:[#allocation2 + $0x18] sm:$0xff]
        %v2234 = vld [vmem:[#allocation2 + $0x28] sm:$0xff]
        %v2235 = vld [vmem:[#allocation2 + $0x30] sm:$0xff]
        %v2236 = vld [vmem:[#allocation2 + $0x38] sm:$0xff]
        %v2237 = vld [vmem:[%s812] ss:$8 sm:$0x3]
        %v2239 = vlaneseq
        %v2240 = vshrl.u32 %v2239, 7
        %v2241 = vsub.s32 0, %v2240
        %v2242 = vrot.slane %v2237, %v2241
        %v2243 = vlaneseq
        %v2244 = vshrl.u32 %v2243, 7
        %v2245 = vsub.s32 1, %v2244
        %v2246 = vrot.slane %v2237, %v2245
        %2247 = vrot.lane.b32.xlu0 %v2242, 1
        %v2248 = vpop.permute.xlu0 %2247
        %2249 = vrot.lane.b32.xlu0 %v2246, 1
        %v2250 = vpop.permute.xlu0 %2249
        %v2251 = vsel %vm827, %v2248, %v2250
        %v2255 = vmul.f32 %v2231, %v2248
        %v2256 = vmul.f32 %v2232, %v2251
        %v2257 = vmul.f32 %v2233, %v2250
        %v2258 = vmul.f32 %v2234, %v2248
        %v2259 = vmul.f32 %v2235, %v2251
        %v2260 = vmul.f32 %v2236, %v2250
        %v2261 = vpack.c.bf16 %v2258, %v2255
        %v2262 = vpack.c.bf16 %v2259, %v2256
        %v2263 = vpack.c.bf16 %v2260, %v2257
        %v2267 = vunpack.c.l.b16 %v2261
        %v2268 = vunpack.c.l.b16 %v2262
        %v2269 = vunpack.c.l.b16 %v2263
        %v2270 = vunpack.c.h.b16 %v2261
        %v2271 = vunpack.c.h.b16 %v2262
        %v2272 = vunpack.c.h.b16 %v2263
        %v2273 = vpack.c.b16 %v2268, %v2267
        %v2274 = vpack.c.b16 %v2269, %v2269
        %v2275 = vpack.c.b16 %v2271, %v2270
        %v2276 = vpack.c.b16 %v2272, %v2272
        %2277 = vrot.lane.b32.xlu0 %v2273, 127
        %v2278 = vpop.permute.xlu0 %2277
        %2279 = vrot.lane.b32.xlu0 %v2274, 127
        %v2280 = vpop.permute.xlu0 %2279
        %2281 = vrot.lane.b32.xlu0 %v2275, 127
        %v2282 = vpop.permute.xlu0 %2281
        %2283 = vrot.lane.b32.xlu0 %v2276, 127
        %v2284 = vpop.permute.xlu0 %2283
        %v2285 = vrot.slane %v2278, 4
        %v2286 = vrot.slane %v2280, 4
        %v2287 = vrot.slane %v2282, 4
        %v2288 = vrot.slane %v2284, 4
        %v2289 = vsel %vm597, %v2285, %v2286
        %v2290 = vsel %vm867, %v2278, %v2289
        %v2291 = vsel %vm597, %v2287, %v2288
        %v2292 = vsel %vm867, %v2282, %v2291
        %2295 = vst [vmem:[#allocation4 + $0x50] sm:$0xff] %v2290
        %2296 = vst [vmem:[#allocation4 + $0x58] sm:$0xff] %v2292
        %v2297 = vld [vmem:[#allocation2 + $0x8] sm:$0xff]
        %v2298 = vld [vmem:[#allocation2 + $0x10] sm:$0xff]
        %v2299 = vld [vmem:[#allocation2 + $0x18] sm:$0xff]
        %v2300 = vld [vmem:[#allocation2 + $0x28] sm:$0xff]
        %v2301 = vld [vmem:[#allocation2 + $0x30] sm:$0xff]
        %v2302 = vld [vmem:[#allocation2 + $0x38] sm:$0xff]
        %v2303 = vld [vmem:[%s881] ss:$8 sm:$0x3]
        %v2305 = vlaneseq
        %v2306 = vshrl.u32 %v2305, 7
        %v2307 = vsub.s32 0, %v2306
        %v2308 = vrot.slane %v2303, %v2307
        %v2309 = vlaneseq
        %v2310 = vshrl.u32 %v2309, 7
        %v2311 = vsub.s32 1, %v2310
        %v2312 = vrot.slane %v2303, %v2311
        %2313 = vrot.lane.b32.xlu0 %v2308, 15
        %v2314 = vpop.permute.xlu0 %2313
        %2315 = vrot.lane.b32.xlu0 %v2312, 15
        %v2316 = vpop.permute.xlu0 %2315
        %v2317 = vsel %vm896, %v2314, %v2316
        %v2321 = vmul.f32 %v2297, %v2314
        %v2322 = vmul.f32 %v2298, %v2317
        %v2323 = vmul.f32 %v2299, %v2316
        %v2324 = vmul.f32 %v2300, %v2314
        %v2325 = vmul.f32 %v2301, %v2317
        %v2326 = vmul.f32 %v2302, %v2316
        %v2327 = vpack.c.bf16 %v2324, %v2321
        %v2328 = vpack.c.bf16 %v2325, %v2322
        %v2329 = vpack.c.bf16 %v2326, %v2323
        %v2333 = vunpack.c.l.b16 %v2327
        %v2334 = vunpack.c.l.b16 %v2328
        %v2335 = vunpack.c.l.b16 %v2329
        %v2336 = vunpack.c.h.b16 %v2327
        %v2337 = vunpack.c.h.b16 %v2328
        %v2338 = vunpack.c.h.b16 %v2329
        %v2339 = vpack.c.b16 %v2334, %v2333
        %v2340 = vpack.c.b16 %v2335, %v2335
        %v2341 = vpack.c.b16 %v2337, %v2336
        %v2342 = vpack.c.b16 %v2338, %v2338
        %2343 = vrot.lane.b32.xlu0 %v2339, 113
        %v2344 = vpop.permute.xlu0 %2343
        %2345 = vrot.lane.b32.xlu0 %v2340, 113
        %v2346 = vpop.permute.xlu0 %2345
        %2347 = vrot.lane.b32.xlu0 %v2341, 113
        %v2348 = vpop.permute.xlu0 %2347
        %2349 = vrot.lane.b32.xlu0 %v2342, 113
        %v2350 = vpop.permute.xlu0 %2349
        %v2351 = vrot.slane %v2344, 4
        %v2352 = vrot.slane %v2346, 4
        %v2353 = vrot.slane %v2348, 4
        %v2354 = vrot.slane %v2350, 4
        %v2355 = vsel %vm597, %v2351, %v2352
        %v2356 = vsel %vm936, %v2344, %v2355
        %v2357 = vsel %vm597, %v2353, %v2354
        %v2358 = vsel %vm936, %v2348, %v2357
        %2361 = vst [vmem:[#allocation4 + $0x60] sm:$0xff] %v2356
        %2362 = vst [vmem:[#allocation4 + $0x68] sm:$0xff] %v2358
        %v2363 = vld [vmem:[#allocation2 + $0x8] sm:$0xff]
        %v2364 = vld [vmem:[#allocation2 + $0x10] sm:$0xff]
        %v2365 = vld [vmem:[#allocation2 + $0x18] sm:$0xff]
        %v2366 = vld [vmem:[#allocation2 + $0x28] sm:$0xff]
        %v2367 = vld [vmem:[#allocation2 + $0x30] sm:$0xff]
        %v2368 = vld [vmem:[#allocation2 + $0x38] sm:$0xff]
        %v2369 = vpack.c.bf16 %v2366, %v2363
        %v2370 = vpack.c.bf16 %v2367, %v2364
        %v2371 = vpack.c.bf16 %v2368, %v2365
        %v2375 = vunpack.c.l.b16 %v2369
        %v2376 = vunpack.c.l.b16 %v2370
        %v2377 = vunpack.c.l.b16 %v2371
        %v2378 = vunpack.c.h.b16 %v2369
        %v2379 = vunpack.c.h.b16 %v2370
        %v2380 = vunpack.c.h.b16 %v2371
        %v2381 = vpack.c.b16 %v2376, %v2375
        %v2382 = vpack.c.b16 %v2377, %v2377
        %v2383 = vpack.c.b16 %v2379, %v2378
        %v2384 = vpack.c.b16 %v2380, %v2380
        %2385 = vrot.lane.b32.xlu0 %v2381, 112
        %v2386 = vpop.permute.xlu0 %2385
        %2387 = vrot.lane.b32.xlu0 %v2382, 112
        %v2388 = vpop.permute.xlu0 %2387
        %2389 = vrot.lane.b32.xlu0 %v2383, 112
        %v2390 = vpop.permute.xlu0 %2389
        %2391 = vrot.lane.b32.xlu0 %v2384, 112
        %v2392 = vpop.permute.xlu0 %2391
        %v2393 = vrot.slane %v2386, 4
        %v2394 = vrot.slane %v2388, 4
        %v2395 = vrot.slane %v2390, 4
        %v2396 = vrot.slane %v2392, 4
        %v2397 = vsel %vm597, %v2393, %v2394
        %v2398 = vsel %vm979, %v2386, %v2397
        %v2399 = vsel %vm597, %v2395, %v2396
        %v2400 = vsel %vm979, %v2390, %v2399
        %2403 = vst [vmem:[#allocation4 + $0x70] sm:$0xff] %v2398
        %2404 = vst [vmem:[#allocation4 + $0x78] sm:$0xff] %v2400
        %v2405 = vld [vmem:[#allocation2 + $0x8] sm:$0xff]
        %v2406 = vld [vmem:[#allocation2 + $0x10] sm:$0xff]
        %v2407 = vld [vmem:[#allocation2 + $0x18] sm:$0xff]
        %v2408 = vld [vmem:[#allocation2 + $0x28] sm:$0xff]
        %v2409 = vld [vmem:[#allocation2 + $0x30] sm:$0xff]
        %v2410 = vld [vmem:[#allocation2 + $0x38] sm:$0xff]
        %v2411 = vld [vmem:[%s993] ss:$8 sm:$0x3]
        %v2413 = vlaneseq
        %v2414 = vshrl.u32 %v2413, 7
        %v2415 = vsub.s32 0, %v2414
        %v2416 = vrot.slane %v2411, %v2415
        %v2417 = vlaneseq
        %v2418 = vshrl.u32 %v2417, 7
        %v2419 = vsub.s32 1, %v2418
        %v2420 = vrot.slane %v2411, %v2419
        %2421 = vrot.lane.b32.xlu0 %v2416, 17
        %v2422 = vpop.permute.xlu0 %2421
        %2423 = vrot.lane.b32.xlu0 %v2420, 17
        %v2424 = vpop.permute.xlu0 %2423
        %v2425 = vsel %vm1008, %v2422, %v2424
        %v2429 = vmul.f32 %v2405, %v2422
        %v2430 = vmul.f32 %v2406, %v2425
        %v2431 = vmul.f32 %v2407, %v2424
        %v2432 = vmul.f32 %v2408, %v2422
        %v2433 = vmul.f32 %v2409, %v2425
        %v2434 = vmul.f32 %v2410, %v2424
        %v2435 = vpack.c.bf16 %v2432, %v2429
        %v2436 = vpack.c.bf16 %v2433, %v2430
        %v2437 = vpack.c.bf16 %v2434, %v2431
        %v2441 = vunpack.c.l.b16 %v2435
        %v2442 = vunpack.c.l.b16 %v2436
        %v2443 = vunpack.c.l.b16 %v2437
        %v2444 = vunpack.c.h.b16 %v2435
        %v2445 = vunpack.c.h.b16 %v2436
        %v2446 = vunpack.c.h.b16 %v2437
        %v2447 = vpack.c.b16 %v2442, %v2441
        %v2448 = vpack.c.b16 %v2443, %v2443
        %v2449 = vpack.c.b16 %v2445, %v2444
        %v2450 = vpack.c.b16 %v2446, %v2446
        %2451 = vrot.lane.b32.xlu0 %v2447, 111
        %v2452 = vpop.permute.xlu0 %2451
        %2453 = vrot.lane.b32.xlu0 %v2448, 111
        %v2454 = vpop.permute.xlu0 %2453
        %2455 = vrot.lane.b32.xlu0 %v2449, 111
        %v2456 = vpop.permute.xlu0 %2455
        %2457 = vrot.lane.b32.xlu0 %v2450, 111
        %v2458 = vpop.permute.xlu0 %2457
        %v2459 = vrot.slane %v2452, 4
        %v2460 = vrot.slane %v2454, 4
        %v2461 = vrot.slane %v2456, 4
        %v2462 = vrot.slane %v2458, 4
        %v2463 = vsel %vm597, %v2459, %v2460
        %v2464 = vsel %vm1048, %v2452, %v2463
        %v2465 = vsel %vm597, %v2461, %v2462
        %v2466 = vsel %vm1048, %v2456, %v2465
        %2469 = vst [vmem:[#allocation4 + $0x80] sm:$0xff] %v2464
        %2470 = vst [vmem:[#allocation4 + $0x88] sm:$0xff] %v2466
        %v2471 = vld [vmem:[#allocation14] sm:$0xff]
        %v2472 = vld [vmem:[#allocation14 + $0x8] sm:$0xff]
        %v2473 = vld [vmem:[#allocation14 + $0x10] sm:$0xff]
        %v2474 = vld [vmem:[#allocation4] sm:$0xff]
        %v2475 = vld [vmem:[#allocation4 + $0x8] sm:$0xff]
        %v2476 = vld [vmem:[#allocation4 + $0x10] sm:$0xff]
        %v2477 = vld [vmem:[#allocation4 + $0x18] sm:$0xff]
        %v2478 = vld [vmem:[#allocation4 + $0x20] sm:$0xff]
        %v2479 = vld [vmem:[#allocation4 + $0x28] sm:$0xff]
        %v2480 = vld [vmem:[#allocation4 + $0x30] sm:$0xff]
        %v2481 = vld [vmem:[#allocation4 + $0x38] sm:$0xff]
        %v2482 = vld [vmem:[#allocation4 + $0x40] sm:$0xff]
        %v2483 = vld [vmem:[#allocation4 + $0x48] sm:$0xff]
        %v2484 = vld [vmem:[#allocation4 + $0x50] sm:$0xff]
        %v2485 = vld [vmem:[#allocation4 + $0x58] sm:$0xff]
        %v2486 = vld [vmem:[#allocation4 + $0x60] sm:$0xff]
        %v2487 = vld [vmem:[#allocation4 + $0x68] sm:$0xff]
        %v2488 = vld [vmem:[#allocation4 + $0x70] sm:$0xff]
        %v2489 = vld [vmem:[#allocation4 + $0x78] sm:$0xff]
        %v2490 = vld [vmem:[#allocation4 + $0x80] sm:$0xff]
        %v2491 = vld [vmem:[#allocation4 + $0x88] sm:$0xff]
        %v2492 = vld [vmem:[%s8] sm:$0xff]
        %v2493 = vld [vmem:[%s8 + $0x8] sm:$0xff]
        %v2494 = vld [vmem:[%s8 + $0x10] sm:$0xff]
        %2496 = vset.pattern.permute.xlu0 0
        %2497 = vperm.xlu0 %2496, %v2492
        %v2498 = vpop.permute.xlu0 %2497
        %2501 = vset.pattern.permute.xlu0 0
        %2502 = vperm.xlu0 %2501, %v2493
        %v2503 = vpop.permute.xlu0 %2502
        %2506 = vset.pattern.permute.xlu0 0
        %2507 = vperm.xlu0 %2506, %v2494
        %v2508 = vpop.permute.xlu0 %2507
        %v2513 = vunpack.c.l.b16 %v2471
        %v2514 = vunpack.c.h.b16 %v2471
        %v2515 = vunpack.c.l.b16 %v2472
        %v2516 = vunpack.c.h.b16 %v2472
        %v2517 = vunpack.c.l.b16 %v2473
        %v2518 = vunpack.c.h.b16 %v2473
        %v2519 = vpack.c.b16 %v2515, %v2513
        %v2520 = vpack.c.b16 %v2516, %v2514
        %v2521 = vpack.c.b16 %v2517, %v2517
        %v2522 = vpack.c.b16 %v2518, %v2518
        %v2543 = vunpack.c.l.b16 %v2474
        %v2544 = vunpack.c.h.b16 %v2474
        %v2545 = vunpack.c.l.b16 %v2475
        %v2546 = vunpack.c.h.b16 %v2475
        %v2547 = vunpack.c.l.b16 %v2476
        %v2548 = vunpack.c.h.b16 %v2476
        %v2549 = vunpack.c.l.b16 %v2477
        %v2550 = vunpack.c.h.b16 %v2477
        %v2551 = vunpack.c.l.b16 %v2478
        %v2552 = vunpack.c.h.b16 %v2478
        %v2553 = vunpack.c.l.b16 %v2479
        %v2554 = vunpack.c.h.b16 %v2479
        %v2555 = vunpack.c.l.b16 %v2480
        %v2556 = vunpack.c.h.b16 %v2480
        %v2557 = vunpack.c.l.b16 %v2481
        %v2558 = vunpack.c.h.b16 %v2481
        %v2559 = vunpack.c.l.b16 %v2482
        %v2560 = vunpack.c.h.b16 %v2482
        %v2561 = vunpack.c.l.b16 %v2483
        %v2562 = vunpack.c.h.b16 %v2483
        %v2563 = vunpack.c.l.b16 %v2484
        %v2564 = vunpack.c.h.b16 %v2484
        %v2565 = vunpack.c.l.b16 %v2485
        %v2566 = vunpack.c.h.b16 %v2485
        %v2567 = vunpack.c.l.b16 %v2486
        %v2568 = vunpack.c.h.b16 %v2486
        %v2569 = vunpack.c.l.b16 %v2487
        %v2570 = vunpack.c.h.b16 %v2487
        %v2571 = vunpack.c.l.b16 %v2488
        %v2572 = vunpack.c.h.b16 %v2488
        %v2573 = vunpack.c.l.b16 %v2489
        %v2574 = vunpack.c.h.b16 %v2489
        %v2575 = vunpack.c.l.b16 %v2490
        %v2576 = vunpack.c.h.b16 %v2490
        %v2577 = vunpack.c.l.b16 %v2491
        %v2578 = vunpack.c.h.b16 %v2491
        %v2579 = vpack.c.b16 %v2545, %v2543
        %v2580 = vpack.c.b16 %v2546, %v2544
        %v2581 = vpack.c.b16 %v2549, %v2547
        %v2582 = vpack.c.b16 %v2550, %v2548
        %v2583 = vpack.c.b16 %v2553, %v2551
        %v2584 = vpack.c.b16 %v2554, %v2552
        %v2585 = vpack.c.b16 %v2557, %v2555
        %v2586 = vpack.c.b16 %v2558, %v2556
        %v2587 = vpack.c.b16 %v2561, %v2559
        %v2588 = vpack.c.b16 %v2562, %v2560
        %v2589 = vpack.c.b16 %v2565, %v2563
        %v2590 = vpack.c.b16 %v2566, %v2564
        %v2591 = vpack.c.b16 %v2569, %v2567
        %v2592 = vpack.c.b16 %v2570, %v2568
        %v2593 = vpack.c.b16 %v2573, %v2571
        %v2594 = vpack.c.b16 %v2574, %v2572
        %v2595 = vpack.c.b16 %v2577, %v2575
        %v2596 = vpack.c.b16 %v2578, %v2576
        %v2616 = vsel %vm1200, %v2520, 0
        %v2619 = vsel %vm1200, %v2522, 0
        %2621 = vmatprep.subr.bf16.mxu0 %v2594
        %2622 = vmatpush1.bf16.msra.mxu0 %v2593
        %2623 = vmatprep.subr.bf16.mxu0 %v2592
        %2624 = vmatpush1.bf16.msra.mxu0 %v2591
        %2625 = vmatprep.subr.bf16.mxu0 %v2590
        %2626 = vmatpush1.bf16.msra.mxu0 %v2589
        %2627 = vmatprep.subr.bf16.mxu0 %v2588
        %2628 = vmatpush1.bf16.msra.mxu0 %v2587
        %2629 = vmatprep.subr.bf16.mxu0 %v2586
        %2630 = vmatpush1.bf16.msra.mxu0 %v2585
        %2631 = vmatprep.subr.bf16.mxu0 %v2584
        %2632 = vmatpush1.bf16.msra.mxu0 %v2583
        %2633 = vmatprep.subr.bf16.mxu0 %v2582
        %2634 = vmatpush1.bf16.msra.mxu0 %v2581
        %2635 = vmatprep.subr.bf16.mxu0 %v2580
        %2636 = vmatpush1.bf16.msra.mxu0 %v2579
        %2637 = vmatprep.subr.bf16.mxu0 0
        %2638 = vmatpush2.bf16.msra.mxu0 0
        %2639 = vmatprep.subr.bf16.mxu0 0
        %2640 = vmatpush2.bf16.msra.mxu0 0
        %2641 = vmatprep.subr.bf16.mxu0 0
        %2642 = vmatpush2.bf16.msra.mxu0 0
        %2643 = vmatprep.subr.bf16.mxu0 0
        %2644 = vmatpush2.bf16.msra.mxu0 0
        %2645 = vmatprep.subr.bf16.mxu0 0
        %2646 = vmatpush2.bf16.msra.mxu0 0
        %2647 = vmatprep.subr.bf16.mxu0 0
        %2648 = vmatpush2.bf16.msra.mxu0 0
        %2649 = vmatprep.subr.bf16.mxu0 0
        %2650 = vmatpush2.bf16.msra.mxu0 0
        %2651 = vmatprep.subr.bf16.mxu0 %v2596
        %2652 = vmatpush2.bf16.msra.mxu0 %v2595
        %2653 = vmatprep.mubr.bf16.mxu0 %v2616
        %2654 = vmatmul.mubr.bf16.gmra.mxu0 %v2519
        %v2655 = vpop.f32.mrf.mxu0
        %v2656 = vadd.f32 %v2498, %v2655
        %v2657 = vpop.f32.mrf.mxu0
        %v2658 = vadd.f32 %v2498, %v2657
        %v2659 = vpop.f32.mrf.mxu0
        %v2660 = vadd.f32 %v2503, %v2659
        %v2661 = vpop.f32.mrf.mxu0
        %v2662 = vadd.f32 %v2503, %v2661
        %2663 = vmatprep.mubr.bf16.mxu0 %v2619
        %2664 = vmatmul.mubr.bf16.gmra.mxu0 %v2521
        %v2665 = vpop.f32.mrf.mxu0
        %v2666 = vadd.f32 %v2508, %v2665
        %v2667 = vpop.f32.mrf.mxu0
        %v2668 = vadd.f32 %v2508, %v2667
        %v2669 = vpop.f32.mrf.mxu0
        %v2670 = vpop.f32.mrf.mxu0
        %2671 = vdwg.mxu0
        %v2672 = vxor.u32 %v2656, 2147483648
        %v2673 = vxor.u32 %v2658, 2147483648
        %v2674 = vmul.f32 %v2672, 1.442695
        %v2675 = vpow.pop %v2674
        %v2676 = vmul.f32 %v2673, 1.442695
        %v2677 = vpow.pop %v2676
        %v2678 = vadd.f32 %v2675, 1.0
        %v2679 = vadd.f32 %v2677, 1.0
        %v2680 = vrcp.pop %v2678
        %v2681 = vmul.f32 1.0, %v2680
        %v2682 = vrcp.pop %v2679
        %v2683 = vmul.f32 1.0, %v2682
        %v2684 = vxor.u32 %v2660, 2147483648
        %v2685 = vxor.u32 %v2662, 2147483648
        %v2686 = vmul.f32 %v2684, 1.442695
        %v2687 = vpow.pop %v2686
        %v2688 = vmul.f32 %v2685, 1.442695
        %v2689 = vpow.pop %v2688
        %v2690 = vadd.f32 %v2687, 1.0
        %v2691 = vadd.f32 %v2689, 1.0
        %v2692 = vrcp.pop %v2690
        %v2693 = vmul.f32 1.0, %v2692
        %v2694 = vrcp.pop %v2691
        %v2695 = vmul.f32 1.0, %v2694
        %2696 = vst [vmem:[#allocation3] sm:$0xff] 0.0
        %2697 = vst [vmem:[#allocation3 + $0x20] sm:$0xff] 0.0
        %2698 = vst [vmem:[#allocation3 + $0x18] sm:$0xff] 0.0
        %2699 = vst [vmem:[#allocation3 + $0x38] sm:$0xff] 0.0
        %2700 = vst [vmem:[#allocation3 + $0x28] sm:$0xff] 0.0
        %2701 = vst [vmem:[#allocation3 + $0x30] sm:$0xff] 0.0
        %v2702 = vmul.f32 %v1963, %v2693
        %v2703 = vmul.f32 %v1964, %v2695
        %2704 = vst [vmem:[#allocation3 + $0x8] sm:$0xff] %v2702
        %2705 = vst [vmem:[#allocation3 + $0x10] sm:$0xff] %v2703
        %v2706 = vld [vmem:[#allocation3] sm:$0xff]
        %v2707 = vld [vmem:[#allocation3 + $0x8] sm:$0xff]
        %v2708 = vld [vmem:[#allocation3 + $0x10] sm:$0xff]
        %v2709 = vld [vmem:[#allocation3 + $0x20] sm:$0xff]
        %v2710 = vld [vmem:[#allocation3 + $0x28] sm:$0xff]
        %v2711 = vld [vmem:[#allocation3 + $0x30] sm:$0xff]
        %v2712 = vld [vmem:[#allocation11] ss:$8 sm:$0x3]
        %v2714 = vlaneseq
        %v2715 = vshrl.u32 %v2714, 7
        %v2716 = vsub.s32 0, %v2715
        %v2717 = vrot.slane %v2712, %v2716
        %v2718 = vlaneseq
        %v2719 = vshrl.u32 %v2718, 7
        %v2720 = vsub.s32 1, %v2719
        %v2721 = vrot.slane %v2712, %v2720
        %2722 = vrot.lane.b32.xlu0 %v2717, 111
        %v2723 = vpop.permute.xlu0 %2722
        %2724 = vrot.lane.b32.xlu0 %v2721, 111
        %v2725 = vpop.permute.xlu0 %2724
        %v2726 = vsel %vm558, %v2723, %v2725
        %v2730 = vmul.f32 %v2706, %v2723
        %v2731 = vmul.f32 %v2707, %v2726
        %v2732 = vmul.f32 %v2708, %v2725
        %v2733 = vmul.f32 %v2709, %v2723
        %v2734 = vmul.f32 %v2710, %v2726
        %v2735 = vmul.f32 %v2711, %v2725
        %v2736 = vpack.c.bf16 %v2733, %v2730
        %v2737 = vpack.c.bf16 %v2734, %v2731
        %v2738 = vpack.c.bf16 %v2735, %v2732
        %v2742 = vunpack.c.l.b16 %v2736
        %v2743 = vunpack.c.l.b16 %v2737
        %v2744 = vunpack.c.l.b16 %v2738
        %v2745 = vunpack.c.h.b16 %v2736
        %v2746 = vunpack.c.h.b16 %v2737
        %v2747 = vunpack.c.h.b16 %v2738
        %v2748 = vpack.c.b16 %v2743, %v2742
        %v2749 = vpack.c.b16 %v2744, %v2744
        %v2750 = vpack.c.b16 %v2746, %v2745
        %v2751 = vpack.c.b16 %v2747, %v2747
        %2752 = vrot.lane.b32.xlu0 %v2748, 17
        %v2753 = vpop.permute.xlu0 %2752
        %2754 = vrot.lane.b32.xlu0 %v2749, 17
        %v2755 = vpop.permute.xlu0 %2754
        %2756 = vrot.lane.b32.xlu0 %v2750, 17
        %v2757 = vpop.permute.xlu0 %2756
        %2758 = vrot.lane.b32.xlu0 %v2751, 17
        %v2759 = vpop.permute.xlu0 %2758
        %v2760 = vrot.slane %v2753, 4
        %v2761 = vrot.slane %v2755, 4
        %v2762 = vrot.slane %v2757, 4
        %v2763 = vrot.slane %v2759, 4
        %v2764 = vsel %vm597, %v2760, %v2761
        %v2765 = vsel %vm599, %v2753, %v2764
        %v2766 = vsel %vm597, %v2762, %v2763
        %v2767 = vsel %vm599, %v2757, %v2766
        %2770 = vst [vmem:[#allocation5] sm:$0xff] %v2765
        %2771 = vst [vmem:[#allocation5 + $0x8] sm:$0xff] %v2767
        %v2772 = vld [vmem:[#allocation3] sm:$0xff]
        %v2773 = vld [vmem:[#allocation3 + $0x8] sm:$0xff]
        %v2774 = vld [vmem:[#allocation3 + $0x10] sm:$0xff]
        %v2775 = vld [vmem:[#allocation3 + $0x20] sm:$0xff]
        %v2776 = vld [vmem:[#allocation3 + $0x28] sm:$0xff]
        %v2777 = vld [vmem:[#allocation3 + $0x30] sm:$0xff]
        %v2778 = vpack.c.bf16 %v2775, %v2772
        %v2779 = vpack.c.bf16 %v2776, %v2773
        %v2780 = vpack.c.bf16 %v2777, %v2774
        %v2784 = vunpack.c.l.b16 %v2778
        %v2785 = vunpack.c.l.b16 %v2779
        %v2786 = vunpack.c.l.b16 %v2780
        %v2787 = vunpack.c.h.b16 %v2778
        %v2788 = vunpack.c.h.b16 %v2779
        %v2789 = vunpack.c.h.b16 %v2780
        %v2790 = vpack.c.b16 %v2785, %v2784
        %v2791 = vpack.c.b16 %v2786, %v2786
        %v2792 = vpack.c.b16 %v2788, %v2787
        %v2793 = vpack.c.b16 %v2789, %v2789
        %2794 = vrot.lane.b32.xlu0 %v2790, 16
        %v2795 = vpop.permute.xlu0 %2794
        %2796 = vrot.lane.b32.xlu0 %v2791, 16
        %v2797 = vpop.permute.xlu0 %2796
        %2798 = vrot.lane.b32.xlu0 %v2792, 16
        %v2799 = vpop.permute.xlu0 %2798
        %2800 = vrot.lane.b32.xlu0 %v2793, 16
        %v2801 = vpop.permute.xlu0 %2800
        %v2802 = vrot.slane %v2795, 4
        %v2803 = vrot.slane %v2797, 4
        %v2804 = vrot.slane %v2799, 4
        %v2805 = vrot.slane %v2801, 4
        %v2806 = vsel %vm597, %v2802, %v2803
        %v2807 = vsel %vm642, %v2795, %v2806
        %v2808 = vsel %vm597, %v2804, %v2805
        %v2809 = vsel %vm642, %v2799, %v2808
        %2812 = vst [vmem:[#allocation5 + $0x10] sm:$0xff] %v2807
        %2813 = vst [vmem:[#allocation5 + $0x18] sm:$0xff] %v2809
        %v2814 = vld [vmem:[#allocation3] sm:$0xff]
        %v2815 = vld [vmem:[#allocation3 + $0x8] sm:$0xff]
        %v2816 = vld [vmem:[#allocation3 + $0x10] sm:$0xff]
        %v2817 = vld [vmem:[#allocation3 + $0x20] sm:$0xff]
        %v2818 = vld [vmem:[#allocation3 + $0x28] sm:$0xff]
        %v2819 = vld [vmem:[#allocation3 + $0x30] sm:$0xff]
        %v2820 = vld [vmem:[%s656] ss:$8 sm:$0x3]
        %v2822 = vlaneseq
        %v2823 = vshrl.u32 %v2822, 7
        %v2824 = vsub.s32 0, %v2823
        %v2825 = vrot.slane %v2820, %v2824
        %v2826 = vlaneseq
        %v2827 = vshrl.u32 %v2826, 7
        %v2828 = vsub.s32 1, %v2827
        %v2829 = vrot.slane %v2820, %v2828
        %2830 = vrot.lane.b32.xlu0 %v2825, 113
        %v2831 = vpop.permute.xlu0 %2830
        %2832 = vrot.lane.b32.xlu0 %v2829, 113
        %v2833 = vpop.permute.xlu0 %2832
        %v2834 = vsel %vm671, %v2831, %v2833
        %v2838 = vmul.f32 %v2814, %v2831
        %v2839 = vmul.f32 %v2815, %v2834
        %v2840 = vmul.f32 %v2816, %v2833
        %v2841 = vmul.f32 %v2817, %v2831
        %v2842 = vmul.f32 %v2818, %v2834
        %v2843 = vmul.f32 %v2819, %v2833
        %v2844 = vpack.c.bf16 %v2841, %v2838
        %v2845 = vpack.c.bf16 %v2842, %v2839
        %v2846 = vpack.c.bf16 %v2843, %v2840
        %v2850 = vunpack.c.l.b16 %v2844
        %v2851 = vunpack.c.l.b16 %v2845
        %v2852 = vunpack.c.l.b16 %v2846
        %v2853 = vunpack.c.h.b16 %v2844
        %v2854 = vunpack.c.h.b16 %v2845
        %v2855 = vunpack.c.h.b16 %v2846
        %v2856 = vpack.c.b16 %v2851, %v2850
        %v2857 = vpack.c.b16 %v2852, %v2852
        %v2858 = vpack.c.b16 %v2854, %v2853
        %v2859 = vpack.c.b16 %v2855, %v2855
        %2860 = vrot.lane.b32.xlu0 %v2856, 15
        %v2861 = vpop.permute.xlu0 %2860
        %2862 = vrot.lane.b32.xlu0 %v2857, 15
        %v2863 = vpop.permute.xlu0 %2862
        %2864 = vrot.lane.b32.xlu0 %v2858, 15
        %v2865 = vpop.permute.xlu0 %2864
        %2866 = vrot.lane.b32.xlu0 %v2859, 15
        %v2867 = vpop.permute.xlu0 %2866
        %v2868 = vrot.slane %v2861, 4
        %v2869 = vrot.slane %v2863, 4
        %v2870 = vrot.slane %v2865, 4
        %v2871 = vrot.slane %v2867, 4
        %v2872 = vsel %vm597, %v2868, %v2869
        %v2873 = vsel %vm711, %v2861, %v2872
        %v2874 = vsel %vm597, %v2870, %v2871
        %v2875 = vsel %vm711, %v2865, %v2874
        %2878 = vst [vmem:[#allocation5 + $0x20] sm:$0xff] %v2873
        %2879 = vst [vmem:[#allocation5 + $0x28] sm:$0xff] %v2875
        %v2880 = vld [vmem:[#allocation3] sm:$0xff]
        %v2881 = vld [vmem:[#allocation3 + $0x8] sm:$0xff]
        %v2882 = vld [vmem:[#allocation3 + $0x10] sm:$0xff]
        %v2883 = vld [vmem:[#allocation3 + $0x20] sm:$0xff]
        %v2884 = vld [vmem:[#allocation3 + $0x28] sm:$0xff]
        %v2885 = vld [vmem:[#allocation3 + $0x30] sm:$0xff]
        %v2886 = vld [vmem:[%s725] ss:$8 sm:$0x3]
        %v2888 = vlaneseq
        %v2889 = vshrl.u32 %v2888, 7
        %v2890 = vsub.s32 0, %v2889
        %v2891 = vrot.slane %v2886, %v2890
        %v2892 = vlaneseq
        %v2893 = vshrl.u32 %v2892, 7
        %v2894 = vsub.s32 1, %v2893
        %v2895 = vrot.slane %v2886, %v2894
        %2896 = vrot.lane.b32.xlu0 %v2891, 127
        %v2897 = vpop.permute.xlu0 %2896
        %2898 = vrot.lane.b32.xlu0 %v2895, 127
        %v2899 = vpop.permute.xlu0 %2898
        %v2900 = vsel %vm740, %v2897, %v2899
        %v2904 = vmul.f32 %v2880, %v2897
        %v2905 = vmul.f32 %v2881, %v2900
        %v2906 = vmul.f32 %v2882, %v2899
        %v2907 = vmul.f32 %v2883, %v2897
        %v2908 = vmul.f32 %v2884, %v2900
        %v2909 = vmul.f32 %v2885, %v2899
        %v2910 = vpack.c.bf16 %v2907, %v2904
        %v2911 = vpack.c.bf16 %v2908, %v2905
        %v2912 = vpack.c.bf16 %v2909, %v2906
        %v2916 = vunpack.c.l.b16 %v2910
        %v2917 = vunpack.c.l.b16 %v2911
        %v2918 = vunpack.c.l.b16 %v2912
        %v2919 = vunpack.c.h.b16 %v2910
        %v2920 = vunpack.c.h.b16 %v2911
        %v2921 = vunpack.c.h.b16 %v2912
        %v2922 = vpack.c.b16 %v2917, %v2916
        %v2923 = vpack.c.b16 %v2918, %v2918
        %v2924 = vpack.c.b16 %v2920, %v2919
        %v2925 = vpack.c.b16 %v2921, %v2921
        %2926 = vrot.lane.b32.xlu0 %v2922, 1
        %v2927 = vpop.permute.xlu0 %2926
        %2928 = vrot.lane.b32.xlu0 %v2923, 1
        %v2929 = vpop.permute.xlu0 %2928
        %2930 = vrot.lane.b32.xlu0 %v2924, 1
        %v2931 = vpop.permute.xlu0 %2930
        %2932 = vrot.lane.b32.xlu0 %v2925, 1
        %v2933 = vpop.permute.xlu0 %2932
        %v2934 = vrot.slane %v2927, 4
        %v2935 = vrot.slane %v2929, 4
        %v2936 = vrot.slane %v2931, 4
        %v2937 = vrot.slane %v2933, 4
        %v2938 = vsel %vm597, %v2934, %v2935
        %v2939 = vsel %vm780, %v2927, %v2938
        %v2940 = vsel %vm597, %v2936, %v2937
        %v2941 = vsel %vm780, %v2931, %v2940
        %2944 = vst [vmem:[#allocation5 + $0x30] sm:$0xff] %v2939
        %2945 = vst [vmem:[#allocation5 + $0x38] sm:$0xff] %v2941
        %v2946 = vld [vmem:[#allocation3 + $0x8] sm:$0xff]
        %v2947 = vld [vmem:[#allocation3 + $0x10] sm:$0xff]
        %v2948 = vld [vmem:[#allocation3 + $0x28] sm:$0xff]
        %v2949 = vld [vmem:[#allocation3 + $0x30] sm:$0xff]
        %v2950 = vpack.c.bf16 %v2948, %v2946
        %v2951 = vpack.c.bf16 %v2949, %v2947
        %v2954 = vunpack.c.l.b16 %v2950
        %v2955 = vunpack.c.l.b16 %v2951
        %v2956 = vunpack.c.h.b16 %v2950
        %v2957 = vunpack.c.h.b16 %v2951
        %v2958 = vpack.c.b16 %v2955, %v2954
        %v2959 = vpack.c.b16 %v2957, %v2956
        %2962 = vst [vmem:[#allocation5 + $0x40] sm:$0xff] %v2958
        %2963 = vst [vmem:[#allocation5 + $0x48] sm:$0xff] %v2959
        %v2964 = vld [vmem:[#allocation3 + $0x8] sm:$0xff]
        %v2965 = vld [vmem:[#allocation3 + $0x10] sm:$0xff]
        %v2966 = vld [vmem:[#allocation3 + $0x18] sm:$0xff]
        %v2967 = vld [vmem:[#allocation3 + $0x28] sm:$0xff]
        %v2968 = vld [vmem:[#allocation3 + $0x30] sm:$0xff]
        %v2969 = vld [vmem:[#allocation3 + $0x38] sm:$0xff]
        %v2970 = vld [vmem:[%s812] ss:$8 sm:$0x3]
        %v2972 = vlaneseq
        %v2973 = vshrl.u32 %v2972, 7
        %v2974 = vsub.s32 0, %v2973
        %v2975 = vrot.slane %v2970, %v2974
        %v2976 = vlaneseq
        %v2977 = vshrl.u32 %v2976, 7
        %v2978 = vsub.s32 1, %v2977
        %v2979 = vrot.slane %v2970, %v2978
        %2980 = vrot.lane.b32.xlu0 %v2975, 1
        %v2981 = vpop.permute.xlu0 %2980
        %2982 = vrot.lane.b32.xlu0 %v2979, 1
        %v2983 = vpop.permute.xlu0 %2982
        %v2984 = vsel %vm827, %v2981, %v2983
        %v2988 = vmul.f32 %v2964, %v2981
        %v2989 = vmul.f32 %v2965, %v2984
        %v2990 = vmul.f32 %v2966, %v2983
        %v2991 = vmul.f32 %v2967, %v2981
        %v2992 = vmul.f32 %v2968, %v2984
        %v2993 = vmul.f32 %v2969, %v2983
        %v2994 = vpack.c.bf16 %v2991, %v2988
        %v2995 = vpack.c.bf16 %v2992, %v2989
        %v2996 = vpack.c.bf16 %v2993, %v2990
        %v3000 = vunpack.c.l.b16 %v2994
        %v3001 = vunpack.c.l.b16 %v2995
        %v3002 = vunpack.c.l.b16 %v2996
        %v3003 = vunpack.c.h.b16 %v2994
        %v3004 = vunpack.c.h.b16 %v2995
        %v3005 = vunpack.c.h.b16 %v2996
        %v3006 = vpack.c.b16 %v3001, %v3000
        %v3007 = vpack.c.b16 %v3002, %v3002
        %v3008 = vpack.c.b16 %v3004, %v3003
        %v3009 = vpack.c.b16 %v3005, %v3005
        %3010 = vrot.lane.b32.xlu0 %v3006, 127
        %v3011 = vpop.permute.xlu0 %3010
        %3012 = vrot.lane.b32.xlu0 %v3007, 127
        %v3013 = vpop.permute.xlu0 %3012
        %3014 = vrot.lane.b32.xlu0 %v3008, 127
        %v3015 = vpop.permute.xlu0 %3014
        %3016 = vrot.lane.b32.xlu0 %v3009, 127
        %v3017 = vpop.permute.xlu0 %3016
        %v3018 = vrot.slane %v3011, 4
        %v3019 = vrot.slane %v3013, 4
        %v3020 = vrot.slane %v3015, 4
        %v3021 = vrot.slane %v3017, 4
        %v3022 = vsel %vm597, %v3018, %v3019
        %v3023 = vsel %vm867, %v3011, %v3022
        %v3024 = vsel %vm597, %v3020, %v3021
        %v3025 = vsel %vm867, %v3015, %v3024
        %3028 = vst [vmem:[#allocation5 + $0x50] sm:$0xff] %v3023
        %3029 = vst [vmem:[#allocation5 + $0x58] sm:$0xff] %v3025
        %v3030 = vld [vmem:[#allocation3 + $0x8] sm:$0xff]
        %v3031 = vld [vmem:[#allocation3 + $0x10] sm:$0xff]
        %v3032 = vld [vmem:[#allocation3 + $0x18] sm:$0xff]
        %v3033 = vld [vmem:[#allocation3 + $0x28] sm:$0xff]
        %v3034 = vld [vmem:[#allocation3 + $0x30] sm:$0xff]
        %v3035 = vld [vmem:[#allocation3 + $0x38] sm:$0xff]
        %v3036 = vld [vmem:[%s881] ss:$8 sm:$0x3]
        %v3038 = vlaneseq
        %v3039 = vshrl.u32 %v3038, 7
        %v3040 = vsub.s32 0, %v3039
        %v3041 = vrot.slane %v3036, %v3040
        %v3042 = vlaneseq
        %v3043 = vshrl.u32 %v3042, 7
        %v3044 = vsub.s32 1, %v3043
        %v3045 = vrot.slane %v3036, %v3044
        %3046 = vrot.lane.b32.xlu0 %v3041, 15
        %v3047 = vpop.permute.xlu0 %3046
        %3048 = vrot.lane.b32.xlu0 %v3045, 15
        %v3049 = vpop.permute.xlu0 %3048
        %v3050 = vsel %vm896, %v3047, %v3049
        %v3054 = vmul.f32 %v3030, %v3047
        %v3055 = vmul.f32 %v3031, %v3050
        %v3056 = vmul.f32 %v3032, %v3049
        %v3057 = vmul.f32 %v3033, %v3047
        %v3058 = vmul.f32 %v3034, %v3050
        %v3059 = vmul.f32 %v3035, %v3049
        %v3060 = vpack.c.bf16 %v3057, %v3054
        %v3061 = vpack.c.bf16 %v3058, %v3055
        %v3062 = vpack.c.bf16 %v3059, %v3056
        %v3066 = vunpack.c.l.b16 %v3060
        %v3067 = vunpack.c.l.b16 %v3061
        %v3068 = vunpack.c.l.b16 %v3062
        %v3069 = vunpack.c.h.b16 %v3060
        %v3070 = vunpack.c.h.b16 %v3061
        %v3071 = vunpack.c.h.b16 %v3062
        %v3072 = vpack.c.b16 %v3067, %v3066
        %v3073 = vpack.c.b16 %v3068, %v3068
        %v3074 = vpack.c.b16 %v3070, %v3069
        %v3075 = vpack.c.b16 %v3071, %v3071
        %3076 = vrot.lane.b32.xlu0 %v3072, 113
        %v3077 = vpop.permute.xlu0 %3076
        %3078 = vrot.lane.b32.xlu0 %v3073, 113
        %v3079 = vpop.permute.xlu0 %3078
        %3080 = vrot.lane.b32.xlu0 %v3074, 113
        %v3081 = vpop.permute.xlu0 %3080
        %3082 = vrot.lane.b32.xlu0 %v3075, 113
        %v3083 = vpop.permute.xlu0 %3082
        %v3084 = vrot.slane %v3077, 4
        %v3085 = vrot.slane %v3079, 4
        %v3086 = vrot.slane %v3081, 4
        %v3087 = vrot.slane %v3083, 4
        %v3088 = vsel %vm597, %v3084, %v3085
        %v3089 = vsel %vm936, %v3077, %v3088
        %v3090 = vsel %vm597, %v3086, %v3087
        %v3091 = vsel %vm936, %v3081, %v3090
        %3094 = vst [vmem:[#allocation5 + $0x60] sm:$0xff] %v3089
        %3095 = vst [vmem:[#allocation5 + $0x68] sm:$0xff] %v3091
        %v3096 = vld [vmem:[#allocation3 + $0x8] sm:$0xff]
        %v3097 = vld [vmem:[#allocation3 + $0x10] sm:$0xff]
        %v3098 = vld [vmem:[#allocation3 + $0x18] sm:$0xff]
        %v3099 = vld [vmem:[#allocation3 + $0x28] sm:$0xff]
        %v3100 = vld [vmem:[#allocation3 + $0x30] sm:$0xff]
        %v3101 = vld [vmem:[#allocation3 + $0x38] sm:$0xff]
        %v3102 = vpack.c.bf16 %v3099, %v3096
        %v3103 = vpack.c.bf16 %v3100, %v3097
        %v3104 = vpack.c.bf16 %v3101, %v3098
        %v3108 = vunpack.c.l.b16 %v3102
        %v3109 = vunpack.c.l.b16 %v3103
        %v3110 = vunpack.c.l.b16 %v3104
        %v3111 = vunpack.c.h.b16 %v3102
        %v3112 = vunpack.c.h.b16 %v3103
        %v3113 = vunpack.c.h.b16 %v3104
        %v3114 = vpack.c.b16 %v3109, %v3108
        %v3115 = vpack.c.b16 %v3110, %v3110
        %v3116 = vpack.c.b16 %v3112, %v3111
        %v3117 = vpack.c.b16 %v3113, %v3113
        %3118 = vrot.lane.b32.xlu0 %v3114, 112
        %v3119 = vpop.permute.xlu0 %3118
        %3120 = vrot.lane.b32.xlu0 %v3115, 112
        %v3121 = vpop.permute.xlu0 %3120
        %3122 = vrot.lane.b32.xlu0 %v3116, 112
        %v3123 = vpop.permute.xlu0 %3122
        %3124 = vrot.lane.b32.xlu0 %v3117, 112
        %v3125 = vpop.permute.xlu0 %3124
        %v3126 = vrot.slane %v3119, 4
        %v3127 = vrot.slane %v3121, 4
        %v3128 = vrot.slane %v3123, 4
        %v3129 = vrot.slane %v3125, 4
        %v3130 = vsel %vm597, %v3126, %v3127
        %v3131 = vsel %vm979, %v3119, %v3130
        %v3132 = vsel %vm597, %v3128, %v3129
        %v3133 = vsel %vm979, %v3123, %v3132
        %3136 = vst [vmem:[#allocation5 + $0x70] sm:$0xff] %v3131
        %3137 = vst [vmem:[#allocation5 + $0x78] sm:$0xff] %v3133
        %v3138 = vld [vmem:[#allocation3 + $0x8] sm:$0xff]
        %v3139 = vld [vmem:[#allocation3 + $0x10] sm:$0xff]
        %v3140 = vld [vmem:[#allocation3 + $0x18] sm:$0xff]
        %v3141 = vld [vmem:[#allocation3 + $0x28] sm:$0xff]
        %v3142 = vld [vmem:[#allocation3 + $0x30] sm:$0xff]
        %v3143 = vld [vmem:[#allocation3 + $0x38] sm:$0xff]
        %v3144 = vld [vmem:[%s993] ss:$8 sm:$0x3]
        %v3146 = vlaneseq
        %v3147 = vshrl.u32 %v3146, 7
        %v3148 = vsub.s32 0, %v3147
        %v3149 = vrot.slane %v3144, %v3148
        %v3150 = vlaneseq
        %v3151 = vshrl.u32 %v3150, 7
        %v3152 = vsub.s32 1, %v3151
        %v3153 = vrot.slane %v3144, %v3152
        %3154 = vrot.lane.b32.xlu0 %v3149, 17
        %v3155 = vpop.permute.xlu0 %3154
        %3156 = vrot.lane.b32.xlu0 %v3153, 17
        %v3157 = vpop.permute.xlu0 %3156
        %v3158 = vsel %vm1008, %v3155, %v3157
        %v3162 = vmul.f32 %v3138, %v3155
        %v3163 = vmul.f32 %v3139, %v3158
        %v3164 = vmul.f32 %v3140, %v3157
        %v3165 = vmul.f32 %v3141, %v3155
        %v3166 = vmul.f32 %v3142, %v3158
        %v3167 = vmul.f32 %v3143, %v3157
        %v3168 = vpack.c.bf16 %v3165, %v3162
        %v3169 = vpack.c.bf16 %v3166, %v3163
        %v3170 = vpack.c.bf16 %v3167, %v3164
        %v3174 = vunpack.c.l.b16 %v3168
        %v3175 = vunpack.c.l.b16 %v3169
        %v3176 = vunpack.c.l.b16 %v3170
        %v3177 = vunpack.c.h.b16 %v3168
        %v3178 = vunpack.c.h.b16 %v3169
        %v3179 = vunpack.c.h.b16 %v3170
        %v3180 = vpack.c.b16 %v3175, %v3174
        %v3181 = vpack.c.b16 %v3176, %v3176
        %v3182 = vpack.c.b16 %v3178, %v3177
        %v3183 = vpack.c.b16 %v3179, %v3179
        %3184 = vrot.lane.b32.xlu0 %v3180, 111
        %v3185 = vpop.permute.xlu0 %3184
        %3186 = vrot.lane.b32.xlu0 %v3181, 111
        %v3187 = vpop.permute.xlu0 %3186
        %3188 = vrot.lane.b32.xlu0 %v3182, 111
        %v3189 = vpop.permute.xlu0 %3188
        %3190 = vrot.lane.b32.xlu0 %v3183, 111
        %v3191 = vpop.permute.xlu0 %3190
        %v3192 = vrot.slane %v3185, 4
        %v3193 = vrot.slane %v3187, 4
        %v3194 = vrot.slane %v3189, 4
        %v3195 = vrot.slane %v3191, 4
        %v3196 = vsel %vm597, %v3192, %v3193
        %v3197 = vsel %vm1048, %v3185, %v3196
        %v3198 = vsel %vm597, %v3194, %v3195
        %v3199 = vsel %vm1048, %v3189, %v3198
        %3202 = vst [vmem:[#allocation5 + $0x80] sm:$0xff] %v3197
        %3203 = vst [vmem:[#allocation5 + $0x88] sm:$0xff] %v3199
        %v3204 = vld [vmem:[%s9] sm:$0xff]
        %v3205 = vld [vmem:[#allocation5] sm:$0xff]
        %v3206 = vld [vmem:[#allocation5 + $0x8] sm:$0xff]
        %v3207 = vld [vmem:[#allocation5 + $0x10] sm:$0xff]
        %v3208 = vld [vmem:[#allocation5 + $0x18] sm:$0xff]
        %v3209 = vld [vmem:[#allocation5 + $0x20] sm:$0xff]
        %v3210 = vld [vmem:[#allocation5 + $0x28] sm:$0xff]
        %v3211 = vld [vmem:[#allocation5 + $0x30] sm:$0xff]
        %v3212 = vld [vmem:[#allocation5 + $0x38] sm:$0xff]
        %v3213 = vld [vmem:[#allocation5 + $0x40] sm:$0xff]
        %v3214 = vld [vmem:[#allocation5 + $0x48] sm:$0xff]
        %v3215 = vld [vmem:[#allocation5 + $0x50] sm:$0xff]
        %v3216 = vld [vmem:[#allocation5 + $0x58] sm:$0xff]
        %v3217 = vld [vmem:[#allocation5 + $0x60] sm:$0xff]
        %v3218 = vld [vmem:[#allocation5 + $0x68] sm:$0xff]
        %v3219 = vld [vmem:[#allocation5 + $0x70] sm:$0xff]
        %v3220 = vld [vmem:[#allocation5 + $0x78] sm:$0xff]
        %v3221 = vld [vmem:[#allocation5 + $0x80] sm:$0xff]
        %v3222 = vld [vmem:[#allocation5 + $0x88] sm:$0xff]
        %v3224 = vunpack.c.l.b16 %v3204
        %v3225 = vunpack.c.h.b16 %v3204
        %v3226 = vpack.c.b16 %v3224, %v3224
        %v3227 = vpack.c.b16 %v3225, %v3225
        %v3247 = vunpack.c.l.b16 %v3205
        %v3248 = vunpack.c.h.b16 %v3205
        %v3249 = vunpack.c.l.b16 %v3206
        %v3250 = vunpack.c.h.b16 %v3206
        %v3251 = vunpack.c.l.b16 %v3207
        %v3252 = vunpack.c.h.b16 %v3207
        %v3253 = vunpack.c.l.b16 %v3208
        %v3254 = vunpack.c.h.b16 %v3208
        %v3255 = vunpack.c.l.b16 %v3209
        %v3256 = vunpack.c.h.b16 %v3209
        %v3257 = vunpack.c.l.b16 %v3210
        %v3258 = vunpack.c.h.b16 %v3210
        %v3259 = vunpack.c.l.b16 %v3211
        %v3260 = vunpack.c.h.b16 %v3211
        %v3261 = vunpack.c.l.b16 %v3212
        %v3262 = vunpack.c.h.b16 %v3212
        %v3263 = vunpack.c.l.b16 %v3213
        %v3264 = vunpack.c.h.b16 %v3213
        %v3265 = vunpack.c.l.b16 %v3214
        %v3266 = vunpack.c.h.b16 %v3214
        %v3267 = vunpack.c.l.b16 %v3215
        %v3268 = vunpack.c.h.b16 %v3215
        %v3269 = vunpack.c.l.b16 %v3216
        %v3270 = vunpack.c.h.b16 %v3216
        %v3271 = vunpack.c.l.b16 %v3217
        %v3272 = vunpack.c.h.b16 %v3217
        %v3273 = vunpack.c.l.b16 %v3218
        %v3274 = vunpack.c.h.b16 %v3218
        %v3275 = vunpack.c.l.b16 %v3219
        %v3276 = vunpack.c.h.b16 %v3219
        %v3277 = vunpack.c.l.b16 %v3220
        %v3278 = vunpack.c.h.b16 %v3220
        %v3279 = vunpack.c.l.b16 %v3221
        %v3280 = vunpack.c.h.b16 %v3221
        %v3281 = vunpack.c.l.b16 %v3222
        %v3282 = vunpack.c.h.b16 %v3222
        %v3283 = vpack.c.b16 %v3249, %v3247
        %v3284 = vpack.c.b16 %v3250, %v3248
        %v3285 = vpack.c.b16 %v3253, %v3251
        %v3286 = vpack.c.b16 %v3254, %v3252
        %v3287 = vpack.c.b16 %v3257, %v3255
        %v3288 = vpack.c.b16 %v3258, %v3256
        %v3289 = vpack.c.b16 %v3261, %v3259
        %v3290 = vpack.c.b16 %v3262, %v3260
        %v3291 = vpack.c.b16 %v3265, %v3263
        %v3292 = vpack.c.b16 %v3266, %v3264
        %v3293 = vpack.c.b16 %v3269, %v3267
        %v3294 = vpack.c.b16 %v3270, %v3268
        %v3295 = vpack.c.b16 %v3273, %v3271
        %v3296 = vpack.c.b16 %v3274, %v3272
        %v3297 = vpack.c.b16 %v3277, %v3275
        %v3298 = vpack.c.b16 %v3278, %v3276
        %v3299 = vpack.c.b16 %v3281, %v3279
        %v3300 = vpack.c.b16 %v3282, %v3280
        %v3320 = vsel %vm1200, %v3227, 0
        %3322 = vmatprep.subr.bf16.mxu0 %v3298
        %3323 = vmatpush1.bf16.msra.mxu0 %v3297
        %3324 = vmatprep.subr.bf16.mxu0 %v3296
        %3325 = vmatpush1.bf16.msra.mxu0 %v3295
        %3326 = vmatprep.subr.bf16.mxu0 %v3294
        %3327 = vmatpush1.bf16.msra.mxu0 %v3293
        %3328 = vmatprep.subr.bf16.mxu0 %v3292
        %3329 = vmatpush1.bf16.msra.mxu0 %v3291
        %3330 = vmatprep.subr.bf16.mxu0 %v3290
        %3331 = vmatpush1.bf16.msra.mxu0 %v3289
        %3332 = vmatprep.subr.bf16.mxu0 %v3288
        %3333 = vmatpush1.bf16.msra.mxu0 %v3287
        %3334 = vmatprep.subr.bf16.mxu0 %v3286
        %3335 = vmatpush1.bf16.msra.mxu0 %v3285
        %3336 = vmatprep.subr.bf16.mxu0 %v3284
        %3337 = vmatpush1.bf16.msra.mxu0 %v3283
        %3338 = vmatprep.subr.bf16.mxu0 0
        %3339 = vmatpush2.bf16.msra.mxu0 0
        %3340 = vmatprep.subr.bf16.mxu0 0
        %3341 = vmatpush2.bf16.msra.mxu0 0
        %3342 = vmatprep.subr.bf16.mxu0 0
        %3343 = vmatpush2.bf16.msra.mxu0 0
        %3344 = vmatprep.subr.bf16.mxu0 0
        %3345 = vmatpush2.bf16.msra.mxu0 0
        %3346 = vmatprep.subr.bf16.mxu0 0
        %3347 = vmatpush2.bf16.msra.mxu0 0
        %3348 = vmatprep.subr.bf16.mxu0 0
        %3349 = vmatpush2.bf16.msra.mxu0 0
        %3350 = vmatprep.subr.bf16.mxu0 0
        %3351 = vmatpush2.bf16.msra.mxu0 0
        %3352 = vmatprep.subr.bf16.mxu0 %v3300
        %3353 = vmatpush2.bf16.msra.mxu0 %v3299
        %3354 = vmatprep.mubr.bf16.mxu0 %v3320
        %3355 = vmatmul.mubr.bf16.gmra.mxu0 %v3226
        %v3356 = vpop.f32.mrf.mxu0
        %v3357 = vadd.f32 0.0, %v3356
        %v3358 = vpop.f32.mrf.mxu0
        %v3359 = vadd.f32 0.0, %v3358
        %v3360 = vpop.f32.mrf.mxu0
        %v3361 = vpop.f32.mrf.mxu0
        %3362 = vdwg.mxu0
        %v3363 = vadd.f32 %v2666, %v3357
        %v3364 = vadd.f32 %v2668, %v3359
        %v3365 = vtanh.pop %v3363
        %v3366 = vtanh.pop %v3364
        %v3367 = vsub.f32 1.0, %v2681
        %v3368 = vsub.f32 1.0, %v2683
        %v3369 = vmul.f32 %v1963, %v3367
        %v3370 = vmul.f32 %v1964, %v3368
        %v3371 = vmul.f32 %v3365, %v2681
        %v3372 = vmul.f32 %v3366, %v2683
        %v3373 = vadd.f32 %v3369, %v3371
        %v3374 = vadd.f32 %v3370, %v3372
        %3375 = vst [vmem:[%s507] sm:$0xff] %v3373
        %3376 = vst [vmem:[%s507 + $0x8] sm:$0xff] %v3374
        %s3377 = sand.u32 %s269, 1
        %s3378 = scalar_lea.sflag [#allocation8], %s3377
        %s3379 = sand.u32 %s269, 1
        %s3380 = smul.addr %s3379, 16
        %s3381 = scalar_lea.vmem [#allocation15], %s3380
        %s3382 = sand.u32 %s295, 1
        %s3383 = scalar_lea.sflag [#allocation17], %s3382
        %s3384 = sand.u32 %s295, 1
        %s3385 = smul.addr %s3384, 16
        %s3386 = scalar_lea.vmem [#allocation16], %s3385
        // Predicated region
        $region81: #{tpu_custom_call.1} parent=59 // pred_check
          %p3387 = pneg %p279
        $region82: #{tpu_custom_call.1} parent=59 // pred_check_branch
          %3389 = sbr.rel (%p3387) target = $region84
        $region83: #{tpu_custom_call.1} parent=59 // pred_region
          %s3391 = ssub.s32 256, 256
          %3392 = vsyncadd %s3378, %s3391
          %s3393 = smul.addr %s36, 2
          %s3394 = smul.addr %s3393, 128
          %s3395 = scalar_lea.hbm %s10, %s3394
          %s3397 = sshll.u32 %s3381, 4
          %s3398 = int_to_ptr.vmem [resolvable:$true] %s3397
          %3400 = dma.vmem_to_hbm [thread:$0]  %s3398, 256, %s3395, %s3378
        $region84: #{tpu_custom_call.1} parent=59 // pred_fallthru
          _
        // Predicated region
        $region85: #{tpu_custom_call.1} parent=59 // pred_check
          %p3401 = pneg %p305
        $region86: #{tpu_custom_call.1} parent=59 // pred_check_branch
          %3403 = sbr.rel (%p3401) target = $region88
        $region87: #{tpu_custom_call.1} parent=59 // pred_region
          %s3405 = ssub.s32 256, 256
          %3406 = vsyncadd %s3383, %s3405
          %s3407 = smul.addr %s36, 2
          %s3408 = smul.addr %s3407, 128
          %s3409 = scalar_lea.hbm %s11, %s3408
          %s3411 = sshll.u32 %s3386, 4
          %s3412 = int_to_ptr.vmem [resolvable:$true] %s3411
          %3414 = dma.vmem_to_hbm [thread:$0]  %s3412, 256, %s3409, %s3383
        $region88: #{tpu_custom_call.1} parent=59 // pred_fallthru
          _
      $region60: #{tpu_custom_call.1} parent=5 // pred_fallthru
        _
      %p3415 = scmp.le.s32.totalorder 2, %s31
      // Predicated region
      $region89: #{tpu_custom_call.1} parent=5 // pred_check
        %p3416 = pneg %p3415
      $region90: #{tpu_custom_call.1} parent=5 // pred_check_branch
        %3418 = sbr.rel (%p3416) target = $region92
      $region91: #{tpu_custom_call.1} parent=5 // pred_region
        %s3419 = ssub.s32 %s31, 2
        // Predicated region
        $region93: #{tpu_custom_call.1} parent=91 // pred_check
          %p3420 = pneg %p285
        $region94: #{tpu_custom_call.1} parent=91 // pred_check_branch
          %3422 = sbr.rel (%p3420) target = $region96
        $region95: #{tpu_custom_call.1} parent=91 // pred_region
          %s3423 = sand.u32 %s270, 1
          %s3424 = scalar_lea.sflag [#allocation8], %s3423
          %s3425 = sand.u32 %s270, 1
          %s3426 = smul.addr %s3425, 16
          %s3427 = scalar_lea.vmem [#allocation15], %s3426
          %3428 = dma.done %s3424, 256
        $region96: #{tpu_custom_call.1} parent=91 // pred_fallthru
          _
        // Predicated region
        $region97: #{tpu_custom_call.1} parent=91 // pred_check
          %p3429 = pneg %p311
        $region98: #{tpu_custom_call.1} parent=91 // pred_check_branch
          %3431 = sbr.rel (%p3429) target = $region100
        $region99: #{tpu_custom_call.1} parent=91 // pred_region
          %s3432 = sand.u32 %s296, 1
          %s3433 = scalar_lea.sflag [#allocation17], %s3432
          %s3434 = sand.u32 %s296, 1
          %s3435 = smul.addr %s3434, 16
          %s3436 = scalar_lea.vmem [#allocation16], %s3435
          %3437 = dma.done %s3433, 256
        $region100: #{tpu_custom_call.1} parent=91 // pred_fallthru
          _
      $region92: #{tpu_custom_call.1} parent=5 // pred_fallthru
        _
    $region6: #{tpu_custom_call.1} parent=1 // loop_footer
      %s35 = sadd.s32 1, %s31
    $region7: #{tpu_custom_call.1} parent=1 // loop_footer_branch
      %30 = sbr.rel target = $region3
    $region8: #{tpu_custom_call.1} parent=1 // loop_exit
      _
    %3438 = vsyncpa [#allocation7], 1
    %s3439 = scalar_lea.sflag [#allocation7], 1
    %3440 = vsyncpa %s3439, 1
    %3441 = vsyncpa [#allocation10], 1
    %s3442 = scalar_lea.sflag [#allocation10], 1
    %3443 = vsyncpa %s3442, 1
    %3444 = vsyncpa [#allocation13], 1
    %3445 = vsyncpa [#allocation8], 1
    %s3446 = scalar_lea.sflag [#allocation8], 1
    %3447 = vsyncpa %s3446, 1
    %3448 = vsyncpa [#allocation17], 1
    %s3449 = scalar_lea.sflag [#allocation17], 1
    %3450 = vsyncpa %s3449, 1

</llo_original>
